<compile_context>
chip_gen: v7x
topology: tpu7x:2x2x1
jax: 0.10.0
libtpu: 0.0.40
codegen_flags: <defaults>
</compile_context>

<pallas_src>
import jax
import jax.numpy as jnp
from jax.experimental import pallas as pl
from jax.experimental.pallas import tpu as pltpu


# ---------------------------------------------------------------------------
# Fused Pallas kernel
# ---------------------------------------------------------------------------

def _tcn_fused_kernel(feats_ref, tlw_ref, tlb_ref,
                      c1w_ref, c1b_ref,
                      c2w_ref, c2b_ref,
                      c3w_ref, c3b_ref,
                      fcw_ref, sel_ref, beff_ref,
                      o_ref):
    """Fused TCNNet forward.

    feats_ref : (B*T, 4608) bf16, batch-major rows (row = b*T + t, as produced
                by the module's input pipeline -- no reordering anywhere)
    tlw_ref   : (4608, 256) bf16         tlb_ref  : (1, 256) f32
    c{i}w_ref : (K, C_in, C_out) bf16 with BN scale folded in
    c{i}b_ref : (1, C_out) f32 folded conv-bias + BN bias
    fcw_ref   : (B*T-10, 256) f32  folded fc1∘linear weights placed on the
                valid rows of the long-sequence conv output, zeros elsewhere
    sel_ref   : (B, B*T-10) f32   0/1 per-batch row selector
    beff_ref  : (1, 1) f32        folded bias (fc1_b @ lin_w.T + lin_b)
    o_ref     : (B, 1) f32
    """
    # ---- t_linear (input already bf16; no in-kernel cast materialization) ---
    h = jnp.dot(feats_ref[...], tlw_ref[...], preferred_element_type=jnp.float32)
    h = (h + tlb_ref[...]).astype(jnp.bfloat16)                    # (B*T, 256)

    # ---- temporal convs + folded BN + ReLU over the "long sequence" --------
    # Output row r uses input rows r..r+K-1, so tap k is the contiguous static
    # slice [k : k + m].  Rows straddling a batch boundary are garbage but are
    # never consumed by any valid downstream row.
    def conv_bias_relu(x, w_ref, b_ref):
        K = w_ref.shape[0]
        m = x.shape[0] - (K - 1)
        acc = jnp.dot(x[0:m, :], w_ref[0], preferred_element_type=jnp.float32)
        for k in range(1, K):                                      # K static (7/3/3)
            acc = acc + jnp.dot(x[k:k + m, :], w_ref[k],
                                preferred_element_type=jnp.float32)
        return jnp.maximum(acc + b_ref[...], 0.0).astype(jnp.bfloat16)

    h = conv_bias_relu(h, c1w_ref, c1b_ref)                        # (B*T-6,   64)
    h = conv_bias_relu(h, c2w_ref, c2b_ref)                        # (B*T-8,  128)
    h = conv_bias_relu(h, c3w_ref, c3b_ref)                        # (B*T-10, 256)

    # ---- fc1 ∘ final linear, folded to per-row weights ----------------------
    # y[b] = b_eff + sum over batch-b's valid rows of <h[row], w_eff[t]>.
    g = h.astype(jnp.float32) * fcw_ref[...]                       # (L3, 256)
    y = jnp.dot(sel_ref[...], g, preferred_element_type=jnp.float32)   # (B, 256)
    y = jnp.sum(y, axis=-1, keepdims=True) + beff_ref[...]         # (B, 1)
    o_ref[...] = y.astype(o_ref.dtype)


# ---------------------------------------------------------------------------
# Wrapper
# ---------------------------------------------------------------------------

def tcn_forward(feats, params):
    # No layout pre-pass: feats is consumed exactly as the module receives it.
    feats = feats.astype(jnp.bfloat16)     # no-op when the producer already gives bf16
    B = params["fc_sel"].shape[0]
    vmem = pl.BlockSpec(memory_space=pltpu.MemorySpace.VMEM)
    return pl.pallas_call(
        _tcn_fused_kernel,
        out_shape=jax.ShapeDtypeStruct((B, 1), jnp.float32),
        in_specs=[vmem] * 12,
        out_specs=vmem,
        compiler_params=pltpu.CompilerParams(vmem_limit_bytes=12 * 1024 * 1024),
    )(feats,
      params["t_linear_w"], params["t_linear_b"],
      params["conv1_w"], params["conv1_b"],
      params["conv2_w"], params["conv2_b"],
      params["conv3_w"], params["conv3_b"],
      params["fc_w_full"], params["fc_sel"], params["fc_b_eff"])


# ---------------------------------------------------------------------------
# Parameter construction (deterministic, synthetic) with all folds applied
# ---------------------------------------------------------------------------

def init_params(key, n_frames=15, nbatch=2):
    B, T = nbatch, n_frames
    T3 = T - 10
    assert 256 * T3 == 1280, "fc1 expects 256*(n_frames-10) == 1280, i.e. n_frames == 15"
    ks = jax.random.split(key, 12)

    def rnd(k, shape, fan_in):
        return jax.random.normal(k, shape, jnp.float32) * (1.0 / jnp.sqrt(fan_in))

    p = {}
    p["t_linear_w"] = rnd(ks[0], (4608, 256), 4608.0).astype(jnp.bfloat16)
    p["t_linear_b"] = rnd(ks[1], (256,), 4608.0).reshape(1, 256)

    # Conv weights as (K, C_in, C_out) (= torch weight[co, ci, 0, k] transposed),
    # with the inference-mode BN scale folded into the weights and BN shift +
    # conv bias folded into a single per-channel bias.
    def conv_params(kw, kb, kbn, K, cin, cout, eps=1e-5):
        w = rnd(kw, (K, cin, cout), float(cin * K))
        cb = rnd(kb, (cout,), float(cin * K))
        k1, k2, k3, k4 = jax.random.split(kbn, 4)
        gamma = 1.0 + 0.1 * jax.random.normal(k1, (cout,), jnp.float32)
        beta = 0.1 * jax.random.normal(k2, (cout,), jnp.float32)
        mean = 0.1 * jax.random.normal(k3, (cout,), jnp.float32)
        var = 1.0 + 0.1 * jnp.abs(jax.random.normal(k4, (cout,), jnp.float32))
        scale = gamma / jnp.sqrt(var + eps)
        w_folded = (w * scale[None, None, :]).astype(jnp.bfloat16)
        b_folded = (beta - mean * scale + cb * scale).reshape(1, cout)
        return w_folded, b_folded

    p["conv1_w"], p["conv1_b"] = conv_params(ks[2], ks[3], ks[4], 7, 256, 64)
    p["conv2_w"], p["conv2_b"] = conv_params(ks[5], ks[6], ks[7], 3, 64, 128)
    p["conv3_w"], p["conv3_b"] = conv_params(ks[8], ks[9], ks[10], 3, 128, 256)

    # ---- fold fc1 (1280->1280) and the final linear (1280->1) ---------------
    # Legal because the reference forward has no nonlinearity between them:
    #   y = (h @ W_fc1.T + b_fc1) @ W_lin.T + b_lin = h @ (W_fc1.T @ W_lin.T) + b_eff
    kfc = jax.random.split(ks[11], 4)
    fc1_wT = rnd(kfc[0], (256 * T3, 1280), 1280.0)      # W_fc1.T, rows j = c*T3 + t
    fc1_b = rnd(kfc[1], (1280,), 1280.0)
    lin_wT = rnd(kfc[2], (1280,), 1280.0).reshape(1280, 1)   # W_lin.T
    lin_b = rnd(kfc[3], (1,), 1280.0)

    w_eff = (fc1_wT @ lin_wT).reshape(256, T3).T        # (T3, 256): w_eff[t, c]
    b_eff = (fc1_b @ lin_wT + lin_b).reshape(1, 1)

    # Place w_eff at the valid rows (r = b*T + t, t < T3) of the long-sequence
    # conv3 output; straddle rows get zero weight.  Build the per-batch 0/1
    # row-selection matrix for the final reduction.
    L3 = B * T - 10
    w_full = jnp.zeros((L3, 256), jnp.float32)
    sel = jnp.zeros((B, L3), jnp.float32)
    for b in range(B):
        w_full = w_full.at[b * T:b * T + T3, :].set(w_eff)
        sel = sel.at[b, b * T:b * T + T3].set(1.0)
    p["fc_w_full"] = w_full
    p["fc_sel"] = sel
    p["fc_b_eff"] = b_eff
    return p


# ---------------------------------------------------------------------------
# Main
# ---------------------------------------------------------------------------

if __name__ == "__main__":
    nbatch = 2
    n_frames = 15   # flatten-to-1280 before fc1 forces 256*(n_frames-10) == 1280

    key = jax.random.PRNGKey(0)
    k_param, k_in = jax.random.split(key)
    params = init_params(k_param, n_frames=n_frames, nbatch=nbatch)

    # Producer supplies bf16 features directly (cast fused into the producer),
    # halving the kernel's input DMA.
    feats = jax.random.normal(
        k_in, (nbatch * n_frames, 4608), jnp.float32).astype(jnp.bfloat16)

    fwd = jax.jit(tcn_forward)
    y = jax.block_until_ready(fwd(feats, params))
    assert y.shape == (nbatch, 1)
    assert bool(jnp.all(jnp.isfinite(y)))
    print("KERNEL_OK")
</pallas_src>

<mosaic_0001>
module attributes {stable_mosaic.version = 11 : i64} {
  func.func @_tcn_fused_kernel(%arg0: memref<30x4608xbf16, #tpu.memory_space<vmem>>, %arg1: memref<4608x256xbf16, #tpu.memory_space<vmem>>, %arg2: memref<1x256xf32, #tpu.memory_space<vmem>>, %arg3: memref<7x256x64xbf16, #tpu.memory_space<vmem>>, %arg4: memref<1x64xf32, #tpu.memory_space<vmem>>, %arg5: memref<3x64x128xbf16, #tpu.memory_space<vmem>>, %arg6: memref<1x128xf32, #tpu.memory_space<vmem>>, %arg7: memref<3x128x256xbf16, #tpu.memory_space<vmem>>, %arg8: memref<1x256xf32, #tpu.memory_space<vmem>>, %arg9: memref<20x256xf32, #tpu.memory_space<vmem>>, %arg10: memref<2x20xf32, #tpu.memory_space<vmem>>, %arg11: memref<1x1xf32, #tpu.memory_space<vmem>>, %arg12: memref<2x1xf32, #tpu.memory_space<vmem>>) attributes {dimension_semantics = [], scalar_prefetch = 0 : i64, scratch_operands = 0 : i64, tpu.core_type = #tpu.core_type<tc>} {
    %c0 = arith.constant 0 : index
    %c0_0 = arith.constant 0 : index
    %0 = vector.load %arg0[%c0, %c0_0] : memref<30x4608xbf16, #tpu.memory_space<vmem>>, vector<30x4608xbf16>
    %c0_1 = arith.constant 0 : index
    %c0_2 = arith.constant 0 : index
    %1 = vector.load %arg1[%c0_1, %c0_2] : memref<4608x256xbf16, #tpu.memory_space<vmem>>, vector<4608x256xbf16>
    %cst = arith.constant dense<0.000000e+00> : vector<30x256xf32>
    %2 = tpu.matmul %0, %1, %cst {dimension_numbers = #tpu.dot_dimension_numbers<[1], [0], [0], [1], [0, 0, 1, 1], [], []>} : vector<30x4608xbf16>, vector<4608x256xbf16>, vector<30x256xf32> -> vector<30x256xf32>
    %c0_3 = arith.constant 0 : index
    %c0_4 = arith.constant 0 : index
    %3 = vector.load %arg2[%c0_3, %c0_4] : memref<1x256xf32, #tpu.memory_space<vmem>>, vector<1x256xf32>
    %4 = vector.broadcast %3 : vector<1x256xf32> to vector<30x256xf32>
    %5 = arith.addf %2, %4 : vector<30x256xf32>
    %6 = arith.truncf %5 : vector<30x256xf32> to vector<30x256xbf16>
    %7 = vector.extract_strided_slice %6 {offsets = [0, 0], sizes = [24, 256], strides = [1, 1]} : vector<30x256xbf16> to vector<24x256xbf16>
    %c0_5 = arith.constant 0 : index
    %c0_6 = arith.constant 0 : index
    %c0_7 = arith.constant 0 : index
    %8 = vector.load %arg3[%c0_5, %c0_6, %c0_7] : memref<7x256x64xbf16, #tpu.memory_space<vmem>>, vector<1x256x64xbf16>
    %9 = vector.shape_cast %8 : vector<1x256x64xbf16> to vector<256x64xbf16>
    %cst_8 = arith.constant dense<0.000000e+00> : vector<24x64xf32>
    %10 = tpu.matmul %7, %9, %cst_8 {dimension_numbers = #tpu.dot_dimension_numbers<[1], [0], [0], [1], [0, 0, 1, 1], [], []>} : vector<24x256xbf16>, vector<256x64xbf16>, vector<24x64xf32> -> vector<24x64xf32>
    %11 = vector.extract_strided_slice %6 {offsets = [1, 0], sizes = [24, 256], strides = [1, 1]} : vector<30x256xbf16> to vector<24x256xbf16>
    %c1 = arith.constant 1 : index
    %c0_9 = arith.constant 0 : index
    %c0_10 = arith.constant 0 : index
    %12 = vector.load %arg3[%c1, %c0_9, %c0_10] : memref<7x256x64xbf16, #tpu.memory_space<vmem>>, vector<1x256x64xbf16>
    %13 = vector.shape_cast %12 : vector<1x256x64xbf16> to vector<256x64xbf16>
    %cst_11 = arith.constant dense<0.000000e+00> : vector<24x64xf32>
    %14 = tpu.matmul %11, %13, %cst_11 {dimension_numbers = #tpu.dot_dimension_numbers<[1], [0], [0], [1], [0, 0, 1, 1], [], []>} : vector<24x256xbf16>, vector<256x64xbf16>, vector<24x64xf32> -> vector<24x64xf32>
    %15 = arith.addf %10, %14 : vector<24x64xf32>
    %16 = vector.extract_strided_slice %6 {offsets = [2, 0], sizes = [24, 256], strides = [1, 1]} : vector<30x256xbf16> to vector<24x256xbf16>
    %c2 = arith.constant 2 : index
    %c0_12 = arith.constant 0 : index
    %c0_13 = arith.constant 0 : index
    %17 = vector.load %arg3[%c2, %c0_12, %c0_13] : memref<7x256x64xbf16, #tpu.memory_space<vmem>>, vector<1x256x64xbf16>
    %18 = vector.shape_cast %17 : vector<1x256x64xbf16> to vector<256x64xbf16>
    %cst_14 = arith.constant dense<0.000000e+00> : vector<24x64xf32>
    %19 = tpu.matmul %16, %18, %cst_14 {dimension_numbers = #tpu.dot_dimension_numbers<[1], [0], [0], [1], [0, 0, 1, 1], [], []>} : vector<24x256xbf16>, vector<256x64xbf16>, vector<24x64xf32> -> vector<24x64xf32>
    %20 = arith.addf %15, %19 : vector<24x64xf32>
    %21 = vector.extract_strided_slice %6 {offsets = [3, 0], sizes = [24, 256], strides = [1, 1]} : vector<30x256xbf16> to vector<24x256xbf16>
    %c3 = arith.constant 3 : index
    %c0_15 = arith.constant 0 : index
    %c0_16 = arith.constant 0 : index
    %22 = vector.load %arg3[%c3, %c0_15, %c0_16] : memref<7x256x64xbf16, #tpu.memory_space<vmem>>, vector<1x256x64xbf16>
    %23 = vector.shape_cast %22 : vector<1x256x64xbf16> to vector<256x64xbf16>
    %cst_17 = arith.constant dense<0.000000e+00> : vector<24x64xf32>
    %24 = tpu.matmul %21, %23, %cst_17 {dimension_numbers = #tpu.dot_dimension_numbers<[1], [0], [0], [1], [0, 0, 1, 1], [], []>} : vector<24x256xbf16>, vector<256x64xbf16>, vector<24x64xf32> -> vector<24x64xf32>
    %25 = arith.addf %20, %24 : vector<24x64xf32>
    %26 = vector.extract_strided_slice %6 {offsets = [4, 0], sizes = [24, 256], strides = [1, 1]} : vector<30x256xbf16> to vector<24x256xbf16>
    %c4 = arith.constant 4 : index
    %c0_18 = arith.constant 0 : index
    %c0_19 = arith.constant 0 : index
    %27 = vector.load %arg3[%c4, %c0_18, %c0_19] : memref<7x256x64xbf16, #tpu.memory_space<vmem>>, vector<1x256x64xbf16>
    %28 = vector.shape_cast %27 : vector<1x256x64xbf16> to vector<256x64xbf16>
    %cst_20 = arith.constant dense<0.000000e+00> : vector<24x64xf32>
    %29 = tpu.matmul %26, %28, %cst_20 {dimension_numbers = #tpu.dot_dimension_numbers<[1], [0], [0], [1], [0, 0, 1, 1], [], []>} : vector<24x256xbf16>, vector<256x64xbf16>, vector<24x64xf32> -> vector<24x64xf32>
    %30 = arith.addf %25, %29 : vector<24x64xf32>
    %31 = vector.extract_strided_slice %6 {offsets = [5, 0], sizes = [24, 256], strides = [1, 1]} : vector<30x256xbf16> to vector<24x256xbf16>
    %c5 = arith.constant 5 : index
    %c0_21 = arith.constant 0 : index
    %c0_22 = arith.constant 0 : index
    %32 = vector.load %arg3[%c5, %c0_21, %c0_22] : memref<7x256x64xbf16, #tpu.memory_space<vmem>>, vector<1x256x64xbf16>
    %33 = vector.shape_cast %32 : vector<1x256x64xbf16> to vector<256x64xbf16>
    %cst_23 = arith.constant dense<0.000000e+00> : vector<24x64xf32>
    %34 = tpu.matmul %31, %33, %cst_23 {dimension_numbers = #tpu.dot_dimension_numbers<[1], [0], [0], [1], [0, 0, 1, 1], [], []>} : vector<24x256xbf16>, vector<256x64xbf16>, vector<24x64xf32> -> vector<24x64xf32>
    %35 = arith.addf %30, %34 : vector<24x64xf32>
    %36 = vector.extract_strided_slice %6 {offsets = [6, 0], sizes = [24, 256], strides = [1, 1]} : vector<30x256xbf16> to vector<24x256xbf16>
    %c6 = arith.constant 6 : index
    %c0_24 = arith.constant 0 : index
    %c0_25 = arith.constant 0 : index
    %37 = vector.load %arg3[%c6, %c0_24, %c0_25] : memref<7x256x64xbf16, #tpu.memory_space<vmem>>, vector<1x256x64xbf16>
    %38 = vector.shape_cast %37 : vector<1x256x64xbf16> to vector<256x64xbf16>
    %cst_26 = arith.constant dense<0.000000e+00> : vector<24x64xf32>
    %39 = tpu.matmul %36, %38, %cst_26 {dimension_numbers = #tpu.dot_dimension_numbers<[1], [0], [0], [1], [0, 0, 1, 1], [], []>} : vector<24x256xbf16>, vector<256x64xbf16>, vector<24x64xf32> -> vector<24x64xf32>
    %40 = arith.addf %35, %39 : vector<24x64xf32>
    %c0_27 = arith.constant 0 : index
    %c0_28 = arith.constant 0 : index
    %41 = vector.load %arg4[%c0_27, %c0_28] : memref<1x64xf32, #tpu.memory_space<vmem>>, vector<1x64xf32>
    %42 = vector.broadcast %41 : vector<1x64xf32> to vector<24x64xf32>
    %43 = arith.addf %40, %42 : vector<24x64xf32>
    %cst_29 = arith.constant 0.000000e+00 : f32
    %44 = vector.broadcast %cst_29 : f32 to vector<24x64xf32>
    %45 = arith.maximumf %43, %44 : vector<24x64xf32>
    %46 = arith.truncf %45 : vector<24x64xf32> to vector<24x64xbf16>
    %47 = vector.extract_strided_slice %46 {offsets = [0, 0], sizes = [22, 64], strides = [1, 1]} : vector<24x64xbf16> to vector<22x64xbf16>
    %c0_30 = arith.constant 0 : index
    %c0_31 = arith.constant 0 : index
    %c0_32 = arith.constant 0 : index
    %48 = vector.load %arg5[%c0_30, %c0_31, %c0_32] : memref<3x64x128xbf16, #tpu.memory_space<vmem>>, vector<1x64x128xbf16>
    %49 = vector.shape_cast %48 : vector<1x64x128xbf16> to vector<64x128xbf16>
    %cst_33 = arith.constant dense<0.000000e+00> : vector<22x128xf32>
    %50 = tpu.matmul %47, %49, %cst_33 {dimension_numbers = #tpu.dot_dimension_numbers<[1], [0], [0], [1], [0, 0, 1, 1], [], []>} : vector<22x64xbf16>, vector<64x128xbf16>, vector<22x128xf32> -> vector<22x128xf32>
    %51 = vector.extract_strided_slice %46 {offsets = [1, 0], sizes = [22, 64], strides = [1, 1]} : vector<24x64xbf16> to vector<22x64xbf16>
    %c1_34 = arith.constant 1 : index
    %c0_35 = arith.constant 0 : index
    %c0_36 = arith.constant 0 : index
    %52 = vector.load %arg5[%c1_34, %c0_35, %c0_36] : memref<3x64x128xbf16, #tpu.memory_space<vmem>>, vector<1x64x128xbf16>
    %53 = vector.shape_cast %52 : vector<1x64x128xbf16> to vector<64x128xbf16>
    %cst_37 = arith.constant dense<0.000000e+00> : vector<22x128xf32>
    %54 = tpu.matmul %51, %53, %cst_37 {dimension_numbers = #tpu.dot_dimension_numbers<[1], [0], [0], [1], [0, 0, 1, 1], [], []>} : vector<22x64xbf16>, vector<64x128xbf16>, vector<22x128xf32> -> vector<22x128xf32>
    %55 = arith.addf %50, %54 : vector<22x128xf32>
    %56 = vector.extract_strided_slice %46 {offsets = [2, 0], sizes = [22, 64], strides = [1, 1]} : vector<24x64xbf16> to vector<22x64xbf16>
    %c2_38 = arith.constant 2 : index
    %c0_39 = arith.constant 0 : index
    %c0_40 = arith.constant 0 : index
    %57 = vector.load %arg5[%c2_38, %c0_39, %c0_40] : memref<3x64x128xbf16, #tpu.memory_space<vmem>>, vector<1x64x128xbf16>
    %58 = vector.shape_cast %57 : vector<1x64x128xbf16> to vector<64x128xbf16>
    %cst_41 = arith.constant dense<0.000000e+00> : vector<22x128xf32>
    %59 = tpu.matmul %56, %58, %cst_41 {dimension_numbers = #tpu.dot_dimension_numbers<[1], [0], [0], [1], [0, 0, 1, 1], [], []>} : vector<22x64xbf16>, vector<64x128xbf16>, vector<22x128xf32> -> vector<22x128xf32>
    %60 = arith.addf %55, %59 : vector<22x128xf32>
    %c0_42 = arith.constant 0 : index
    %c0_43 = arith.constant 0 : index
    %61 = vector.load %arg6[%c0_42, %c0_43] : memref<1x128xf32, #tpu.memory_space<vmem>>, vector<1x128xf32>
    %62 = vector.broadcast %61 : vector<1x128xf32> to vector<22x128xf32>
    %63 = arith.addf %60, %62 : vector<22x128xf32>
    %cst_44 = arith.constant 0.000000e+00 : f32
    %64 = vector.broadcast %cst_44 : f32 to vector<22x128xf32>
    %65 = arith.maximumf %63, %64 : vector<22x128xf32>
    %66 = arith.truncf %65 : vector<22x128xf32> to vector<22x128xbf16>
    %67 = vector.extract_strided_slice %66 {offsets = [0, 0], sizes = [20, 128], strides = [1, 1]} : vector<22x128xbf16> to vector<20x128xbf16>
    %c0_45 = arith.constant 0 : index
    %c0_46 = arith.constant 0 : index
    %c0_47 = arith.constant 0 : index
    %68 = vector.load %arg7[%c0_45, %c0_46, %c0_47] : memref<3x128x256xbf16, #tpu.memory_space<vmem>>, vector<1x128x256xbf16>
    %69 = vector.shape_cast %68 : vector<1x128x256xbf16> to vector<128x256xbf16>
    %cst_48 = arith.constant dense<0.000000e+00> : vector<20x256xf32>
    %70 = tpu.matmul %67, %69, %cst_48 {dimension_numbers = #tpu.dot_dimension_numbers<[1], [0], [0], [1], [0, 0, 1, 1], [], []>} : vector<20x128xbf16>, vector<128x256xbf16>, vector<20x256xf32> -> vector<20x256xf32>
    %71 = vector.extract_strided_slice %66 {offsets = [1, 0], sizes = [20, 128], strides = [1, 1]} : vector<22x128xbf16> to vector<20x128xbf16>
    %c1_49 = arith.constant 1 : index
    %c0_50 = arith.constant 0 : index
    %c0_51 = arith.constant 0 : index
    %72 = vector.load %arg7[%c1_49, %c0_50, %c0_51] : memref<3x128x256xbf16, #tpu.memory_space<vmem>>, vector<1x128x256xbf16>
    %73 = vector.shape_cast %72 : vector<1x128x256xbf16> to vector<128x256xbf16>
    %cst_52 = arith.constant dense<0.000000e+00> : vector<20x256xf32>
    %74 = tpu.matmul %71, %73, %cst_52 {dimension_numbers = #tpu.dot_dimension_numbers<[1], [0], [0], [1], [0, 0, 1, 1], [], []>} : vector<20x128xbf16>, vector<128x256xbf16>, vector<20x256xf32> -> vector<20x256xf32>
    %75 = arith.addf %70, %74 : vector<20x256xf32>
    %76 = vector.extract_strided_slice %66 {offsets = [2, 0], sizes = [20, 128], strides = [1, 1]} : vector<22x128xbf16> to vector<20x128xbf16>
    %c2_53 = arith.constant 2 : index
    %c0_54 = arith.constant 0 : index
    %c0_55 = arith.constant 0 : index
    %77 = vector.load %arg7[%c2_53, %c0_54, %c0_55] : memref<3x128x256xbf16, #tpu.memory_space<vmem>>, vector<1x128x256xbf16>
    %78 = vector.shape_cast %77 : vector<1x128x256xbf16> to vector<128x256xbf16>
    %cst_56 = arith.constant dense<0.000000e+00> : vector<20x256xf32>
    %79 = tpu.matmul %76, %78, %cst_56 {dimension_numbers = #tpu.dot_dimension_numbers<[1], [0], [0], [1], [0, 0, 1, 1], [], []>} : vector<20x128xbf16>, vector<128x256xbf16>, vector<20x256xf32> -> vector<20x256xf32>
    %80 = arith.addf %75, %79 : vector<20x256xf32>
    %c0_57 = arith.constant 0 : index
    %c0_58 = arith.constant 0 : index
    %81 = vector.load %arg8[%c0_57, %c0_58] : memref<1x256xf32, #tpu.memory_space<vmem>>, vector<1x256xf32>
    %82 = vector.broadcast %81 : vector<1x256xf32> to vector<20x256xf32>
    %83 = arith.addf %80, %82 : vector<20x256xf32>
    %cst_59 = arith.constant 0.000000e+00 : f32
    %84 = vector.broadcast %cst_59 : f32 to vector<20x256xf32>
    %85 = arith.maximumf %83, %84 : vector<20x256xf32>
    %86 = arith.truncf %85 : vector<20x256xf32> to vector<20x256xbf16>
    %87 = arith.extf %86 : vector<20x256xbf16> to vector<20x256xf32>
    %c0_60 = arith.constant 0 : index
    %c0_61 = arith.constant 0 : index
    %88 = vector.load %arg9[%c0_60, %c0_61] : memref<20x256xf32, #tpu.memory_space<vmem>>, vector<20x256xf32>
    %89 = arith.mulf %87, %88 : vector<20x256xf32>
    %c0_62 = arith.constant 0 : index
    %c0_63 = arith.constant 0 : index
    %90 = vector.load %arg10[%c0_62, %c0_63] : memref<2x20xf32, #tpu.memory_space<vmem>>, vector<2x20xf32>
    %cst_64 = arith.constant dense<0.000000e+00> : vector<2x256xf32>
    %91 = tpu.matmul %90, %89, %cst_64 {dimension_numbers = #tpu.dot_dimension_numbers<[1], [0], [0], [1], [0, 0, 1, 1], [], []>} : vector<2x20xf32>, vector<20x256xf32>, vector<2x256xf32> -> vector<2x256xf32>
    %cst_65 = arith.constant dense<0.000000e+00> : vector<2xf32>
    %92 = vector.multi_reduction <add>, %91, %cst_65 [1] : vector<2x256xf32> to vector<2xf32>
    %93 = vector.shape_cast %92 : vector<2xf32> to vector<2x1xf32>
    %c0_66 = arith.constant 0 : index
    %c0_67 = arith.constant 0 : index
    %94 = vector.load %arg11[%c0_66, %c0_67] : memref<1x1xf32, #tpu.memory_space<vmem>>, vector<1x1xf32>
    %95 = vector.broadcast %94 : vector<1x1xf32> to vector<2x1xf32>
    %96 = arith.addf %93, %95 : vector<2x1xf32>
    %c0_68 = arith.constant 0 : index
    %c0_69 = arith.constant 0 : index
    %97 = vector.load %arg12[%c0_68, %c0_69] : memref<2x1xf32, #tpu.memory_space<vmem>>, vector<2x1xf32>
    tpu.vector_store %arg12[%c0_68, %c0_69], %96 {strides = array<i32>} : memref<2x1xf32, #tpu.memory_space<vmem>>, vector<2x1xf32>,
    return
  }
}

</mosaic_0001>

<llo_original>
// kernel: tcn_forward.1
$region0: #{tcn_forward.1}
  #allocation0 [shape = 'u32[]', space=smem, size = 0x4, offset = 0x4, fixed_abs, tag = 'smem constant byte address 0x4 - core index']
  #allocation1 [shape = 'u32[144,128]{1,0:T(1,128)}', space=vmem, size = 0x12000, scoped, tag = 'internal scratch']
  #allocation2 [shape = 'f32[1,1]{1,0:T(1,128)S(1)}', space=vmem, size = 0x200, scoped, tag = 'scoped memory for tcn_forward.1']
  %s0 = inlined_call_operand.hbm [shape: bf16[30,4608], index: 0, kind: input, shape index: {}]
  %s1 = inlined_call_operand.hbm [shape: bf16[4608,256], index: 1, kind: input, shape index: {}]
  %s2 = inlined_call_operand.hbm [shape: f32[1,256], index: 2, kind: input, shape index: {}]
  %s3 = inlined_call_operand.vmem [shape: bf16[7,256,64], index: 3, kind: input, shape index: {}]
  %s4 = inlined_call_operand.hbm [shape: f32[1,64], index: 4, kind: input, shape index: {}]
  %s5 = inlined_call_operand.hbm [shape: bf16[3,64,128], index: 5, kind: input, shape index: {}]
  %s6 = inlined_call_operand.hbm [shape: f32[1,128], index: 6, kind: input, shape index: {}]
  %s7 = inlined_call_operand.hbm [shape: bf16[3,128,256], index: 7, kind: input, shape index: {}]
  %s8 = inlined_call_operand.hbm [shape: f32[1,256], index: 8, kind: input, shape index: {}]
  %s9 = inlined_call_operand.hbm [shape: f32[20,256], index: 9, kind: input, shape index: {}]
  %s10 = inlined_call_operand.hbm [shape: f32[2,20], index: 10, kind: input, shape index: {}]
  %s11 = inlined_call_operand.<no memory space> [shape: f32[1,1], index: 11, kind: input, shape index: {}]
  %s12 = inlined_call_operand.vmem [shape: f32[2,1], index: 12, kind: output, shape index: {}]
  %s13 = sld [smem:[#allocation0]]
  $region98: #{tcn_forward.1} parent=0
    _
  %s15 = ssub.s32 1, %s13
  %s16 = scalar_select 0, %s15, %s13
  %v17 = vstv %s11
  %18 = vst [vmem:[#allocation2] sm:$0x1] %v17
  $region1: #{tcn_forward.1} parent=0
    #allocation3 [shape = 'u8[294912]{0}', space=vmem, size = 0x48000, scoped, tag = 'input window, operand 0, single buffered']
    #allocation4 [shape = 's32[1]{0}', space=sflag, size = 0x4, scoped, tag = 'scoped memory for tcn_forward.1']
    #allocation5 [shape = 'u8[2359296]{0}', space=vmem, size = 0x240000, scoped, tag = 'input window, operand 1, single buffered']
    #allocation6 [shape = 's32[1]{0}', space=sflag, size = 0x4, scoped, tag = 'scoped memory for tcn_forward.1']
    #allocation7 [shape = 'u8[1024]{0}', space=vmem, size = 0x400, scoped, tag = 'input window, operand 2, single buffered']
    #allocation8 [shape = 'u8[512]{0}', space=vmem, size = 0x400, scoped, tag = 'input window, operand 4, single buffered']
    #allocation9 [shape = 's32[1]{0}', space=sflag, size = 0x4, scoped, tag = 'scoped memory for tcn_forward.1']
    #allocation10 [shape = 'u8[49152]{0}', space=vmem, size = 0xc000, scoped, tag = 'input window, operand 5, single buffered']
    #allocation11 [shape = 'u8[512]{0}', space=vmem, size = 0x400, scoped, tag = 'input window, operand 6, single buffered']
    #allocation12 [shape = 's32[1]{0}', space=sflag, size = 0x4, scoped, tag = 'scoped memory for tcn_forward.1']
    #allocation13 [shape = 'u8[196608]{0}', space=vmem, size = 0x30000, scoped, tag = 'input window, operand 7, single buffered']
    #allocation14 [shape = 'u8[1024]{0}', space=vmem, size = 0x400, scoped, tag = 'input window, operand 8, single buffered']
    #allocation15 [shape = 's32[1]{0}', space=sflag, size = 0x4, scoped, tag = 'scoped memory for tcn_forward.1']
    #allocation16 [shape = 'u8[24576]{0}', space=vmem, size = 0x6000, scoped, tag = 'input window, operand 9, single buffered']
    #allocation17 [shape = 'u8[1024]{0}', space=vmem, size = 0x400, scoped, tag = 'input window, operand 10, single buffered']
    #allocation18 [shape = 's32[1]{0}', space=sflag, size = 0x4, scoped, tag = 'scoped memory for tcn_forward.1']
    %19 = vsyncpa [#allocation4], 0
    %20 = vsyncpa [#allocation6], 0
    %21 = vsyncpa [#allocation9], 0
    %22 = vsyncpa [#allocation12], 0
    %23 = vsyncpa [#allocation15], 0
    %24 = vsyncpa [#allocation18], 0
    // Predicated region
    $region2: #{tcn_forward.1} parent=1 // pred_check
      _
    $region3: #{tcn_forward.1} parent=1 // pred_check_branch
      %26 = sbr.rel (0) target = $region5
    $region4: #{tcn_forward.1} parent=1 // pred_region
      %s28 = ssub.s32 9216, 9216
      %29 = vsyncadd [#allocation4], %s28
      %s30 = sshll.u32 [#allocation3], 4
      %s31 = int_to_ptr.vmem [resolvable:$true] %s30
      %36 = dma.hbm_to_vmem [thread:$0]  %s0, 9216, %s31, [#allocation4], 2304, 2304, 144
    $region5: #{tcn_forward.1} parent=1 // pred_fallthru
      _
    // Predicated region
    $region6: #{tcn_forward.1} parent=1 // pred_check
      _
    $region7: #{tcn_forward.1} parent=1 // pred_check_branch
      %38 = sbr.rel (0) target = $region9
    $region8: #{tcn_forward.1} parent=1 // pred_region
      %s40 = ssub.s32 73728, 73728
      %41 = vsyncadd [#allocation6], %s40
      %s42 = sshll.u32 [#allocation5], 4
      %s43 = int_to_ptr.vmem [resolvable:$true] %s42
      %48 = dma.hbm_to_vmem [thread:$0]  %s1, 73728, %s43, [#allocation6], 128, 128, 8
    $region9: #{tcn_forward.1} parent=1 // pred_fallthru
      _
    // Predicated region
    $region10: #{tcn_forward.1} parent=1 // pred_check
      _
    $region11: #{tcn_forward.1} parent=1 // pred_check_branch
      %50 = sbr.rel (0) target = $region13
    $region12: #{tcn_forward.1} parent=1 // pred_region
      %s52 = ssub.s32 32, 32
      %53 = vsyncadd [#allocation6], %s52
      %s55 = sshll.u32 [#allocation7], 4
      %s56 = int_to_ptr.vmem [resolvable:$true] %s55
      %58 = dma.hbm_to_vmem [thread:$0]  %s2, 32, %s56, [#allocation6]
    $region13: #{tcn_forward.1} parent=1 // pred_fallthru
      _
    // Predicated region
    $region14: #{tcn_forward.1} parent=1 // pred_check
      _
    $region15: #{tcn_forward.1} parent=1 // pred_check_branch
      %60 = sbr.rel (0) target = $region17
    $region16: #{tcn_forward.1} parent=1 // pred_region
      _
    $region17: #{tcn_forward.1} parent=1 // pred_fallthru
      _
    // Predicated region
    $region18: #{tcn_forward.1} parent=1 // pred_check
      _
    $region19: #{tcn_forward.1} parent=1 // pred_check_branch
      %62 = sbr.rel (0) target = $region21
    $region20: #{tcn_forward.1} parent=1 // pred_region
      %s64 = ssub.s32 16, 16
      %65 = vsyncadd [#allocation9], %s64
      %s67 = sshll.u32 [#allocation8], 4
      %s68 = int_to_ptr.vmem [resolvable:$true] %s67
      %70 = dma.hbm_to_vmem [thread:$0]  %s4, 16, %s68, [#allocation9]
    $region21: #{tcn_forward.1} parent=1 // pred_fallthru
      _
    // Predicated region
    $region22: #{tcn_forward.1} parent=1 // pred_check
      _
    $region23: #{tcn_forward.1} parent=1 // pred_check_branch
      %72 = sbr.rel (0) target = $region25
    $region24: #{tcn_forward.1} parent=1 // pred_region
      %s74 = ssub.s32 1536, 1536
      %75 = vsyncadd [#allocation9], %s74
      %s76 = sshll.u32 [#allocation10], 4
      %s77 = int_to_ptr.vmem [resolvable:$true] %s76
      %82 = dma.hbm_to_vmem [thread:$0]  %s5, 1536, %s77, [#allocation9], 64, 64, 4
    $region25: #{tcn_forward.1} parent=1 // pred_fallthru
      _
    // Predicated region
    $region26: #{tcn_forward.1} parent=1 // pred_check
      _
    $region27: #{tcn_forward.1} parent=1 // pred_check_branch
      %84 = sbr.rel (0) target = $region29
    $region28: #{tcn_forward.1} parent=1 // pred_region
      %s86 = ssub.s32 16, 16
      %87 = vsyncadd [#allocation12], %s86
      %s89 = sshll.u32 [#allocation11], 4
      %s90 = int_to_ptr.vmem [resolvable:$true] %s89
      %92 = dma.hbm_to_vmem [thread:$0]  %s6, 16, %s90, [#allocation12]
    $region29: #{tcn_forward.1} parent=1 // pred_fallthru
      _
    // Predicated region
    $region30: #{tcn_forward.1} parent=1 // pred_check
      _
    $region31: #{tcn_forward.1} parent=1 // pred_check_branch
      %94 = sbr.rel (0) target = $region33
    $region32: #{tcn_forward.1} parent=1 // pred_region
      %s96 = ssub.s32 6144, 6144
      %97 = vsyncadd [#allocation12], %s96
      %s98 = sshll.u32 [#allocation13], 4
      %s99 = int_to_ptr.vmem [resolvable:$true] %s98
      %104 = dma.hbm_to_vmem [thread:$0]  %s7, 6144, %s99, [#allocation12], 128, 128, 8
    $region33: #{tcn_forward.1} parent=1 // pred_fallthru
      _
    // Predicated region
    $region34: #{tcn_forward.1} parent=1 // pred_check
      _
    $region35: #{tcn_forward.1} parent=1 // pred_check_branch
      %106 = sbr.rel (0) target = $region37
    $region36: #{tcn_forward.1} parent=1 // pred_region
      %s108 = ssub.s32 32, 32
      %109 = vsyncadd [#allocation15], %s108
      %s111 = sshll.u32 [#allocation14], 4
      %s112 = int_to_ptr.vmem [resolvable:$true] %s111
      %114 = dma.hbm_to_vmem [thread:$0]  %s8, 32, %s112, [#allocation15]
    $region37: #{tcn_forward.1} parent=1 // pred_fallthru
      _
    // Predicated region
    $region38: #{tcn_forward.1} parent=1 // pred_check
      _
    $region39: #{tcn_forward.1} parent=1 // pred_check_branch
      %116 = sbr.rel (0) target = $region41
    $region40: #{tcn_forward.1} parent=1 // pred_region
      %s118 = ssub.s32 768, 768
      %119 = vsyncadd [#allocation15], %s118
      %s120 = sshll.u32 [#allocation16], 4
      %s121 = int_to_ptr.vmem [resolvable:$true] %s120
      %126 = dma.hbm_to_vmem [thread:$0]  %s9, 768, %s121, [#allocation15], 256, 256, 16
    $region41: #{tcn_forward.1} parent=1 // pred_fallthru
      _
    // Predicated region
    $region42: #{tcn_forward.1} parent=1 // pred_check
      _
    $region43: #{tcn_forward.1} parent=1 // pred_check_branch
      %128 = sbr.rel (0) target = $region45
    $region44: #{tcn_forward.1} parent=1 // pred_region
      %s130 = ssub.s32 32, 32
      %131 = vsyncadd [#allocation18], %s130
      %s133 = sshll.u32 [#allocation17], 4
      %s134 = int_to_ptr.vmem [resolvable:$true] %s133
      %136 = dma.hbm_to_vmem [thread:$0]  %s10, 32, %s134, [#allocation18]
    $region45: #{tcn_forward.1} parent=1 // pred_fallthru
      _
    // Predicated region
    $region46: #{tcn_forward.1} parent=1 // pred_check
      _
    $region47: #{tcn_forward.1} parent=1 // pred_check_branch
      %138 = sbr.rel (0) target = $region49
    $region48: #{tcn_forward.1} parent=1 // pred_region
      _
    $region49: #{tcn_forward.1} parent=1 // pred_fallthru
      _
    // Predicated region
    $region50: #{tcn_forward.1} parent=1 // pred_check
      _
    $region51: #{tcn_forward.1} parent=1 // pred_check_branch
      %140 = sbr.rel (0) target = $region53
    $region52: #{tcn_forward.1} parent=1 // pred_region
      %141 = dma.done [#allocation4], 9216
    $region53: #{tcn_forward.1} parent=1 // pred_fallthru
      _
    // Predicated region
    $region54: #{tcn_forward.1} parent=1 // pred_check
      _
    $region55: #{tcn_forward.1} parent=1 // pred_check_branch
      %143 = sbr.rel (0) target = $region57
    $region56: #{tcn_forward.1} parent=1 // pred_region
      %144 = dma.done [#allocation6], 73728
    $region57: #{tcn_forward.1} parent=1 // pred_fallthru
      _
    // Predicated region
    $region58: #{tcn_forward.1} parent=1 // pred_check
      _
    $region59: #{tcn_forward.1} parent=1 // pred_check_branch
      %146 = sbr.rel (0) target = $region61
    $region60: #{tcn_forward.1} parent=1 // pred_region
      %147 = dma.done [#allocation6], 32
    $region61: #{tcn_forward.1} parent=1 // pred_fallthru
      _
    // Predicated region
    $region62: #{tcn_forward.1} parent=1 // pred_check
      _
    $region63: #{tcn_forward.1} parent=1 // pred_check_branch
      %149 = sbr.rel (0) target = $region65
    $region64: #{tcn_forward.1} parent=1 // pred_region
      %150 = dma.done [#allocation9], 16
    $region65: #{tcn_forward.1} parent=1 // pred_fallthru
      _
    // Predicated region
    $region66: #{tcn_forward.1} parent=1 // pred_check
      _
    $region67: #{tcn_forward.1} parent=1 // pred_check_branch
      %152 = sbr.rel (0) target = $region69
    $region68: #{tcn_forward.1} parent=1 // pred_region
      %153 = dma.done [#allocation9], 1536
    $region69: #{tcn_forward.1} parent=1 // pred_fallthru
      _
    // Predicated region
    $region70: #{tcn_forward.1} parent=1 // pred_check
      _
    $region71: #{tcn_forward.1} parent=1 // pred_check_branch
      %155 = sbr.rel (0) target = $region73
    $region72: #{tcn_forward.1} parent=1 // pred_region
      %156 = dma.done [#allocation12], 16
    $region73: #{tcn_forward.1} parent=1 // pred_fallthru
      _
    // Predicated region
    $region74: #{tcn_forward.1} parent=1 // pred_check
      _
    $region75: #{tcn_forward.1} parent=1 // pred_check_branch
      %158 = sbr.rel (0) target = $region77
    $region76: #{tcn_forward.1} parent=1 // pred_region
      %159 = dma.done [#allocation12], 6144
    $region77: #{tcn_forward.1} parent=1 // pred_fallthru
      _
    // Predicated region
    $region78: #{tcn_forward.1} parent=1 // pred_check
      _
    $region79: #{tcn_forward.1} parent=1 // pred_check_branch
      %161 = sbr.rel (0) target = $region81
    $region80: #{tcn_forward.1} parent=1 // pred_region
      %162 = dma.done [#allocation15], 32
    $region81: #{tcn_forward.1} parent=1 // pred_fallthru
      _
    // Predicated region
    $region82: #{tcn_forward.1} parent=1 // pred_check
      _
    $region83: #{tcn_forward.1} parent=1 // pred_check_branch
      %164 = sbr.rel (0) target = $region85
    $region84: #{tcn_forward.1} parent=1 // pred_region
      %165 = dma.done [#allocation15], 768
    $region85: #{tcn_forward.1} parent=1 // pred_fallthru
      _
    // Predicated region
    $region86: #{tcn_forward.1} parent=1 // pred_check
      _
    $region87: #{tcn_forward.1} parent=1 // pred_check_branch
      %167 = sbr.rel (0) target = $region89
    $region88: #{tcn_forward.1} parent=1 // pred_region
      %168 = dma.done [#allocation18], 32
    $region89: #{tcn_forward.1} parent=1 // pred_fallthru
      _
    %v170 = vld [vmem:[#allocation3] sm:$0xff]
    %v171 = vld [vmem:[#allocation3 + $0x8] sm:$0xff]
    %v172 = vld [vmem:[#allocation3 + $0x10] sm:$0xff]
    %v173 = vld [vmem:[#allocation3 + $0x18] sm:$0xff]
    %v174 = vld [vmem:[#allocation3 + $0x20] sm:$0xff]
    %v175 = vld [vmem:[#allocation3 + $0x28] sm:$0xff]
    %v176 = vld [vmem:[#allocation3 + $0x30] sm:$0xff]
    %v177 = vld [vmem:[#allocation3 + $0x38] sm:$0xff]
    %v178 = vld [vmem:[#allocation3 + $0x40] sm:$0xff]
    %v179 = vld [vmem:[#allocation3 + $0x48] sm:$0xff]
    %v180 = vld [vmem:[#allocation3 + $0x50] sm:$0xff]
    %v181 = vld [vmem:[#allocation3 + $0x58] sm:$0xff]
    %v182 = vld [vmem:[#allocation3 + $0x60] sm:$0xff]
    %v183 = vld [vmem:[#allocation3 + $0x68] sm:$0xff]
    %v184 = vld [vmem:[#allocation3 + $0x70] sm:$0xff]
    %v185 = vld [vmem:[#allocation3 + $0x78] sm:$0xff]
    %v186 = vld [vmem:[#allocation3 + $0x80] sm:$0xff]
    %v187 = vld [vmem:[#allocation3 + $0x88] sm:$0xff]
    %v188 = vld [vmem:[#allocation3 + $0x90] sm:$0xff]
    %v189 = vld [vmem:[#allocation3 + $0x98] sm:$0xff]
    %v190 = vld [vmem:[#allocation3 + $0xa0] sm:$0xff]
    %v191 = vld [vmem:[#allocation3 + $0xa8] sm:$0xff]
    %v192 = vld [vmem:[#allocation3 + $0xb0] sm:$0xff]
    %v193 = vld [vmem:[#allocation3 + $0xb8] sm:$0xff]
    %v194 = vld [vmem:[#allocation3 + $0xc0] sm:$0xff]
    %v195 = vld [vmem:[#allocation3 + $0xc8] sm:$0xff]
    %v196 = vld [vmem:[#allocation3 + $0xd0] sm:$0xff]
    %v197 = vld [vmem:[#allocation3 + $0xd8] sm:$0xff]
    %v198 = vld [vmem:[#allocation3 + $0xe0] sm:$0xff]
    %v199 = vld [vmem:[#allocation3 + $0xe8] sm:$0xff]
    %v200 = vld [vmem:[#allocation3 + $0xf0] sm:$0xff]
    %v201 = vld [vmem:[#allocation3 + $0xf8] sm:$0xff]
    %v202 = vld [vmem:[#allocation3 + $0x100] sm:$0xff]
    %v203 = vld [vmem:[#allocation3 + $0x108] sm:$0xff]
    %v204 = vld [vmem:[#allocation3 + $0x110] sm:$0xff]
    %v205 = vld [vmem:[#allocation3 + $0x118] sm:$0xff]
    %v206 = vld [vmem:[#allocation3 + $0x120] sm:$0xff]
    %v207 = vld [vmem:[#allocation3 + $0x128] sm:$0xff]
    %v208 = vld [vmem:[#allocation3 + $0x130] sm:$0xff]
    %v209 = vld [vmem:[#allocation3 + $0x138] sm:$0xff]
    %v210 = vld [vmem:[#allocation3 + $0x140] sm:$0xff]
    %v211 = vld [vmem:[#allocation3 + $0x148] sm:$0xff]
    %v212 = vld [vmem:[#allocation3 + $0x150] sm:$0xff]
    %v213 = vld [vmem:[#allocation3 + $0x158] sm:$0xff]
    %v214 = vld [vmem:[#allocation3 + $0x160] sm:$0xff]
    %v215 = vld [vmem:[#allocation3 + $0x168] sm:$0xff]
    %v216 = vld [vmem:[#allocation3 + $0x170] sm:$0xff]
    %v217 = vld [vmem:[#allocation3 + $0x178] sm:$0xff]
    %v218 = vld [vmem:[#allocation3 + $0x180] sm:$0xff]
    %v219 = vld [vmem:[#allocation3 + $0x188] sm:$0xff]
    %v220 = vld [vmem:[#allocation3 + $0x190] sm:$0xff]
    %v221 = vld [vmem:[#allocation3 + $0x198] sm:$0xff]
    %v222 = vld [vmem:[#allocation3 + $0x1a0] sm:$0xff]
    %v223 = vld [vmem:[#allocation3 + $0x1a8] sm:$0xff]
    %v224 = vld [vmem:[#allocation3 + $0x1b0] sm:$0x77]
    %v225 = vld [vmem:[#allocation3 + $0x1b8] sm:$0x77]
    %v226 = vld [vmem:[#allocation3 + $0x1c0] sm:$0x77]
    %v227 = vld [vmem:[#allocation3 + $0x1c8] sm:$0x77]
    %v228 = vld [vmem:[#allocation3 + $0x1d0] sm:$0x77]
    %v229 = vld [vmem:[#allocation3 + $0x1d8] sm:$0x77]
    %v230 = vld [vmem:[#allocation3 + $0x1e0] sm:$0x77]
    %v231 = vld [vmem:[#allocation3 + $0x1e8] sm:$0x77]
    %v232 = vld [vmem:[#allocation3 + $0x1f0] sm:$0x77]
    %v233 = vld [vmem:[#allocation3 + $0x1f8] sm:$0x77]
    %v234 = vld [vmem:[#allocation3 + $0x200] sm:$0x77]
    %v235 = vld [vmem:[#allocation3 + $0x208] sm:$0x77]
    %v236 = vld [vmem:[#allocation3 + $0x210] sm:$0x77]
    %v237 = vld [vmem:[#allocation3 + $0x218] sm:$0x77]
    %v238 = vld [vmem:[#allocation3 + $0x220] sm:$0x77]
    %v239 = vld [vmem:[#allocation3 + $0x228] sm:$0x77]
    %v240 = vld [vmem:[#allocation3 + $0x230] sm:$0x77]
    %v241 = vld [vmem:[#allocation3 + $0x238] sm:$0x77]
    %v242 = vld [vmem:[#allocation5] sm:$0xff]
    %v243 = vld [vmem:[#allocation5 + $0x8] sm:$0xff]
    %v244 = vld [vmem:[#allocation5 + $0x10] sm:$0xff]
    %v245 = vld [vmem:[#allocation5 + $0x18] sm:$0xff]
    %v246 = vld [vmem:[#allocation5 + $0x20] sm:$0xff]
    %v247 = vld [vmem:[#allocation5 + $0x28] sm:$0xff]
    %v248 = vld [vmem:[#allocation5 + $0x30] sm:$0xff]
    %v249 = vld [vmem:[#allocation5 + $0x38] sm:$0xff]
    %v250 = vld [vmem:[#allocation5 + $0x40] sm:$0xff]
    %v251 = vld [vmem:[#allocation5 + $0x48] sm:$0xff]
    %v252 = vld [vmem:[#allocation5 + $0x50] sm:$0xff]
    %v253 = vld [vmem:[#allocation5 + $0x58] sm:$0xff]
    %v254 = vld [vmem:[#allocation5 + $0x60] sm:$0xff]
    %v255 = vld [vmem:[#allocation5 + $0x68] sm:$0xff]
    %v256 = vld [vmem:[#allocation5 + $0x70] sm:$0xff]
    %v257 = vld [vmem:[#allocation5 + $0x78] sm:$0xff]
    %v258 = vld [vmem:[#allocation5 + $0x80] sm:$0xff]
    %v259 = vld [vmem:[#allocation5 + $0x88] sm:$0xff]
    %v260 = vld [vmem:[#allocation5 + $0x90] sm:$0xff]
    %v261 = vld [vmem:[#allocation5 + $0x98] sm:$0xff]
    %v262 = vld [vmem:[#allocation5 + $0xa0] sm:$0xff]
    %v263 = vld [vmem:[#allocation5 + $0xa8] sm:$0xff]
    %v264 = vld [vmem:[#allocation5 + $0xb0] sm:$0xff]
    %v265 = vld [vmem:[#allocation5 + $0xb8] sm:$0xff]
    %v266 = vld [vmem:[#allocation5 + $0xc0] sm:$0xff]
    %v267 = vld [vmem:[#allocation5 + $0xc8] sm:$0xff]
    %v268 = vld [vmem:[#allocation5 + $0xd0] sm:$0xff]
    %v269 = vld [vmem:[#allocation5 + $0xd8] sm:$0xff]
    %v270 = vld [vmem:[#allocation5 + $0xe0] sm:$0xff]
    %v271 = vld [vmem:[#allocation5 + $0xe8] sm:$0xff]
    %v272 = vld [vmem:[#allocation5 + $0xf0] sm:$0xff]
    %v273 = vld [vmem:[#allocation5 + $0xf8] sm:$0xff]
    %v274 = vld [vmem:[#allocation5 + $0x100] sm:$0xff]
    %v275 = vld [vmem:[#allocation5 + $0x108] sm:$0xff]
    %v276 = vld [vmem:[#allocation5 + $0x110] sm:$0xff]
    %v277 = vld [vmem:[#allocation5 + $0x118] sm:$0xff]
    %v278 = vld [vmem:[#allocation5 + $0x120] sm:$0xff]
    %v279 = vld [vmem:[#allocation5 + $0x128] sm:$0xff]
    %v280 = vld [vmem:[#allocation5 + $0x130] sm:$0xff]
    %v281 = vld [vmem:[#allocation5 + $0x138] sm:$0xff]
    %v282 = vld [vmem:[#allocation5 + $0x140] sm:$0xff]
    %v283 = vld [vmem:[#allocation5 + $0x148] sm:$0xff]
    %v284 = vld [vmem:[#allocation5 + $0x150] sm:$0xff]
    %v285 = vld [vmem:[#allocation5 + $0x158] sm:$0xff]
    %v286 = vld [vmem:[#allocation5 + $0x160] sm:$0xff]
    %v287 = vld [vmem:[#allocation5 + $0x168] sm:$0xff]
    %v288 = vld [vmem:[#allocation5 + $0x170] sm:$0xff]
    %v289 = vld [vmem:[#allocation5 + $0x178] sm:$0xff]
    %v290 = vld [vmem:[#allocation5 + $0x180] sm:$0xff]
    %v291 = vld [vmem:[#allocation5 + $0x188] sm:$0xff]
    %v292 = vld [vmem:[#allocation5 + $0x190] sm:$0xff]
    %v293 = vld [vmem:[#allocation5 + $0x198] sm:$0xff]
    %v294 = vld [vmem:[#allocation5 + $0x1a0] sm:$0xff]
    %v295 = vld [vmem:[#allocation5 + $0x1a8] sm:$0xff]
    %v296 = vld [vmem:[#allocation5 + $0x1b0] sm:$0xff]
    %v297 = vld [vmem:[#allocation5 + $0x1b8] sm:$0xff]
    %v298 = vld [vmem:[#allocation5 + $0x1c0] sm:$0xff]
    %v299 = vld [vmem:[#allocation5 + $0x1c8] sm:$0xff]
    %v300 = vld [vmem:[#allocation5 + $0x1d0] sm:$0xff]
    %v301 = vld [vmem:[#allocation5 + $0x1d8] sm:$0xff]
    %v302 = vld [vmem:[#allocation5 + $0x1e0] sm:$0xff]
    %v303 = vld [vmem:[#allocation5 + $0x1e8] sm:$0xff]
    %v304 = vld [vmem:[#allocation5 + $0x1f0] sm:$0xff]
    %v305 = vld [vmem:[#allocation5 + $0x1f8] sm:$0xff]
    %v306 = vld [vmem:[#allocation5 + $0x200] sm:$0xff]
    %v307 = vld [vmem:[#allocation5 + $0x208] sm:$0xff]
    %v308 = vld [vmem:[#allocation5 + $0x210] sm:$0xff]
    %v309 = vld [vmem:[#allocation5 + $0x218] sm:$0xff]
    %v310 = vld [vmem:[#allocation5 + $0x220] sm:$0xff]
    %v311 = vld [vmem:[#allocation5 + $0x228] sm:$0xff]
    %v312 = vld [vmem:[#allocation5 + $0x230] sm:$0xff]
    %v313 = vld [vmem:[#allocation5 + $0x238] sm:$0xff]
    %v314 = vld [vmem:[#allocation5 + $0x240] sm:$0xff]
    %v315 = vld [vmem:[#allocation5 + $0x248] sm:$0xff]
    %v316 = vld [vmem:[#allocation5 + $0x250] sm:$0xff]
    %v317 = vld [vmem:[#allocation5 + $0x258] sm:$0xff]
    %v318 = vld [vmem:[#allocation5 + $0x260] sm:$0xff]
    %v319 = vld [vmem:[#allocation5 + $0x268] sm:$0xff]
    %v320 = vld [vmem:[#allocation5 + $0x270] sm:$0xff]
    %v321 = vld [vmem:[#allocation5 + $0x278] sm:$0xff]
    %v322 = vld [vmem:[#allocation5 + $0x280] sm:$0xff]
    %v323 = vld [vmem:[#allocation5 + $0x288] sm:$0xff]
    %v324 = vld [vmem:[#allocation5 + $0x290] sm:$0xff]
    %v325 = vld [vmem:[#allocation5 + $0x298] sm:$0xff]
    %v326 = vld [vmem:[#allocation5 + $0x2a0] sm:$0xff]
    %v327 = vld [vmem:[#allocation5 + $0x2a8] sm:$0xff]
    %v328 = vld [vmem:[#allocation5 + $0x2b0] sm:$0xff]
    %v329 = vld [vmem:[#allocation5 + $0x2b8] sm:$0xff]
    %v330 = vld [vmem:[#allocation5 + $0x2c0] sm:$0xff]
    %v331 = vld [vmem:[#allocation5 + $0x2c8] sm:$0xff]
    %v332 = vld [vmem:[#allocation5 + $0x2d0] sm:$0xff]
    %v333 = vld [vmem:[#allocation5 + $0x2d8] sm:$0xff]
    %v334 = vld [vmem:[#allocation5 + $0x2e0] sm:$0xff]
    %v335 = vld [vmem:[#allocation5 + $0x2e8] sm:$0xff]
    %v336 = vld [vmem:[#allocation5 + $0x2f0] sm:$0xff]
    %v337 = vld [vmem:[#allocation5 + $0x2f8] sm:$0xff]
    %v338 = vld [vmem:[#allocation5 + $0x300] sm:$0xff]
    %v339 = vld [vmem:[#allocation5 + $0x308] sm:$0xff]
    %v340 = vld [vmem:[#allocation5 + $0x310] sm:$0xff]
    %v341 = vld [vmem:[#allocation5 + $0x318] sm:$0xff]
    %v342 = vld [vmem:[#allocation5 + $0x320] sm:$0xff]
    %v343 = vld [vmem:[#allocation5 + $0x328] sm:$0xff]
    %v344 = vld [vmem:[#allocation5 + $0x330] sm:$0xff]
    %v345 = vld [vmem:[#allocation5 + $0x338] sm:$0xff]
    %v346 = vld [vmem:[#allocation5 + $0x340] sm:$0xff]
    %v347 = vld [vmem:[#allocation5 + $0x348] sm:$0xff]
    %v348 = vld [vmem:[#allocation5 + $0x350] sm:$0xff]
    %v349 = vld [vmem:[#allocation5 + $0x358] sm:$0xff]
    %v350 = vld [vmem:[#allocation5 + $0x360] sm:$0xff]
    %v351 = vld [vmem:[#allocation5 + $0x368] sm:$0xff]
    %v352 = vld [vmem:[#allocation5 + $0x370] sm:$0xff]
    %v353 = vld [vmem:[#allocation5 + $0x378] sm:$0xff]
    %v354 = vld [vmem:[#allocation5 + $0x380] sm:$0xff]
    %v355 = vld [vmem:[#allocation5 + $0x388] sm:$0xff]
    %v356 = vld [vmem:[#allocation5 + $0x390] sm:$0xff]
    %v357 = vld [vmem:[#allocation5 + $0x398] sm:$0xff]
    %v358 = vld [vmem:[#allocation5 + $0x3a0] sm:$0xff]
    %v359 = vld [vmem:[#allocation5 + $0x3a8] sm:$0xff]
    %v360 = vld [vmem:[#allocation5 + $0x3b0] sm:$0xff]
    %v361 = vld [vmem:[#allocation5 + $0x3b8] sm:$0xff]
    %v362 = vld [vmem:[#allocation5 + $0x3c0] sm:$0xff]
    %v363 = vld [vmem:[#allocation5 + $0x3c8] sm:$0xff]
    %v364 = vld [vmem:[#allocation5 + $0x3d0] sm:$0xff]
    %v365 = vld [vmem:[#allocation5 + $0x3d8] sm:$0xff]
    %v366 = vld [vmem:[#allocation5 + $0x3e0] sm:$0xff]
    %v367 = vld [vmem:[#allocation5 + $0x3e8] sm:$0xff]
    %v368 = vld [vmem:[#allocation5 + $0x3f0] sm:$0xff]
    %v369 = vld [vmem:[#allocation5 + $0x3f8] sm:$0xff]
    %v370 = vld [vmem:[#allocation5 + $0x400] sm:$0xff]
    %v371 = vld [vmem:[#allocation5 + $0x408] sm:$0xff]
    %v372 = vld [vmem:[#allocation5 + $0x410] sm:$0xff]
    %v373 = vld [vmem:[#allocation5 + $0x418] sm:$0xff]
    %v374 = vld [vmem:[#allocation5 + $0x420] sm:$0xff]
    %v375 = vld [vmem:[#allocation5 + $0x428] sm:$0xff]
    %v376 = vld [vmem:[#allocation5 + $0x430] sm:$0xff]
    %v377 = vld [vmem:[#allocation5 + $0x438] sm:$0xff]
    %v378 = vld [vmem:[#allocation5 + $0x440] sm:$0xff]
    %v379 = vld [vmem:[#allocation5 + $0x448] sm:$0xff]
    %v380 = vld [vmem:[#allocation5 + $0x450] sm:$0xff]
    %v381 = vld [vmem:[#allocation5 + $0x458] sm:$0xff]
    %v382 = vld [vmem:[#allocation5 + $0x460] sm:$0xff]
    %v383 = vld [vmem:[#allocation5 + $0x468] sm:$0xff]
    %v384 = vld [vmem:[#allocation5 + $0x470] sm:$0xff]
    %v385 = vld [vmem:[#allocation5 + $0x478] sm:$0xff]
    %v386 = vld [vmem:[#allocation5 + $0x480] sm:$0xff]
    %v387 = vld [vmem:[#allocation5 + $0x488] sm:$0xff]
    %v388 = vld [vmem:[#allocation5 + $0x490] sm:$0xff]
    %v389 = vld [vmem:[#allocation5 + $0x498] sm:$0xff]
    %v390 = vld [vmem:[#allocation5 + $0x4a0] sm:$0xff]
    %v391 = vld [vmem:[#allocation5 + $0x4a8] sm:$0xff]
    %v392 = vld [vmem:[#allocation5 + $0x4b0] sm:$0xff]
    %v393 = vld [vmem:[#allocation5 + $0x4b8] sm:$0xff]
    %v394 = vld [vmem:[#allocation5 + $0x4c0] sm:$0xff]
    %v395 = vld [vmem:[#allocation5 + $0x4c8] sm:$0xff]
    %v396 = vld [vmem:[#allocation5 + $0x4d0] sm:$0xff]
    %v397 = vld [vmem:[#allocation5 + $0x4d8] sm:$0xff]
    %v398 = vld [vmem:[#allocation5 + $0x4e0] sm:$0xff]
    %v399 = vld [vmem:[#allocation5 + $0x4e8] sm:$0xff]
    %v400 = vld [vmem:[#allocation5 + $0x4f0] sm:$0xff]
    %v401 = vld [vmem:[#allocation5 + $0x4f8] sm:$0xff]
    %v402 = vld [vmem:[#allocation5 + $0x500] sm:$0xff]
    %v403 = vld [vmem:[#allocation5 + $0x508] sm:$0xff]
    %v404 = vld [vmem:[#allocation5 + $0x510] sm:$0xff]
    %v405 = vld [vmem:[#allocation5 + $0x518] sm:$0xff]
    %v406 = vld [vmem:[#allocation5 + $0x520] sm:$0xff]
    %v407 = vld [vmem:[#allocation5 + $0x528] sm:$0xff]
    %v408 = vld [vmem:[#allocation5 + $0x530] sm:$0xff]
    %v409 = vld [vmem:[#allocation5 + $0x538] sm:$0xff]
    %v410 = vld [vmem:[#allocation5 + $0x540] sm:$0xff]
    %v411 = vld [vmem:[#allocation5 + $0x548] sm:$0xff]
    %v412 = vld [vmem:[#allocation5 + $0x550] sm:$0xff]
    %v413 = vld [vmem:[#allocation5 + $0x558] sm:$0xff]
    %v414 = vld [vmem:[#allocation5 + $0x560] sm:$0xff]
    %v415 = vld [vmem:[#allocation5 + $0x568] sm:$0xff]
    %v416 = vld [vmem:[#allocation5 + $0x570] sm:$0xff]
    %v417 = vld [vmem:[#allocation5 + $0x578] sm:$0xff]
    %v418 = vld [vmem:[#allocation5 + $0x580] sm:$0xff]
    %v419 = vld [vmem:[#allocation5 + $0x588] sm:$0xff]
    %v420 = vld [vmem:[#allocation5 + $0x590] sm:$0xff]
    %v421 = vld [vmem:[#allocation5 + $0x598] sm:$0xff]
    %v422 = vld [vmem:[#allocation5 + $0x5a0] sm:$0xff]
    %v423 = vld [vmem:[#allocation5 + $0x5a8] sm:$0xff]
    %v424 = vld [vmem:[#allocation5 + $0x5b0] sm:$0xff]
    %v425 = vld [vmem:[#allocation5 + $0x5b8] sm:$0xff]
    %v426 = vld [vmem:[#allocation5 + $0x5c0] sm:$0xff]
    %v427 = vld [vmem:[#allocation5 + $0x5c8] sm:$0xff]
    %v428 = vld [vmem:[#allocation5 + $0x5d0] sm:$0xff]
    %v429 = vld [vmem:[#allocation5 + $0x5d8] sm:$0xff]
    %v430 = vld [vmem:[#allocation5 + $0x5e0] sm:$0xff]
    %v431 = vld [vmem:[#allocation5 + $0x5e8] sm:$0xff]
    %v432 = vld [vmem:[#allocation5 + $0x5f0] sm:$0xff]
    %v433 = vld [vmem:[#allocation5 + $0x5f8] sm:$0xff]
    %v434 = vld [vmem:[#allocation5 + $0x600] sm:$0xff]
    %v435 = vld [vmem:[#allocation5 + $0x608] sm:$0xff]
    %v436 = vld [vmem:[#allocation5 + $0x610] sm:$0xff]
    %v437 = vld [vmem:[#allocation5 + $0x618] sm:$0xff]
    %v438 = vld [vmem:[#allocation5 + $0x620] sm:$0xff]
    %v439 = vld [vmem:[#allocation5 + $0x628] sm:$0xff]
    %v440 = vld [vmem:[#allocation5 + $0x630] sm:$0xff]
    %v441 = vld [vmem:[#allocation5 + $0x638] sm:$0xff]
    %v442 = vld [vmem:[#allocation5 + $0x640] sm:$0xff]
    %v443 = vld [vmem:[#allocation5 + $0x648] sm:$0xff]
    %v444 = vld [vmem:[#allocation5 + $0x650] sm:$0xff]
    %v445 = vld [vmem:[#allocation5 + $0x658] sm:$0xff]
    %v446 = vld [vmem:[#allocation5 + $0x660] sm:$0xff]
    %v447 = vld [vmem:[#allocation5 + $0x668] sm:$0xff]
    %v448 = vld [vmem:[#allocation5 + $0x670] sm:$0xff]
    %v449 = vld [vmem:[#allocation5 + $0x678] sm:$0xff]
    %v450 = vld [vmem:[#allocation5 + $0x680] sm:$0xff]
    %v451 = vld [vmem:[#allocation5 + $0x688] sm:$0xff]
    %v452 = vld [vmem:[#allocation5 + $0x690] sm:$0xff]
    %v453 = vld [vmem:[#allocation5 + $0x698] sm:$0xff]
    %v454 = vld [vmem:[#allocation5 + $0x6a0] sm:$0xff]
    %v455 = vld [vmem:[#allocation5 + $0x6a8] sm:$0xff]
    %v456 = vld [vmem:[#allocation5 + $0x6b0] sm:$0xff]
    %v457 = vld [vmem:[#allocation5 + $0x6b8] sm:$0xff]
    %v458 = vld [vmem:[#allocation5 + $0x6c0] sm:$0xff]
    %v459 = vld [vmem:[#allocation5 + $0x6c8] sm:$0xff]
    %v460 = vld [vmem:[#allocation5 + $0x6d0] sm:$0xff]
    %v461 = vld [vmem:[#allocation5 + $0x6d8] sm:$0xff]
    %v462 = vld [vmem:[#allocation5 + $0x6e0] sm:$0xff]
    %v463 = vld [vmem:[#allocation5 + $0x6e8] sm:$0xff]
    %v464 = vld [vmem:[#allocation5 + $0x6f0] sm:$0xff]
    %v465 = vld [vmem:[#allocation5 + $0x6f8] sm:$0xff]
    %v466 = vld [vmem:[#allocation5 + $0x700] sm:$0xff]
    %v467 = vld [vmem:[#allocation5 + $0x708] sm:$0xff]
    %v468 = vld [vmem:[#allocation5 + $0x710] sm:$0xff]
    %v469 = vld [vmem:[#allocation5 + $0x718] sm:$0xff]
    %v470 = vld [vmem:[#allocation5 + $0x720] sm:$0xff]
    %v471 = vld [vmem:[#allocation5 + $0x728] sm:$0xff]
    %v472 = vld [vmem:[#allocation5 + $0x730] sm:$0xff]
    %v473 = vld [vmem:[#allocation5 + $0x738] sm:$0xff]
    %v474 = vld [vmem:[#allocation5 + $0x740] sm:$0xff]
    %v475 = vld [vmem:[#allocation5 + $0x748] sm:$0xff]
    %v476 = vld [vmem:[#allocation5 + $0x750] sm:$0xff]
    %v477 = vld [vmem:[#allocation5 + $0x758] sm:$0xff]
    %v478 = vld [vmem:[#allocation5 + $0x760] sm:$0xff]
    %v479 = vld [vmem:[#allocation5 + $0x768] sm:$0xff]
    %v480 = vld [vmem:[#allocation5 + $0x770] sm:$0xff]
    %v481 = vld [vmem:[#allocation5 + $0x778] sm:$0xff]
    %v482 = vld [vmem:[#allocation5 + $0x780] sm:$0xff]
    %v483 = vld [vmem:[#allocation5 + $0x788] sm:$0xff]
    %v484 = vld [vmem:[#allocation5 + $0x790] sm:$0xff]
    %v485 = vld [vmem:[#allocation5 + $0x798] sm:$0xff]
    %v486 = vld [vmem:[#allocation5 + $0x7a0] sm:$0xff]
    %v487 = vld [vmem:[#allocation5 + $0x7a8] sm:$0xff]
    %v488 = vld [vmem:[#allocation5 + $0x7b0] sm:$0xff]
    %v489 = vld [vmem:[#allocation5 + $0x7b8] sm:$0xff]
    %v490 = vld [vmem:[#allocation5 + $0x7c0] sm:$0xff]
    %v491 = vld [vmem:[#allocation5 + $0x7c8] sm:$0xff]
    %v492 = vld [vmem:[#allocation5 + $0x7d0] sm:$0xff]
    %v493 = vld [vmem:[#allocation5 + $0x7d8] sm:$0xff]
    %v494 = vld [vmem:[#allocation5 + $0x7e0] sm:$0xff]
    %v495 = vld [vmem:[#allocation5 + $0x7e8] sm:$0xff]
    %v496 = vld [vmem:[#allocation5 + $0x7f0] sm:$0xff]
    %v497 = vld [vmem:[#allocation5 + $0x7f8] sm:$0xff]
    %v498 = vld [vmem:[#allocation5 + $0x800] sm:$0xff]
    %v499 = vld [vmem:[#allocation5 + $0x808] sm:$0xff]
    %v500 = vld [vmem:[#allocation5 + $0x810] sm:$0xff]
    %v501 = vld [vmem:[#allocation5 + $0x818] sm:$0xff]
    %v502 = vld [vmem:[#allocation5 + $0x820] sm:$0xff]
    %v503 = vld [vmem:[#allocation5 + $0x828] sm:$0xff]
    %v504 = vld [vmem:[#allocation5 + $0x830] sm:$0xff]
    %v505 = vld [vmem:[#allocation5 + $0x838] sm:$0xff]
    %v506 = vld [vmem:[#allocation5 + $0x840] sm:$0xff]
    %v507 = vld [vmem:[#allocation5 + $0x848] sm:$0xff]
    %v508 = vld [vmem:[#allocation5 + $0x850] sm:$0xff]
    %v509 = vld [vmem:[#allocation5 + $0x858] sm:$0xff]
    %v510 = vld [vmem:[#allocation5 + $0x860] sm:$0xff]
    %v511 = vld [vmem:[#allocation5 + $0x868] sm:$0xff]
    %v512 = vld [vmem:[#allocation5 + $0x870] sm:$0xff]
    %v513 = vld [vmem:[#allocation5 + $0x878] sm:$0xff]
    %v514 = vld [vmem:[#allocation5 + $0x880] sm:$0xff]
    %v515 = vld [vmem:[#allocation5 + $0x888] sm:$0xff]
    %v516 = vld [vmem:[#allocation5 + $0x890] sm:$0xff]
    %v517 = vld [vmem:[#allocation5 + $0x898] sm:$0xff]
    %v518 = vld [vmem:[#allocation5 + $0x8a0] sm:$0xff]
    %v519 = vld [vmem:[#allocation5 + $0x8a8] sm:$0xff]
    %v520 = vld [vmem:[#allocation5 + $0x8b0] sm:$0xff]
    %v521 = vld [vmem:[#allocation5 + $0x8b8] sm:$0xff]
    %v522 = vld [vmem:[#allocation5 + $0x8c0] sm:$0xff]
    %v523 = vld [vmem:[#allocation5 + $0x8c8] sm:$0xff]
    %v524 = vld [vmem:[#allocation5 + $0x8d0] sm:$0xff]
    %v525 = vld [vmem:[#allocation5 + $0x8d8] sm:$0xff]
    %v526 = vld [vmem:[#allocation5 + $0x8e0] sm:$0xff]
    %v527 = vld [vmem:[#allocation5 + $0x8e8] sm:$0xff]
    %v528 = vld [vmem:[#allocation5 + $0x8f0] sm:$0xff]
    %v529 = vld [vmem:[#allocation5 + $0x8f8] sm:$0xff]
    %v530 = vld [vmem:[#allocation5 + $0x900] sm:$0xff]
    %v531 = vld [vmem:[#allocation5 + $0x908] sm:$0xff]
    %v532 = vld [vmem:[#allocation5 + $0x910] sm:$0xff]
    %v533 = vld [vmem:[#allocation5 + $0x918] sm:$0xff]
    %v534 = vld [vmem:[#allocation5 + $0x920] sm:$0xff]
    %v535 = vld [vmem:[#allocation5 + $0x928] sm:$0xff]
    %v536 = vld [vmem:[#allocation5 + $0x930] sm:$0xff]
    %v537 = vld [vmem:[#allocation5 + $0x938] sm:$0xff]
    %v538 = vld [vmem:[#allocation5 + $0x940] sm:$0xff]
    %v539 = vld [vmem:[#allocation5 + $0x948] sm:$0xff]
    %v540 = vld [vmem:[#allocation5 + $0x950] sm:$0xff]
    %v541 = vld [vmem:[#allocation5 + $0x958] sm:$0xff]
    %v542 = vld [vmem:[#allocation5 + $0x960] sm:$0xff]
    %v543 = vld [vmem:[#allocation5 + $0x968] sm:$0xff]
    %v544 = vld [vmem:[#allocation5 + $0x970] sm:$0xff]
    %v545 = vld [vmem:[#allocation5 + $0x978] sm:$0xff]
    %v546 = vld [vmem:[#allocation5 + $0x980] sm:$0xff]
    %v547 = vld [vmem:[#allocation5 + $0x988] sm:$0xff]
    %v548 = vld [vmem:[#allocation5 + $0x990] sm:$0xff]
    %v549 = vld [vmem:[#allocation5 + $0x998] sm:$0xff]
    %v550 = vld [vmem:[#allocation5 + $0x9a0] sm:$0xff]
    %v551 = vld [vmem:[#allocation5 + $0x9a8] sm:$0xff]
    %v552 = vld [vmem:[#allocation5 + $0x9b0] sm:$0xff]
    %v553 = vld [vmem:[#allocation5 + $0x9b8] sm:$0xff]
    %v554 = vld [vmem:[#allocation5 + $0x9c0] sm:$0xff]
    %v555 = vld [vmem:[#allocation5 + $0x9c8] sm:$0xff]
    %v556 = vld [vmem:[#allocation5 + $0x9d0] sm:$0xff]
    %v557 = vld [vmem:[#allocation5 + $0x9d8] sm:$0xff]
    %v558 = vld [vmem:[#allocation5 + $0x9e0] sm:$0xff]
    %v559 = vld [vmem:[#allocation5 + $0x9e8] sm:$0xff]
    %v560 = vld [vmem:[#allocation5 + $0x9f0] sm:$0xff]
    %v561 = vld [vmem:[#allocation5 + $0x9f8] sm:$0xff]
    %v562 = vld [vmem:[#allocation5 + $0xa00] sm:$0xff]
    %v563 = vld [vmem:[#allocation5 + $0xa08] sm:$0xff]
    %v564 = vld [vmem:[#allocation5 + $0xa10] sm:$0xff]
    %v565 = vld [vmem:[#allocation5 + $0xa18] sm:$0xff]
    %v566 = vld [vmem:[#allocation5 + $0xa20] sm:$0xff]
    %v567 = vld [vmem:[#allocation5 + $0xa28] sm:$0xff]
    %v568 = vld [vmem:[#allocation5 + $0xa30] sm:$0xff]
    %v569 = vld [vmem:[#allocation5 + $0xa38] sm:$0xff]
    %v570 = vld [vmem:[#allocation5 + $0xa40] sm:$0xff]
    %v571 = vld [vmem:[#allocation5 + $0xa48] sm:$0xff]
    %v572 = vld [vmem:[#allocation5 + $0xa50] sm:$0xff]
    %v573 = vld [vmem:[#allocation5 + $0xa58] sm:$0xff]
    %v574 = vld [vmem:[#allocation5 + $0xa60] sm:$0xff]
    %v575 = vld [vmem:[#allocation5 + $0xa68] sm:$0xff]
    %v576 = vld [vmem:[#allocation5 + $0xa70] sm:$0xff]
    %v577 = vld [vmem:[#allocation5 + $0xa78] sm:$0xff]
    %v578 = vld [vmem:[#allocation5 + $0xa80] sm:$0xff]
    %v579 = vld [vmem:[#allocation5 + $0xa88] sm:$0xff]
    %v580 = vld [vmem:[#allocation5 + $0xa90] sm:$0xff]
    %v581 = vld [vmem:[#allocation5 + $0xa98] sm:$0xff]
    %v582 = vld [vmem:[#allocation5 + $0xaa0] sm:$0xff]
    %v583 = vld [vmem:[#allocation5 + $0xaa8] sm:$0xff]
    %v584 = vld [vmem:[#allocation5 + $0xab0] sm:$0xff]
    %v585 = vld [vmem:[#allocation5 + $0xab8] sm:$0xff]
    %v586 = vld [vmem:[#allocation5 + $0xac0] sm:$0xff]
    %v587 = vld [vmem:[#allocation5 + $0xac8] sm:$0xff]
    %v588 = vld [vmem:[#allocation5 + $0xad0] sm:$0xff]
    %v589 = vld [vmem:[#allocation5 + $0xad8] sm:$0xff]
    %v590 = vld [vmem:[#allocation5 + $0xae0] sm:$0xff]
    %v591 = vld [vmem:[#allocation5 + $0xae8] sm:$0xff]
    %v592 = vld [vmem:[#allocation5 + $0xaf0] sm:$0xff]
    %v593 = vld [vmem:[#allocation5 + $0xaf8] sm:$0xff]
    %v594 = vld [vmem:[#allocation5 + $0xb00] sm:$0xff]
    %v595 = vld [vmem:[#allocation5 + $0xb08] sm:$0xff]
    %v596 = vld [vmem:[#allocation5 + $0xb10] sm:$0xff]
    %v597 = vld [vmem:[#allocation5 + $0xb18] sm:$0xff]
    %v598 = vld [vmem:[#allocation5 + $0xb20] sm:$0xff]
    %v599 = vld [vmem:[#allocation5 + $0xb28] sm:$0xff]
    %v600 = vld [vmem:[#allocation5 + $0xb30] sm:$0xff]
    %v601 = vld [vmem:[#allocation5 + $0xb38] sm:$0xff]
    %v602 = vld [vmem:[#allocation5 + $0xb40] sm:$0xff]
    %v603 = vld [vmem:[#allocation5 + $0xb48] sm:$0xff]
    %v604 = vld [vmem:[#allocation5 + $0xb50] sm:$0xff]
    %v605 = vld [vmem:[#allocation5 + $0xb58] sm:$0xff]
    %v606 = vld [vmem:[#allocation5 + $0xb60] sm:$0xff]
    %v607 = vld [vmem:[#allocation5 + $0xb68] sm:$0xff]
    %v608 = vld [vmem:[#allocation5 + $0xb70] sm:$0xff]
    %v609 = vld [vmem:[#allocation5 + $0xb78] sm:$0xff]
    %v610 = vld [vmem:[#allocation5 + $0xb80] sm:$0xff]
    %v611 = vld [vmem:[#allocation5 + $0xb88] sm:$0xff]
    %v612 = vld [vmem:[#allocation5 + $0xb90] sm:$0xff]
    %v613 = vld [vmem:[#allocation5 + $0xb98] sm:$0xff]
    %v614 = vld [vmem:[#allocation5 + $0xba0] sm:$0xff]
    %v615 = vld [vmem:[#allocation5 + $0xba8] sm:$0xff]
    %v616 = vld [vmem:[#allocation5 + $0xbb0] sm:$0xff]
    %v617 = vld [vmem:[#allocation5 + $0xbb8] sm:$0xff]
    %v618 = vld [vmem:[#allocation5 + $0xbc0] sm:$0xff]
    %v619 = vld [vmem:[#allocation5 + $0xbc8] sm:$0xff]
    %v620 = vld [vmem:[#allocation5 + $0xbd0] sm:$0xff]
    %v621 = vld [vmem:[#allocation5 + $0xbd8] sm:$0xff]
    %v622 = vld [vmem:[#allocation5 + $0xbe0] sm:$0xff]
    %v623 = vld [vmem:[#allocation5 + $0xbe8] sm:$0xff]
    %v624 = vld [vmem:[#allocation5 + $0xbf0] sm:$0xff]
    %v625 = vld [vmem:[#allocation5 + $0xbf8] sm:$0xff]
    %v626 = vld [vmem:[#allocation5 + $0xc00] sm:$0xff]
    %v627 = vld [vmem:[#allocation5 + $0xc08] sm:$0xff]
    %v628 = vld [vmem:[#allocation5 + $0xc10] sm:$0xff]
    %v629 = vld [vmem:[#allocation5 + $0xc18] sm:$0xff]
    %v630 = vld [vmem:[#allocation5 + $0xc20] sm:$0xff]
    %v631 = vld [vmem:[#allocation5 + $0xc28] sm:$0xff]
    %v632 = vld [vmem:[#allocation5 + $0xc30] sm:$0xff]
    %v633 = vld [vmem:[#allocation5 + $0xc38] sm:$0xff]
    %v634 = vld [vmem:[#allocation5 + $0xc40] sm:$0xff]
    %v635 = vld [vmem:[#allocation5 + $0xc48] sm:$0xff]
    %v636 = vld [vmem:[#allocation5 + $0xc50] sm:$0xff]
    %v637 = vld [vmem:[#allocation5 + $0xc58] sm:$0xff]
    %v638 = vld [vmem:[#allocation5 + $0xc60] sm:$0xff]
    %v639 = vld [vmem:[#allocation5 + $0xc68] sm:$0xff]
    %v640 = vld [vmem:[#allocation5 + $0xc70] sm:$0xff]
    %v641 = vld [vmem:[#allocation5 + $0xc78] sm:$0xff]
    %v642 = vld [vmem:[#allocation5 + $0xc80] sm:$0xff]
    %v643 = vld [vmem:[#allocation5 + $0xc88] sm:$0xff]
    %v644 = vld [vmem:[#allocation5 + $0xc90] sm:$0xff]
    %v645 = vld [vmem:[#allocation5 + $0xc98] sm:$0xff]
    %v646 = vld [vmem:[#allocation5 + $0xca0] sm:$0xff]
    %v647 = vld [vmem:[#allocation5 + $0xca8] sm:$0xff]
    %v648 = vld [vmem:[#allocation5 + $0xcb0] sm:$0xff]
    %v649 = vld [vmem:[#allocation5 + $0xcb8] sm:$0xff]
    %v650 = vld [vmem:[#allocation5 + $0xcc0] sm:$0xff]
    %v651 = vld [vmem:[#allocation5 + $0xcc8] sm:$0xff]
    %v652 = vld [vmem:[#allocation5 + $0xcd0] sm:$0xff]
    %v653 = vld [vmem:[#allocation5 + $0xcd8] sm:$0xff]
    %v654 = vld [vmem:[#allocation5 + $0xce0] sm:$0xff]
    %v655 = vld [vmem:[#allocation5 + $0xce8] sm:$0xff]
    %v656 = vld [vmem:[#allocation5 + $0xcf0] sm:$0xff]
    %v657 = vld [vmem:[#allocation5 + $0xcf8] sm:$0xff]
    %v658 = vld [vmem:[#allocation5 + $0xd00] sm:$0xff]
    %v659 = vld [vmem:[#allocation5 + $0xd08] sm:$0xff]
    %v660 = vld [vmem:[#allocation5 + $0xd10] sm:$0xff]
    %v661 = vld [vmem:[#allocation5 + $0xd18] sm:$0xff]
    %v662 = vld [vmem:[#allocation5 + $0xd20] sm:$0xff]
    %v663 = vld [vmem:[#allocation5 + $0xd28] sm:$0xff]
    %v664 = vld [vmem:[#allocation5 + $0xd30] sm:$0xff]
    %v665 = vld [vmem:[#allocation5 + $0xd38] sm:$0xff]
    %v666 = vld [vmem:[#allocation5 + $0xd40] sm:$0xff]
    %v667 = vld [vmem:[#allocation5 + $0xd48] sm:$0xff]
    %v668 = vld [vmem:[#allocation5 + $0xd50] sm:$0xff]
    %v669 = vld [vmem:[#allocation5 + $0xd58] sm:$0xff]
    %v670 = vld [vmem:[#allocation5 + $0xd60] sm:$0xff]
    %v671 = vld [vmem:[#allocation5 + $0xd68] sm:$0xff]
    %v672 = vld [vmem:[#allocation5 + $0xd70] sm:$0xff]
    %v673 = vld [vmem:[#allocation5 + $0xd78] sm:$0xff]
    %v674 = vld [vmem:[#allocation5 + $0xd80] sm:$0xff]
    %v675 = vld [vmem:[#allocation5 + $0xd88] sm:$0xff]
    %v676 = vld [vmem:[#allocation5 + $0xd90] sm:$0xff]
    %v677 = vld [vmem:[#allocation5 + $0xd98] sm:$0xff]
    %v678 = vld [vmem:[#allocation5 + $0xda0] sm:$0xff]
    %v679 = vld [vmem:[#allocation5 + $0xda8] sm:$0xff]
    %v680 = vld [vmem:[#allocation5 + $0xdb0] sm:$0xff]
    %v681 = vld [vmem:[#allocation5 + $0xdb8] sm:$0xff]
    %v682 = vld [vmem:[#allocation5 + $0xdc0] sm:$0xff]
    %v683 = vld [vmem:[#allocation5 + $0xdc8] sm:$0xff]
    %v684 = vld [vmem:[#allocation5 + $0xdd0] sm:$0xff]
    %v685 = vld [vmem:[#allocation5 + $0xdd8] sm:$0xff]
    %v686 = vld [vmem:[#allocation5 + $0xde0] sm:$0xff]
    %v687 = vld [vmem:[#allocation5 + $0xde8] sm:$0xff]
    %v688 = vld [vmem:[#allocation5 + $0xdf0] sm:$0xff]
    %v689 = vld [vmem:[#allocation5 + $0xdf8] sm:$0xff]
    %v690 = vld [vmem:[#allocation5 + $0xe00] sm:$0xff]
    %v691 = vld [vmem:[#allocation5 + $0xe08] sm:$0xff]
    %v692 = vld [vmem:[#allocation5 + $0xe10] sm:$0xff]
    %v693 = vld [vmem:[#allocation5 + $0xe18] sm:$0xff]
    %v694 = vld [vmem:[#allocation5 + $0xe20] sm:$0xff]
    %v695 = vld [vmem:[#allocation5 + $0xe28] sm:$0xff]
    %v696 = vld [vmem:[#allocation5 + $0xe30] sm:$0xff]
    %v697 = vld [vmem:[#allocation5 + $0xe38] sm:$0xff]
    %v698 = vld [vmem:[#allocation5 + $0xe40] sm:$0xff]
    %v699 = vld [vmem:[#allocation5 + $0xe48] sm:$0xff]
    %v700 = vld [vmem:[#allocation5 + $0xe50] sm:$0xff]
    %v701 = vld [vmem:[#allocation5 + $0xe58] sm:$0xff]
    %v702 = vld [vmem:[#allocation5 + $0xe60] sm:$0xff]
    %v703 = vld [vmem:[#allocation5 + $0xe68] sm:$0xff]
    %v704 = vld [vmem:[#allocation5 + $0xe70] sm:$0xff]
    %v705 = vld [vmem:[#allocation5 + $0xe78] sm:$0xff]
    %v706 = vld [vmem:[#allocation5 + $0xe80] sm:$0xff]
    %v707 = vld [vmem:[#allocation5 + $0xe88] sm:$0xff]
    %v708 = vld [vmem:[#allocation5 + $0xe90] sm:$0xff]
    %v709 = vld [vmem:[#allocation5 + $0xe98] sm:$0xff]
    %v710 = vld [vmem:[#allocation5 + $0xea0] sm:$0xff]
    %v711 = vld [vmem:[#allocation5 + $0xea8] sm:$0xff]
    %v712 = vld [vmem:[#allocation5 + $0xeb0] sm:$0xff]
    %v713 = vld [vmem:[#allocation5 + $0xeb8] sm:$0xff]
    %v714 = vld [vmem:[#allocation5 + $0xec0] sm:$0xff]
    %v715 = vld [vmem:[#allocation5 + $0xec8] sm:$0xff]
    %v716 = vld [vmem:[#allocation5 + $0xed0] sm:$0xff]
    %v717 = vld [vmem:[#allocation5 + $0xed8] sm:$0xff]
    %v718 = vld [vmem:[#allocation5 + $0xee0] sm:$0xff]
    %v719 = vld [vmem:[#allocation5 + $0xee8] sm:$0xff]
    %v720 = vld [vmem:[#allocation5 + $0xef0] sm:$0xff]
    %v721 = vld [vmem:[#allocation5 + $0xef8] sm:$0xff]
    %v722 = vld [vmem:[#allocation5 + $0xf00] sm:$0xff]
    %v723 = vld [vmem:[#allocation5 + $0xf08] sm:$0xff]
    %v724 = vld [vmem:[#allocation5 + $0xf10] sm:$0xff]
    %v725 = vld [vmem:[#allocation5 + $0xf18] sm:$0xff]
    %v726 = vld [vmem:[#allocation5 + $0xf20] sm:$0xff]
    %v727 = vld [vmem:[#allocation5 + $0xf28] sm:$0xff]
    %v728 = vld [vmem:[#allocation5 + $0xf30] sm:$0xff]
    %v729 = vld [vmem:[#allocation5 + $0xf38] sm:$0xff]
    %v730 = vld [vmem:[#allocation5 + $0xf40] sm:$0xff]
    %v731 = vld [vmem:[#allocation5 + $0xf48] sm:$0xff]
    %v732 = vld [vmem:[#allocation5 + $0xf50] sm:$0xff]
    %v733 = vld [vmem:[#allocation5 + $0xf58] sm:$0xff]
    %v734 = vld [vmem:[#allocation5 + $0xf60] sm:$0xff]
    %v735 = vld [vmem:[#allocation5 + $0xf68] sm:$0xff]
    %v736 = vld [vmem:[#allocation5 + $0xf70] sm:$0xff]
    %v737 = vld [vmem:[#allocation5 + $0xf78] sm:$0xff]
    %v738 = vld [vmem:[#allocation5 + $0xf80] sm:$0xff]
    %v739 = vld [vmem:[#allocation5 + $0xf88] sm:$0xff]
    %v740 = vld [vmem:[#allocation5 + $0xf90] sm:$0xff]
    %v741 = vld [vmem:[#allocation5 + $0xf98] sm:$0xff]
    %v742 = vld [vmem:[#allocation5 + $0xfa0] sm:$0xff]
    %v743 = vld [vmem:[#allocation5 + $0xfa8] sm:$0xff]
    %v744 = vld [vmem:[#allocation5 + $0xfb0] sm:$0xff]
    %v745 = vld [vmem:[#allocation5 + $0xfb8] sm:$0xff]
    %v746 = vld [vmem:[#allocation5 + $0xfc0] sm:$0xff]
    %v747 = vld [vmem:[#allocation5 + $0xfc8] sm:$0xff]
    %v748 = vld [vmem:[#allocation5 + $0xfd0] sm:$0xff]
    %v749 = vld [vmem:[#allocation5 + $0xfd8] sm:$0xff]
    %v750 = vld [vmem:[#allocation5 + $0xfe0] sm:$0xff]
    %v751 = vld [vmem:[#allocation5 + $0xfe8] sm:$0xff]
    %v752 = vld [vmem:[#allocation5 + $0xff0] sm:$0xff]
    %v753 = vld [vmem:[#allocation5 + $0xff8] sm:$0xff]
    %v754 = vld [vmem:[#allocation5 + $0x1000] sm:$0xff]
    %v755 = vld [vmem:[#allocation5 + $0x1008] sm:$0xff]
    %v756 = vld [vmem:[#allocation5 + $0x1010] sm:$0xff]
    %v757 = vld [vmem:[#allocation5 + $0x1018] sm:$0xff]
    %v758 = vld [vmem:[#allocation5 + $0x1020] sm:$0xff]
    %v759 = vld [vmem:[#allocation5 + $0x1028] sm:$0xff]
    %v760 = vld [vmem:[#allocation5 + $0x1030] sm:$0xff]
    %v761 = vld [vmem:[#allocation5 + $0x1038] sm:$0xff]
    %v762 = vld [vmem:[#allocation5 + $0x1040] sm:$0xff]
    %v763 = vld [vmem:[#allocation5 + $0x1048] sm:$0xff]
    %v764 = vld [vmem:[#allocation5 + $0x1050] sm:$0xff]
    %v765 = vld [vmem:[#allocation5 + $0x1058] sm:$0xff]
    %v766 = vld [vmem:[#allocation5 + $0x1060] sm:$0xff]
    %v767 = vld [vmem:[#allocation5 + $0x1068] sm:$0xff]
    %v768 = vld [vmem:[#allocation5 + $0x1070] sm:$0xff]
    %v769 = vld [vmem:[#allocation5 + $0x1078] sm:$0xff]
    %v770 = vld [vmem:[#allocation5 + $0x1080] sm:$0xff]
    %v771 = vld [vmem:[#allocation5 + $0x1088] sm:$0xff]
    %v772 = vld [vmem:[#allocation5 + $0x1090] sm:$0xff]
    %v773 = vld [vmem:[#allocation5 + $0x1098] sm:$0xff]
    %v774 = vld [vmem:[#allocation5 + $0x10a0] sm:$0xff]
    %v775 = vld [vmem:[#allocation5 + $0x10a8] sm:$0xff]
    %v776 = vld [vmem:[#allocation5 + $0x10b0] sm:$0xff]
    %v777 = vld [vmem:[#allocation5 + $0x10b8] sm:$0xff]
    %v778 = vld [vmem:[#allocation5 + $0x10c0] sm:$0xff]
    %v779 = vld [vmem:[#allocation5 + $0x10c8] sm:$0xff]
    %v780 = vld [vmem:[#allocation5 + $0x10d0] sm:$0xff]
    %v781 = vld [vmem:[#allocation5 + $0x10d8] sm:$0xff]
    %v782 = vld [vmem:[#allocation5 + $0x10e0] sm:$0xff]
    %v783 = vld [vmem:[#allocation5 + $0x10e8] sm:$0xff]
    %v784 = vld [vmem:[#allocation5 + $0x10f0] sm:$0xff]
    %v785 = vld [vmem:[#allocation5 + $0x10f8] sm:$0xff]
    %v786 = vld [vmem:[#allocation5 + $0x1100] sm:$0xff]
    %v787 = vld [vmem:[#allocation5 + $0x1108] sm:$0xff]
    %v788 = vld [vmem:[#allocation5 + $0x1110] sm:$0xff]
    %v789 = vld [vmem:[#allocation5 + $0x1118] sm:$0xff]
    %v790 = vld [vmem:[#allocation5 + $0x1120] sm:$0xff]
    %v791 = vld [vmem:[#allocation5 + $0x1128] sm:$0xff]
    %v792 = vld [vmem:[#allocation5 + $0x1130] sm:$0xff]
    %v793 = vld [vmem:[#allocation5 + $0x1138] sm:$0xff]
    %v794 = vld [vmem:[#allocation5 + $0x1140] sm:$0xff]
    %v795 = vld [vmem:[#allocation5 + $0x1148] sm:$0xff]
    %v796 = vld [vmem:[#allocation5 + $0x1150] sm:$0xff]
    %v797 = vld [vmem:[#allocation5 + $0x1158] sm:$0xff]
    %v798 = vld [vmem:[#allocation5 + $0x1160] sm:$0xff]
    %v799 = vld [vmem:[#allocation5 + $0x1168] sm:$0xff]
    %v800 = vld [vmem:[#allocation5 + $0x1170] sm:$0xff]
    %v801 = vld [vmem:[#allocation5 + $0x1178] sm:$0xff]
    %v802 = vld [vmem:[#allocation5 + $0x1180] sm:$0xff]
    %v803 = vld [vmem:[#allocation5 + $0x1188] sm:$0xff]
    %v804 = vld [vmem:[#allocation5 + $0x1190] sm:$0xff]
    %v805 = vld [vmem:[#allocation5 + $0x1198] sm:$0xff]
    %v806 = vld [vmem:[#allocation5 + $0x11a0] sm:$0xff]
    %v807 = vld [vmem:[#allocation5 + $0x11a8] sm:$0xff]
    %v808 = vld [vmem:[#allocation5 + $0x11b0] sm:$0xff]
    %v809 = vld [vmem:[#allocation5 + $0x11b8] sm:$0xff]
    %v810 = vld [vmem:[#allocation5 + $0x11c0] sm:$0xff]
    %v811 = vld [vmem:[#allocation5 + $0x11c8] sm:$0xff]
    %v812 = vld [vmem:[#allocation5 + $0x11d0] sm:$0xff]
    %v813 = vld [vmem:[#allocation5 + $0x11d8] sm:$0xff]
    %v814 = vld [vmem:[#allocation5 + $0x11e0] sm:$0xff]
    %v815 = vld [vmem:[#allocation5 + $0x11e8] sm:$0xff]
    %v816 = vld [vmem:[#allocation5 + $0x11f0] sm:$0xff]
    %v817 = vld [vmem:[#allocation5 + $0x11f8] sm:$0xff]
    %v818 = vld [vmem:[#allocation7] sm:$0x3]
    %v820 = vlaneseq
    %v821 = vshrl.u32 %v820, 7
    %v822 = vsub.s32 0, %v821
    %v823 = vrot.slane %v818, %v822
    %v824 = vlaneseq
    %v825 = vshrl.u32 %v824, 7
    %v826 = vsub.s32 1, %v825
    %v827 = vrot.slane %v818, %v826
    %v902 = vunpack.c.l.b16 %v170
    %v903 = vunpack.c.h.b16 %v170
    %v904 = vunpack.c.l.b16 %v171
    %v905 = vunpack.c.h.b16 %v171
    %v906 = vunpack.c.l.b16 %v172
    %v907 = vunpack.c.h.b16 %v172
    %v908 = vunpack.c.l.b16 %v173
    %v909 = vunpack.c.h.b16 %v173
    %v910 = vunpack.c.l.b16 %v174
    %v911 = vunpack.c.h.b16 %v174
    %v912 = vunpack.c.l.b16 %v175
    %v913 = vunpack.c.h.b16 %v175
    %v914 = vunpack.c.l.b16 %v176
    %v915 = vunpack.c.h.b16 %v176
    %v916 = vunpack.c.l.b16 %v177
    %v917 = vunpack.c.h.b16 %v177
    %v918 = vunpack.c.l.b16 %v178
    %v919 = vunpack.c.h.b16 %v178
    %v920 = vunpack.c.l.b16 %v179
    %v921 = vunpack.c.h.b16 %v179
    %v922 = vunpack.c.l.b16 %v180
    %v923 = vunpack.c.h.b16 %v180
    %v924 = vunpack.c.l.b16 %v181
    %v925 = vunpack.c.h.b16 %v181
    %v926 = vunpack.c.l.b16 %v182
    %v927 = vunpack.c.h.b16 %v182
    %v928 = vunpack.c.l.b16 %v183
    %v929 = vunpack.c.h.b16 %v183
    %v930 = vunpack.c.l.b16 %v184
    %v931 = vunpack.c.h.b16 %v184
    %v932 = vunpack.c.l.b16 %v185
    %v933 = vunpack.c.h.b16 %v185
    %v934 = vunpack.c.l.b16 %v186
    %v935 = vunpack.c.h.b16 %v186
    %v936 = vunpack.c.l.b16 %v187
    %v937 = vunpack.c.h.b16 %v187
    %v938 = vunpack.c.l.b16 %v188
    %v939 = vunpack.c.h.b16 %v188
    %v940 = vunpack.c.l.b16 %v189
    %v941 = vunpack.c.h.b16 %v189
    %v942 = vunpack.c.l.b16 %v190
    %v943 = vunpack.c.h.b16 %v190
    %v944 = vunpack.c.l.b16 %v191
    %v945 = vunpack.c.h.b16 %v191
    %v946 = vunpack.c.l.b16 %v192
    %v947 = vunpack.c.h.b16 %v192
    %v948 = vunpack.c.l.b16 %v193
    %v949 = vunpack.c.h.b16 %v193
    %v950 = vunpack.c.l.b16 %v194
    %v951 = vunpack.c.h.b16 %v194
    %v952 = vunpack.c.l.b16 %v195
    %v953 = vunpack.c.h.b16 %v195
    %v954 = vunpack.c.l.b16 %v196
    %v955 = vunpack.c.h.b16 %v196
    %v956 = vunpack.c.l.b16 %v197
    %v957 = vunpack.c.h.b16 %v197
    %v958 = vunpack.c.l.b16 %v198
    %v959 = vunpack.c.h.b16 %v198
    %v960 = vunpack.c.l.b16 %v199
    %v961 = vunpack.c.h.b16 %v199
    %v962 = vunpack.c.l.b16 %v200
    %v963 = vunpack.c.h.b16 %v200
    %v964 = vunpack.c.l.b16 %v201
    %v965 = vunpack.c.h.b16 %v201
    %v966 = vunpack.c.l.b16 %v202
    %v967 = vunpack.c.h.b16 %v202
    %v968 = vunpack.c.l.b16 %v203
    %v969 = vunpack.c.h.b16 %v203
    %v970 = vunpack.c.l.b16 %v204
    %v971 = vunpack.c.h.b16 %v204
    %v972 = vunpack.c.l.b16 %v205
    %v973 = vunpack.c.h.b16 %v205
    %v974 = vunpack.c.l.b16 %v206
    %v975 = vunpack.c.h.b16 %v206
    %v976 = vunpack.c.l.b16 %v207
    %v977 = vunpack.c.h.b16 %v207
    %v978 = vunpack.c.l.b16 %v208
    %v979 = vunpack.c.h.b16 %v208
    %v980 = vunpack.c.l.b16 %v209
    %v981 = vunpack.c.h.b16 %v209
    %v982 = vunpack.c.l.b16 %v210
    %v983 = vunpack.c.h.b16 %v210
    %v984 = vunpack.c.l.b16 %v211
    %v985 = vunpack.c.h.b16 %v211
    %v986 = vunpack.c.l.b16 %v212
    %v987 = vunpack.c.h.b16 %v212
    %v988 = vunpack.c.l.b16 %v213
    %v989 = vunpack.c.h.b16 %v213
    %v990 = vunpack.c.l.b16 %v214
    %v991 = vunpack.c.h.b16 %v214
    %v992 = vunpack.c.l.b16 %v215
    %v993 = vunpack.c.h.b16 %v215
    %v994 = vunpack.c.l.b16 %v216
    %v995 = vunpack.c.h.b16 %v216
    %v996 = vunpack.c.l.b16 %v217
    %v997 = vunpack.c.h.b16 %v217
    %v998 = vunpack.c.l.b16 %v218
    %v999 = vunpack.c.h.b16 %v218
    %v1000 = vunpack.c.l.b16 %v219
    %v1001 = vunpack.c.h.b16 %v219
    %v1002 = vunpack.c.l.b16 %v220
    %v1003 = vunpack.c.h.b16 %v220
    %v1004 = vunpack.c.l.b16 %v221
    %v1005 = vunpack.c.h.b16 %v221
    %v1006 = vunpack.c.l.b16 %v222
    %v1007 = vunpack.c.h.b16 %v222
    %v1008 = vunpack.c.l.b16 %v223
    %v1009 = vunpack.c.h.b16 %v223
    %v1010 = vunpack.c.l.b16 %v224
    %v1011 = vunpack.c.h.b16 %v224
    %v1012 = vunpack.c.l.b16 %v225
    %v1013 = vunpack.c.h.b16 %v225
    %v1014 = vunpack.c.l.b16 %v226
    %v1015 = vunpack.c.h.b16 %v226
    %v1016 = vunpack.c.l.b16 %v227
    %v1017 = vunpack.c.h.b16 %v227
    %v1018 = vunpack.c.l.b16 %v228
    %v1019 = vunpack.c.h.b16 %v228
    %v1020 = vunpack.c.l.b16 %v229
    %v1021 = vunpack.c.h.b16 %v229
    %v1022 = vunpack.c.l.b16 %v230
    %v1023 = vunpack.c.h.b16 %v230
    %v1024 = vunpack.c.l.b16 %v231
    %v1025 = vunpack.c.h.b16 %v231
    %v1026 = vunpack.c.l.b16 %v232
    %v1027 = vunpack.c.h.b16 %v232
    %v1028 = vunpack.c.l.b16 %v233
    %v1029 = vunpack.c.h.b16 %v233
    %v1030 = vunpack.c.l.b16 %v234
    %v1031 = vunpack.c.h.b16 %v234
    %v1032 = vunpack.c.l.b16 %v235
    %v1033 = vunpack.c.h.b16 %v235
    %v1034 = vunpack.c.l.b16 %v236
    %v1035 = vunpack.c.h.b16 %v236
    %v1036 = vunpack.c.l.b16 %v237
    %v1037 = vunpack.c.h.b16 %v237
    %v1038 = vunpack.c.l.b16 %v238
    %v1039 = vunpack.c.h.b16 %v238
    %v1040 = vunpack.c.l.b16 %v239
    %v1041 = vunpack.c.h.b16 %v239
    %v1042 = vunpack.c.l.b16 %v240
    %v1043 = vunpack.c.h.b16 %v240
    %v1044 = vunpack.c.l.b16 %v241
    %v1045 = vunpack.c.h.b16 %v241
    %v1046 = vpack.c.b16 %v938, %v902
    %v1047 = vpack.c.b16 %v939, %v903
    %v1048 = vpack.c.b16 %v940, %v904
    %v1049 = vpack.c.b16 %v941, %v905
    %v1050 = vpack.c.b16 %v942, %v906
    %v1051 = vpack.c.b16 %v943, %v907
    %v1052 = vpack.c.b16 %v944, %v908
    %v1053 = vpack.c.b16 %v945, %v909
    %v1054 = vpack.c.b16 %v946, %v910
    %v1055 = vpack.c.b16 %v947, %v911
    %v1056 = vpack.c.b16 %v948, %v912
    %v1057 = vpack.c.b16 %v949, %v913
    %v1058 = vpack.c.b16 %v950, %v914
    %v1059 = vpack.c.b16 %v951, %v915
    %v1060 = vpack.c.b16 %v952, %v916
    %v1061 = vpack.c.b16 %v953, %v917
    %v1062 = vpack.c.b16 %v954, %v918
    %v1063 = vpack.c.b16 %v955, %v919
    %v1064 = vpack.c.b16 %v956, %v920
    %v1065 = vpack.c.b16 %v957, %v921
    %v1066 = vpack.c.b16 %v958, %v922
    %v1067 = vpack.c.b16 %v959, %v923
    %v1068 = vpack.c.b16 %v960, %v924
    %v1069 = vpack.c.b16 %v961, %v925
    %v1070 = vpack.c.b16 %v962, %v926
    %v1071 = vpack.c.b16 %v963, %v927
    %v1072 = vpack.c.b16 %v964, %v928
    %v1073 = vpack.c.b16 %v965, %v929
    %v1074 = vpack.c.b16 %v966, %v930
    %v1075 = vpack.c.b16 %v967, %v931
    %v1076 = vpack.c.b16 %v968, %v932
    %v1077 = vpack.c.b16 %v969, %v933
    %v1078 = vpack.c.b16 %v970, %v934
    %v1079 = vpack.c.b16 %v971, %v935
    %v1080 = vpack.c.b16 %v972, %v936
    %v1081 = vpack.c.b16 %v973, %v937
    %v1082 = vpack.c.b16 %v1010, %v974
    %v1083 = vpack.c.b16 %v1011, %v975
    %v1084 = vpack.c.b16 %v1012, %v976
    %v1085 = vpack.c.b16 %v1013, %v977
    %v1086 = vpack.c.b16 %v1014, %v978
    %v1087 = vpack.c.b16 %v1015, %v979
    %v1088 = vpack.c.b16 %v1016, %v980
    %v1089 = vpack.c.b16 %v1017, %v981
    %v1090 = vpack.c.b16 %v1018, %v982
    %v1091 = vpack.c.b16 %v1019, %v983
    %v1092 = vpack.c.b16 %v1020, %v984
    %v1093 = vpack.c.b16 %v1021, %v985
    %v1094 = vpack.c.b16 %v1022, %v986
    %v1095 = vpack.c.b16 %v1023, %v987
    %v1096 = vpack.c.b16 %v1024, %v988
    %v1097 = vpack.c.b16 %v1025, %v989
    %v1098 = vpack.c.b16 %v1026, %v990
    %v1099 = vpack.c.b16 %v1027, %v991
    %v1100 = vpack.c.b16 %v1028, %v992
    %v1101 = vpack.c.b16 %v1029, %v993
    %v1102 = vpack.c.b16 %v1030, %v994
    %v1103 = vpack.c.b16 %v1031, %v995
    %v1104 = vpack.c.b16 %v1032, %v996
    %v1105 = vpack.c.b16 %v1033, %v997
    %v1106 = vpack.c.b16 %v1034, %v998
    %v1107 = vpack.c.b16 %v1035, %v999
    %v1108 = vpack.c.b16 %v1036, %v1000
    %v1109 = vpack.c.b16 %v1037, %v1001
    %v1110 = vpack.c.b16 %v1038, %v1002
    %v1111 = vpack.c.b16 %v1039, %v1003
    %v1112 = vpack.c.b16 %v1040, %v1004
    %v1113 = vpack.c.b16 %v1041, %v1005
    %v1114 = vpack.c.b16 %v1042, %v1006
    %v1115 = vpack.c.b16 %v1043, %v1007
    %v1116 = vpack.c.b16 %v1044, %v1008
    %v1117 = vpack.c.b16 %v1045, %v1009
    %v1766 = vunpack.c.l.b16 %v242
    %v1767 = vunpack.c.h.b16 %v242
    %v1768 = vunpack.c.l.b16 %v243
    %v1769 = vunpack.c.h.b16 %v243
    %v1770 = vunpack.c.l.b16 %v244
    %v1771 = vunpack.c.h.b16 %v244
    %v1772 = vunpack.c.l.b16 %v245
    %v1773 = vunpack.c.h.b16 %v245
    %v1774 = vunpack.c.l.b16 %v246
    %v1775 = vunpack.c.h.b16 %v246
    %v1776 = vunpack.c.l.b16 %v247
    %v1777 = vunpack.c.h.b16 %v247
    %v1778 = vunpack.c.l.b16 %v248
    %v1779 = vunpack.c.h.b16 %v248
    %v1780 = vunpack.c.l.b16 %v249
    %v1781 = vunpack.c.h.b16 %v249
    %v1782 = vunpack.c.l.b16 %v250
    %v1783 = vunpack.c.h.b16 %v250
    %v1784 = vunpack.c.l.b16 %v251
    %v1785 = vunpack.c.h.b16 %v251
    %v1786 = vunpack.c.l.b16 %v252
    %v1787 = vunpack.c.h.b16 %v252
    %v1788 = vunpack.c.l.b16 %v253
    %v1789 = vunpack.c.h.b16 %v253
    %v1790 = vunpack.c.l.b16 %v254
    %v1791 = vunpack.c.h.b16 %v254
    %v1792 = vunpack.c.l.b16 %v255
    %v1793 = vunpack.c.h.b16 %v255
    %v1794 = vunpack.c.l.b16 %v256
    %v1795 = vunpack.c.h.b16 %v256
    %v1796 = vunpack.c.l.b16 %v257
    %v1797 = vunpack.c.h.b16 %v257
    %v1798 = vunpack.c.l.b16 %v258
    %v1799 = vunpack.c.h.b16 %v258
    %v1800 = vunpack.c.l.b16 %v259
    %v1801 = vunpack.c.h.b16 %v259
    %v1802 = vunpack.c.l.b16 %v260
    %v1803 = vunpack.c.h.b16 %v260
    %v1804 = vunpack.c.l.b16 %v261
    %v1805 = vunpack.c.h.b16 %v261
    %v1806 = vunpack.c.l.b16 %v262
    %v1807 = vunpack.c.h.b16 %v262
    %v1808 = vunpack.c.l.b16 %v263
    %v1809 = vunpack.c.h.b16 %v263
    %v1810 = vunpack.c.l.b16 %v264
    %v1811 = vunpack.c.h.b16 %v264
    %v1812 = vunpack.c.l.b16 %v265
    %v1813 = vunpack.c.h.b16 %v265
    %v1814 = vunpack.c.l.b16 %v266
    %v1815 = vunpack.c.h.b16 %v266
    %v1816 = vunpack.c.l.b16 %v267
    %v1817 = vunpack.c.h.b16 %v267
    %v1818 = vunpack.c.l.b16 %v268
    %v1819 = vunpack.c.h.b16 %v268
    %v1820 = vunpack.c.l.b16 %v269
    %v1821 = vunpack.c.h.b16 %v269
    %v1822 = vunpack.c.l.b16 %v270
    %v1823 = vunpack.c.h.b16 %v270
    %v1824 = vunpack.c.l.b16 %v271
    %v1825 = vunpack.c.h.b16 %v271
    %v1826 = vunpack.c.l.b16 %v272
    %v1827 = vunpack.c.h.b16 %v272
    %v1828 = vunpack.c.l.b16 %v273
    %v1829 = vunpack.c.h.b16 %v273
    %v1830 = vunpack.c.l.b16 %v274
    %v1831 = vunpack.c.h.b16 %v274
    %v1832 = vunpack.c.l.b16 %v275
    %v1833 = vunpack.c.h.b16 %v275
    %v1834 = vunpack.c.l.b16 %v276
    %v1835 = vunpack.c.h.b16 %v276
    %v1836 = vunpack.c.l.b16 %v277
    %v1837 = vunpack.c.h.b16 %v277
    %v1838 = vunpack.c.l.b16 %v278
    %v1839 = vunpack.c.h.b16 %v278
    %v1840 = vunpack.c.l.b16 %v279
    %v1841 = vunpack.c.h.b16 %v279
    %v1842 = vunpack.c.l.b16 %v280
    %v1843 = vunpack.c.h.b16 %v280
    %v1844 = vunpack.c.l.b16 %v281
    %v1845 = vunpack.c.h.b16 %v281
    %v1846 = vunpack.c.l.b16 %v282
    %v1847 = vunpack.c.h.b16 %v282
    %v1848 = vunpack.c.l.b16 %v283
    %v1849 = vunpack.c.h.b16 %v283
    %v1850 = vunpack.c.l.b16 %v284
    %v1851 = vunpack.c.h.b16 %v284
    %v1852 = vunpack.c.l.b16 %v285
    %v1853 = vunpack.c.h.b16 %v285
    %v1854 = vunpack.c.l.b16 %v286
    %v1855 = vunpack.c.h.b16 %v286
    %v1856 = vunpack.c.l.b16 %v287
    %v1857 = vunpack.c.h.b16 %v287
    %v1858 = vunpack.c.l.b16 %v288
    %v1859 = vunpack.c.h.b16 %v288
    %v1860 = vunpack.c.l.b16 %v289
    %v1861 = vunpack.c.h.b16 %v289
    %v1862 = vunpack.c.l.b16 %v290
    %v1863 = vunpack.c.h.b16 %v290
    %v1864 = vunpack.c.l.b16 %v291
    %v1865 = vunpack.c.h.b16 %v291
    %v1866 = vunpack.c.l.b16 %v292
    %v1867 = vunpack.c.h.b16 %v292
    %v1868 = vunpack.c.l.b16 %v293
    %v1869 = vunpack.c.h.b16 %v293
    %v1870 = vunpack.c.l.b16 %v294
    %v1871 = vunpack.c.h.b16 %v294
    %v1872 = vunpack.c.l.b16 %v295
    %v1873 = vunpack.c.h.b16 %v295
    %v1874 = vunpack.c.l.b16 %v296
    %v1875 = vunpack.c.h.b16 %v296
    %v1876 = vunpack.c.l.b16 %v297
    %v1877 = vunpack.c.h.b16 %v297
    %v1878 = vunpack.c.l.b16 %v298
    %v1879 = vunpack.c.h.b16 %v298
    %v1880 = vunpack.c.l.b16 %v299
    %v1881 = vunpack.c.h.b16 %v299
    %v1882 = vunpack.c.l.b16 %v300
    %v1883 = vunpack.c.h.b16 %v300
    %v1884 = vunpack.c.l.b16 %v301
    %v1885 = vunpack.c.h.b16 %v301
    %v1886 = vunpack.c.l.b16 %v302
    %v1887 = vunpack.c.h.b16 %v302
    %v1888 = vunpack.c.l.b16 %v303
    %v1889 = vunpack.c.h.b16 %v303
    %v1890 = vunpack.c.l.b16 %v304
    %v1891 = vunpack.c.h.b16 %v304
    %v1892 = vunpack.c.l.b16 %v305
    %v1893 = vunpack.c.h.b16 %v305
    %v1894 = vunpack.c.l.b16 %v306
    %v1895 = vunpack.c.h.b16 %v306
    %v1896 = vunpack.c.l.b16 %v307
    %v1897 = vunpack.c.h.b16 %v307
    %v1898 = vunpack.c.l.b16 %v308
    %v1899 = vunpack.c.h.b16 %v308
    %v1900 = vunpack.c.l.b16 %v309
    %v1901 = vunpack.c.h.b16 %v309
    %v1902 = vunpack.c.l.b16 %v310
    %v1903 = vunpack.c.h.b16 %v310
    %v1904 = vunpack.c.l.b16 %v311
    %v1905 = vunpack.c.h.b16 %v311
    %v1906 = vunpack.c.l.b16 %v312
    %v1907 = vunpack.c.h.b16 %v312
    %v1908 = vunpack.c.l.b16 %v313
    %v1909 = vunpack.c.h.b16 %v313
    %v1910 = vunpack.c.l.b16 %v314
    %v1911 = vunpack.c.h.b16 %v314
    %v1912 = vunpack.c.l.b16 %v315
    %v1913 = vunpack.c.h.b16 %v315
    %v1914 = vunpack.c.l.b16 %v316
    %v1915 = vunpack.c.h.b16 %v316
    %v1916 = vunpack.c.l.b16 %v317
    %v1917 = vunpack.c.h.b16 %v317
    %v1918 = vunpack.c.l.b16 %v318
    %v1919 = vunpack.c.h.b16 %v318
    %v1920 = vunpack.c.l.b16 %v319
    %v1921 = vunpack.c.h.b16 %v319
    %v1922 = vunpack.c.l.b16 %v320
    %v1923 = vunpack.c.h.b16 %v320
    %v1924 = vunpack.c.l.b16 %v321
    %v1925 = vunpack.c.h.b16 %v321
    %v1926 = vunpack.c.l.b16 %v322
    %v1927 = vunpack.c.h.b16 %v322
    %v1928 = vunpack.c.l.b16 %v323
    %v1929 = vunpack.c.h.b16 %v323
    %v1930 = vunpack.c.l.b16 %v324
    %v1931 = vunpack.c.h.b16 %v324
    %v1932 = vunpack.c.l.b16 %v325
    %v1933 = vunpack.c.h.b16 %v325
    %v1934 = vunpack.c.l.b16 %v326
    %v1935 = vunpack.c.h.b16 %v326
    %v1936 = vunpack.c.l.b16 %v327
    %v1937 = vunpack.c.h.b16 %v327
    %v1938 = vunpack.c.l.b16 %v328
    %v1939 = vunpack.c.h.b16 %v328
    %v1940 = vunpack.c.l.b16 %v329
    %v1941 = vunpack.c.h.b16 %v329
    %v1942 = vunpack.c.l.b16 %v330
    %v1943 = vunpack.c.h.b16 %v330
    %v1944 = vunpack.c.l.b16 %v331
    %v1945 = vunpack.c.h.b16 %v331
    %v1946 = vunpack.c.l.b16 %v332
    %v1947 = vunpack.c.h.b16 %v332
    %v1948 = vunpack.c.l.b16 %v333
    %v1949 = vunpack.c.h.b16 %v333
    %v1950 = vunpack.c.l.b16 %v334
    %v1951 = vunpack.c.h.b16 %v334
    %v1952 = vunpack.c.l.b16 %v335
    %v1953 = vunpack.c.h.b16 %v335
    %v1954 = vunpack.c.l.b16 %v336
    %v1955 = vunpack.c.h.b16 %v336
    %v1956 = vunpack.c.l.b16 %v337
    %v1957 = vunpack.c.h.b16 %v337
    %v1958 = vunpack.c.l.b16 %v338
    %v1959 = vunpack.c.h.b16 %v338
    %v1960 = vunpack.c.l.b16 %v339
    %v1961 = vunpack.c.h.b16 %v339
    %v1962 = vunpack.c.l.b16 %v340
    %v1963 = vunpack.c.h.b16 %v340
    %v1964 = vunpack.c.l.b16 %v341
    %v1965 = vunpack.c.h.b16 %v341
    %v1966 = vunpack.c.l.b16 %v342
    %v1967 = vunpack.c.h.b16 %v342
    %v1968 = vunpack.c.l.b16 %v343
    %v1969 = vunpack.c.h.b16 %v343
    %v1970 = vunpack.c.l.b16 %v344
    %v1971 = vunpack.c.h.b16 %v344
    %v1972 = vunpack.c.l.b16 %v345
    %v1973 = vunpack.c.h.b16 %v345
    %v1974 = vunpack.c.l.b16 %v346
    %v1975 = vunpack.c.h.b16 %v346
    %v1976 = vunpack.c.l.b16 %v347
    %v1977 = vunpack.c.h.b16 %v347
    %v1978 = vunpack.c.l.b16 %v348
    %v1979 = vunpack.c.h.b16 %v348
    %v1980 = vunpack.c.l.b16 %v349
    %v1981 = vunpack.c.h.b16 %v349
    %v1982 = vunpack.c.l.b16 %v350
    %v1983 = vunpack.c.h.b16 %v350
    %v1984 = vunpack.c.l.b16 %v351
    %v1985 = vunpack.c.h.b16 %v351
    %v1986 = vunpack.c.l.b16 %v352
    %v1987 = vunpack.c.h.b16 %v352
    %v1988 = vunpack.c.l.b16 %v353
    %v1989 = vunpack.c.h.b16 %v353
    %v1990 = vunpack.c.l.b16 %v354
    %v1991 = vunpack.c.h.b16 %v354
    %v1992 = vunpack.c.l.b16 %v355
    %v1993 = vunpack.c.h.b16 %v355
    %v1994 = vunpack.c.l.b16 %v356
    %v1995 = vunpack.c.h.b16 %v356
    %v1996 = vunpack.c.l.b16 %v357
    %v1997 = vunpack.c.h.b16 %v357
    %v1998 = vunpack.c.l.b16 %v358
    %v1999 = vunpack.c.h.b16 %v358
    %v2000 = vunpack.c.l.b16 %v359
    %v2001 = vunpack.c.h.b16 %v359
    %v2002 = vunpack.c.l.b16 %v360
    %v2003 = vunpack.c.h.b16 %v360
    %v2004 = vunpack.c.l.b16 %v361
    %v2005 = vunpack.c.h.b16 %v361
    %v2006 = vunpack.c.l.b16 %v362
    %v2007 = vunpack.c.h.b16 %v362
    %v2008 = vunpack.c.l.b16 %v363
    %v2009 = vunpack.c.h.b16 %v363
    %v2010 = vunpack.c.l.b16 %v364
    %v2011 = vunpack.c.h.b16 %v364
    %v2012 = vunpack.c.l.b16 %v365
    %v2013 = vunpack.c.h.b16 %v365
    %v2014 = vunpack.c.l.b16 %v366
    %v2015 = vunpack.c.h.b16 %v366
    %v2016 = vunpack.c.l.b16 %v367
    %v2017 = vunpack.c.h.b16 %v367
    %v2018 = vunpack.c.l.b16 %v368
    %v2019 = vunpack.c.h.b16 %v368
    %v2020 = vunpack.c.l.b16 %v369
    %v2021 = vunpack.c.h.b16 %v369
    %v2022 = vunpack.c.l.b16 %v370
    %v2023 = vunpack.c.h.b16 %v370
    %v2024 = vunpack.c.l.b16 %v371
    %v2025 = vunpack.c.h.b16 %v371
    %v2026 = vunpack.c.l.b16 %v372
    %v2027 = vunpack.c.h.b16 %v372
    %v2028 = vunpack.c.l.b16 %v373
    %v2029 = vunpack.c.h.b16 %v373
    %v2030 = vunpack.c.l.b16 %v374
    %v2031 = vunpack.c.h.b16 %v374
    %v2032 = vunpack.c.l.b16 %v375
    %v2033 = vunpack.c.h.b16 %v375
    %v2034 = vunpack.c.l.b16 %v376
    %v2035 = vunpack.c.h.b16 %v376
    %v2036 = vunpack.c.l.b16 %v377
    %v2037 = vunpack.c.h.b16 %v377
    %v2038 = vunpack.c.l.b16 %v378
    %v2039 = vunpack.c.h.b16 %v378
    %v2040 = vunpack.c.l.b16 %v379
    %v2041 = vunpack.c.h.b16 %v379
    %v2042 = vunpack.c.l.b16 %v380
    %v2043 = vunpack.c.h.b16 %v380
    %v2044 = vunpack.c.l.b16 %v381
    %v2045 = vunpack.c.h.b16 %v381
    %v2046 = vunpack.c.l.b16 %v382
    %v2047 = vunpack.c.h.b16 %v382
    %v2048 = vunpack.c.l.b16 %v383
    %v2049 = vunpack.c.h.b16 %v383
    %v2050 = vunpack.c.l.b16 %v384
    %v2051 = vunpack.c.h.b16 %v384
    %v2052 = vunpack.c.l.b16 %v385
    %v2053 = vunpack.c.h.b16 %v385
    %v2054 = vunpack.c.l.b16 %v386
    %v2055 = vunpack.c.h.b16 %v386
    %v2056 = vunpack.c.l.b16 %v387
    %v2057 = vunpack.c.h.b16 %v387
    %v2058 = vunpack.c.l.b16 %v388
    %v2059 = vunpack.c.h.b16 %v388
    %v2060 = vunpack.c.l.b16 %v389
    %v2061 = vunpack.c.h.b16 %v389
    %v2062 = vunpack.c.l.b16 %v390
    %v2063 = vunpack.c.h.b16 %v390
    %v2064 = vunpack.c.l.b16 %v391
    %v2065 = vunpack.c.h.b16 %v391
    %v2066 = vunpack.c.l.b16 %v392
    %v2067 = vunpack.c.h.b16 %v392
    %v2068 = vunpack.c.l.b16 %v393
    %v2069 = vunpack.c.h.b16 %v393
    %v2070 = vunpack.c.l.b16 %v394
    %v2071 = vunpack.c.h.b16 %v394
    %v2072 = vunpack.c.l.b16 %v395
    %v2073 = vunpack.c.h.b16 %v395
    %v2074 = vunpack.c.l.b16 %v396
    %v2075 = vunpack.c.h.b16 %v396
    %v2076 = vunpack.c.l.b16 %v397
    %v2077 = vunpack.c.h.b16 %v397
    %v2078 = vunpack.c.l.b16 %v398
    %v2079 = vunpack.c.h.b16 %v398
    %v2080 = vunpack.c.l.b16 %v399
    %v2081 = vunpack.c.h.b16 %v399
    %v2082 = vunpack.c.l.b16 %v400
    %v2083 = vunpack.c.h.b16 %v400
    %v2084 = vunpack.c.l.b16 %v401
    %v2085 = vunpack.c.h.b16 %v401
    %v2086 = vunpack.c.l.b16 %v402
    %v2087 = vunpack.c.h.b16 %v402
    %v2088 = vunpack.c.l.b16 %v403
    %v2089 = vunpack.c.h.b16 %v403
    %v2090 = vunpack.c.l.b16 %v404
    %v2091 = vunpack.c.h.b16 %v404
    %v2092 = vunpack.c.l.b16 %v405
    %v2093 = vunpack.c.h.b16 %v405
    %v2094 = vunpack.c.l.b16 %v406
    %v2095 = vunpack.c.h.b16 %v406
    %v2096 = vunpack.c.l.b16 %v407
    %v2097 = vunpack.c.h.b16 %v407
    %v2098 = vunpack.c.l.b16 %v408
    %v2099 = vunpack.c.h.b16 %v408
    %v2100 = vunpack.c.l.b16 %v409
    %v2101 = vunpack.c.h.b16 %v409
    %v2102 = vunpack.c.l.b16 %v410
    %v2103 = vunpack.c.h.b16 %v410
    %v2104 = vunpack.c.l.b16 %v411
    %v2105 = vunpack.c.h.b16 %v411
    %v2106 = vunpack.c.l.b16 %v412
    %v2107 = vunpack.c.h.b16 %v412
    %v2108 = vunpack.c.l.b16 %v413
    %v2109 = vunpack.c.h.b16 %v413
    %v2110 = vunpack.c.l.b16 %v414
    %v2111 = vunpack.c.h.b16 %v414
    %v2112 = vunpack.c.l.b16 %v415
    %v2113 = vunpack.c.h.b16 %v415
    %v2114 = vunpack.c.l.b16 %v416
    %v2115 = vunpack.c.h.b16 %v416
    %v2116 = vunpack.c.l.b16 %v417
    %v2117 = vunpack.c.h.b16 %v417
    %v2118 = vunpack.c.l.b16 %v418
    %v2119 = vunpack.c.h.b16 %v418
    %v2120 = vunpack.c.l.b16 %v419
    %v2121 = vunpack.c.h.b16 %v419
    %v2122 = vunpack.c.l.b16 %v420
    %v2123 = vunpack.c.h.b16 %v420
    %v2124 = vunpack.c.l.b16 %v421
    %v2125 = vunpack.c.h.b16 %v421
    %v2126 = vunpack.c.l.b16 %v422
    %v2127 = vunpack.c.h.b16 %v422
    %v2128 = vunpack.c.l.b16 %v423
    %v2129 = vunpack.c.h.b16 %v423
    %v2130 = vunpack.c.l.b16 %v424
    %v2131 = vunpack.c.h.b16 %v424
    %v2132 = vunpack.c.l.b16 %v425
    %v2133 = vunpack.c.h.b16 %v425
    %v2134 = vunpack.c.l.b16 %v426
    %v2135 = vunpack.c.h.b16 %v426
    %v2136 = vunpack.c.l.b16 %v427
    %v2137 = vunpack.c.h.b16 %v427
    %v2138 = vunpack.c.l.b16 %v428
    %v2139 = vunpack.c.h.b16 %v428
    %v2140 = vunpack.c.l.b16 %v429
    %v2141 = vunpack.c.h.b16 %v429
    %v2142 = vunpack.c.l.b16 %v430
    %v2143 = vunpack.c.h.b16 %v430
    %v2144 = vunpack.c.l.b16 %v431
    %v2145 = vunpack.c.h.b16 %v431
    %v2146 = vunpack.c.l.b16 %v432
    %v2147 = vunpack.c.h.b16 %v432
    %v2148 = vunpack.c.l.b16 %v433
    %v2149 = vunpack.c.h.b16 %v433
    %v2150 = vunpack.c.l.b16 %v434
    %v2151 = vunpack.c.h.b16 %v434
    %v2152 = vunpack.c.l.b16 %v435
    %v2153 = vunpack.c.h.b16 %v435
    %v2154 = vunpack.c.l.b16 %v436
    %v2155 = vunpack.c.h.b16 %v436
    %v2156 = vunpack.c.l.b16 %v437
    %v2157 = vunpack.c.h.b16 %v437
    %v2158 = vunpack.c.l.b16 %v438
    %v2159 = vunpack.c.h.b16 %v438
    %v2160 = vunpack.c.l.b16 %v439
    %v2161 = vunpack.c.h.b16 %v439
    %v2162 = vunpack.c.l.b16 %v440
    %v2163 = vunpack.c.h.b16 %v440
    %v2164 = vunpack.c.l.b16 %v441
    %v2165 = vunpack.c.h.b16 %v441
    %v2166 = vunpack.c.l.b16 %v442
    %v2167 = vunpack.c.h.b16 %v442
    %v2168 = vunpack.c.l.b16 %v443
    %v2169 = vunpack.c.h.b16 %v443
    %v2170 = vunpack.c.l.b16 %v444
    %v2171 = vunpack.c.h.b16 %v444
    %v2172 = vunpack.c.l.b16 %v445
    %v2173 = vunpack.c.h.b16 %v445
    %v2174 = vunpack.c.l.b16 %v446
    %v2175 = vunpack.c.h.b16 %v446
    %v2176 = vunpack.c.l.b16 %v447
    %v2177 = vunpack.c.h.b16 %v447
    %v2178 = vunpack.c.l.b16 %v448
    %v2179 = vunpack.c.h.b16 %v448
    %v2180 = vunpack.c.l.b16 %v449
    %v2181 = vunpack.c.h.b16 %v449
    %v2182 = vunpack.c.l.b16 %v450
    %v2183 = vunpack.c.h.b16 %v450
    %v2184 = vunpack.c.l.b16 %v451
    %v2185 = vunpack.c.h.b16 %v451
    %v2186 = vunpack.c.l.b16 %v452
    %v2187 = vunpack.c.h.b16 %v452
    %v2188 = vunpack.c.l.b16 %v453
    %v2189 = vunpack.c.h.b16 %v453
    %v2190 = vunpack.c.l.b16 %v454
    %v2191 = vunpack.c.h.b16 %v454
    %v2192 = vunpack.c.l.b16 %v455
    %v2193 = vunpack.c.h.b16 %v455
    %v2194 = vunpack.c.l.b16 %v456
    %v2195 = vunpack.c.h.b16 %v456
    %v2196 = vunpack.c.l.b16 %v457
    %v2197 = vunpack.c.h.b16 %v457
    %v2198 = vunpack.c.l.b16 %v458
    %v2199 = vunpack.c.h.b16 %v458
    %v2200 = vunpack.c.l.b16 %v459
    %v2201 = vunpack.c.h.b16 %v459
    %v2202 = vunpack.c.l.b16 %v460
    %v2203 = vunpack.c.h.b16 %v460
    %v2204 = vunpack.c.l.b16 %v461
    %v2205 = vunpack.c.h.b16 %v461
    %v2206 = vunpack.c.l.b16 %v462
    %v2207 = vunpack.c.h.b16 %v462
    %v2208 = vunpack.c.l.b16 %v463
    %v2209 = vunpack.c.h.b16 %v463
    %v2210 = vunpack.c.l.b16 %v464
    %v2211 = vunpack.c.h.b16 %v464
    %v2212 = vunpack.c.l.b16 %v465
    %v2213 = vunpack.c.h.b16 %v465
    %v2214 = vunpack.c.l.b16 %v466
    %v2215 = vunpack.c.h.b16 %v466
    %v2216 = vunpack.c.l.b16 %v467
    %v2217 = vunpack.c.h.b16 %v467
    %v2218 = vunpack.c.l.b16 %v468
    %v2219 = vunpack.c.h.b16 %v468
    %v2220 = vunpack.c.l.b16 %v469
    %v2221 = vunpack.c.h.b16 %v469
    %v2222 = vunpack.c.l.b16 %v470
    %v2223 = vunpack.c.h.b16 %v470
    %v2224 = vunpack.c.l.b16 %v471
    %v2225 = vunpack.c.h.b16 %v471
    %v2226 = vunpack.c.l.b16 %v472
    %v2227 = vunpack.c.h.b16 %v472
    %v2228 = vunpack.c.l.b16 %v473
    %v2229 = vunpack.c.h.b16 %v473
    %v2230 = vunpack.c.l.b16 %v474
    %v2231 = vunpack.c.h.b16 %v474
    %v2232 = vunpack.c.l.b16 %v475
    %v2233 = vunpack.c.h.b16 %v475
    %v2234 = vunpack.c.l.b16 %v476
    %v2235 = vunpack.c.h.b16 %v476
    %v2236 = vunpack.c.l.b16 %v477
    %v2237 = vunpack.c.h.b16 %v477
    %v2238 = vunpack.c.l.b16 %v478
    %v2239 = vunpack.c.h.b16 %v478
    %v2240 = vunpack.c.l.b16 %v479
    %v2241 = vunpack.c.h.b16 %v479
    %v2242 = vunpack.c.l.b16 %v480
    %v2243 = vunpack.c.h.b16 %v480
    %v2244 = vunpack.c.l.b16 %v481
    %v2245 = vunpack.c.h.b16 %v481
    %v2246 = vunpack.c.l.b16 %v482
    %v2247 = vunpack.c.h.b16 %v482
    %v2248 = vunpack.c.l.b16 %v483
    %v2249 = vunpack.c.h.b16 %v483
    %v2250 = vunpack.c.l.b16 %v484
    %v2251 = vunpack.c.h.b16 %v484
    %v2252 = vunpack.c.l.b16 %v485
    %v2253 = vunpack.c.h.b16 %v485
    %v2254 = vunpack.c.l.b16 %v486
    %v2255 = vunpack.c.h.b16 %v486
    %v2256 = vunpack.c.l.b16 %v487
    %v2257 = vunpack.c.h.b16 %v487
    %v2258 = vunpack.c.l.b16 %v488
    %v2259 = vunpack.c.h.b16 %v488
    %v2260 = vunpack.c.l.b16 %v489
    %v2261 = vunpack.c.h.b16 %v489
    %v2262 = vunpack.c.l.b16 %v490
    %v2263 = vunpack.c.h.b16 %v490
    %v2264 = vunpack.c.l.b16 %v491
    %v2265 = vunpack.c.h.b16 %v491
    %v2266 = vunpack.c.l.b16 %v492
    %v2267 = vunpack.c.h.b16 %v492
    %v2268 = vunpack.c.l.b16 %v493
    %v2269 = vunpack.c.h.b16 %v493
    %v2270 = vunpack.c.l.b16 %v494
    %v2271 = vunpack.c.h.b16 %v494
    %v2272 = vunpack.c.l.b16 %v495
    %v2273 = vunpack.c.h.b16 %v495
    %v2274 = vunpack.c.l.b16 %v496
    %v2275 = vunpack.c.h.b16 %v496
    %v2276 = vunpack.c.l.b16 %v497
    %v2277 = vunpack.c.h.b16 %v497
    %v2278 = vunpack.c.l.b16 %v498
    %v2279 = vunpack.c.h.b16 %v498
    %v2280 = vunpack.c.l.b16 %v499
    %v2281 = vunpack.c.h.b16 %v499
    %v2282 = vunpack.c.l.b16 %v500
    %v2283 = vunpack.c.h.b16 %v500
    %v2284 = vunpack.c.l.b16 %v501
    %v2285 = vunpack.c.h.b16 %v501
    %v2286 = vunpack.c.l.b16 %v502
    %v2287 = vunpack.c.h.b16 %v502
    %v2288 = vunpack.c.l.b16 %v503
    %v2289 = vunpack.c.h.b16 %v503
    %v2290 = vunpack.c.l.b16 %v504
    %v2291 = vunpack.c.h.b16 %v504
    %v2292 = vunpack.c.l.b16 %v505
    %v2293 = vunpack.c.h.b16 %v505
    %v2294 = vunpack.c.l.b16 %v506
    %v2295 = vunpack.c.h.b16 %v506
    %v2296 = vunpack.c.l.b16 %v507
    %v2297 = vunpack.c.h.b16 %v507
    %v2298 = vunpack.c.l.b16 %v508
    %v2299 = vunpack.c.h.b16 %v508
    %v2300 = vunpack.c.l.b16 %v509
    %v2301 = vunpack.c.h.b16 %v509
    %v2302 = vunpack.c.l.b16 %v510
    %v2303 = vunpack.c.h.b16 %v510
    %v2304 = vunpack.c.l.b16 %v511
    %v2305 = vunpack.c.h.b16 %v511
    %v2306 = vunpack.c.l.b16 %v512
    %v2307 = vunpack.c.h.b16 %v512
    %v2308 = vunpack.c.l.b16 %v513
    %v2309 = vunpack.c.h.b16 %v513
    %v2310 = vunpack.c.l.b16 %v514
    %v2311 = vunpack.c.h.b16 %v514
    %v2312 = vunpack.c.l.b16 %v515
    %v2313 = vunpack.c.h.b16 %v515
    %v2314 = vunpack.c.l.b16 %v516
    %v2315 = vunpack.c.h.b16 %v516
    %v2316 = vunpack.c.l.b16 %v517
    %v2317 = vunpack.c.h.b16 %v517
    %v2318 = vunpack.c.l.b16 %v518
    %v2319 = vunpack.c.h.b16 %v518
    %v2320 = vunpack.c.l.b16 %v519
    %v2321 = vunpack.c.h.b16 %v519
    %v2322 = vunpack.c.l.b16 %v520
    %v2323 = vunpack.c.h.b16 %v520
    %v2324 = vunpack.c.l.b16 %v521
    %v2325 = vunpack.c.h.b16 %v521
    %v2326 = vunpack.c.l.b16 %v522
    %v2327 = vunpack.c.h.b16 %v522
    %v2328 = vunpack.c.l.b16 %v523
    %v2329 = vunpack.c.h.b16 %v523
    %v2330 = vunpack.c.l.b16 %v524
    %v2331 = vunpack.c.h.b16 %v524
    %v2332 = vunpack.c.l.b16 %v525
    %v2333 = vunpack.c.h.b16 %v525
    %v2334 = vunpack.c.l.b16 %v526
    %v2335 = vunpack.c.h.b16 %v526
    %v2336 = vunpack.c.l.b16 %v527
    %v2337 = vunpack.c.h.b16 %v527
    %v2338 = vunpack.c.l.b16 %v528
    %v2339 = vunpack.c.h.b16 %v528
    %v2340 = vunpack.c.l.b16 %v529
    %v2341 = vunpack.c.h.b16 %v529
    %v2342 = vunpack.c.l.b16 %v530
    %v2343 = vunpack.c.h.b16 %v530
    %v2344 = vunpack.c.l.b16 %v531
    %v2345 = vunpack.c.h.b16 %v531
    %v2346 = vunpack.c.l.b16 %v532
    %v2347 = vunpack.c.h.b16 %v532
    %v2348 = vunpack.c.l.b16 %v533
    %v2349 = vunpack.c.h.b16 %v533
    %v2350 = vunpack.c.l.b16 %v534
    %v2351 = vunpack.c.h.b16 %v534
    %v2352 = vunpack.c.l.b16 %v535
    %v2353 = vunpack.c.h.b16 %v535
    %v2354 = vunpack.c.l.b16 %v536
    %v2355 = vunpack.c.h.b16 %v536
    %v2356 = vunpack.c.l.b16 %v537
    %v2357 = vunpack.c.h.b16 %v537
    %v2358 = vunpack.c.l.b16 %v538
    %v2359 = vunpack.c.h.b16 %v538
    %v2360 = vunpack.c.l.b16 %v539
    %v2361 = vunpack.c.h.b16 %v539
    %v2362 = vunpack.c.l.b16 %v540
    %v2363 = vunpack.c.h.b16 %v540
    %v2364 = vunpack.c.l.b16 %v541
    %v2365 = vunpack.c.h.b16 %v541
    %v2366 = vunpack.c.l.b16 %v542
    %v2367 = vunpack.c.h.b16 %v542
    %v2368 = vunpack.c.l.b16 %v543
    %v2369 = vunpack.c.h.b16 %v543
    %v2370 = vunpack.c.l.b16 %v544
    %v2371 = vunpack.c.h.b16 %v544
    %v2372 = vunpack.c.l.b16 %v545
    %v2373 = vunpack.c.h.b16 %v545
    %v2374 = vunpack.c.l.b16 %v546
    %v2375 = vunpack.c.h.b16 %v546
    %v2376 = vunpack.c.l.b16 %v547
    %v2377 = vunpack.c.h.b16 %v547
    %v2378 = vunpack.c.l.b16 %v548
    %v2379 = vunpack.c.h.b16 %v548
    %v2380 = vunpack.c.l.b16 %v549
    %v2381 = vunpack.c.h.b16 %v549
    %v2382 = vunpack.c.l.b16 %v550
    %v2383 = vunpack.c.h.b16 %v550
    %v2384 = vunpack.c.l.b16 %v551
    %v2385 = vunpack.c.h.b16 %v551
    %v2386 = vunpack.c.l.b16 %v552
    %v2387 = vunpack.c.h.b16 %v552
    %v2388 = vunpack.c.l.b16 %v553
    %v2389 = vunpack.c.h.b16 %v553
    %v2390 = vunpack.c.l.b16 %v554
    %v2391 = vunpack.c.h.b16 %v554
    %v2392 = vunpack.c.l.b16 %v555
    %v2393 = vunpack.c.h.b16 %v555
    %v2394 = vunpack.c.l.b16 %v556
    %v2395 = vunpack.c.h.b16 %v556
    %v2396 = vunpack.c.l.b16 %v557
    %v2397 = vunpack.c.h.b16 %v557
    %v2398 = vunpack.c.l.b16 %v558
    %v2399 = vunpack.c.h.b16 %v558
    %v2400 = vunpack.c.l.b16 %v559
    %v2401 = vunpack.c.h.b16 %v559
    %v2402 = vunpack.c.l.b16 %v560
    %v2403 = vunpack.c.h.b16 %v560
    %v2404 = vunpack.c.l.b16 %v561
    %v2405 = vunpack.c.h.b16 %v561
    %v2406 = vunpack.c.l.b16 %v562
    %v2407 = vunpack.c.h.b16 %v562
    %v2408 = vunpack.c.l.b16 %v563
    %v2409 = vunpack.c.h.b16 %v563
    %v2410 = vunpack.c.l.b16 %v564
    %v2411 = vunpack.c.h.b16 %v564
    %v2412 = vunpack.c.l.b16 %v565
    %v2413 = vunpack.c.h.b16 %v565
    %v2414 = vunpack.c.l.b16 %v566
    %v2415 = vunpack.c.h.b16 %v566
    %v2416 = vunpack.c.l.b16 %v567
    %v2417 = vunpack.c.h.b16 %v567
    %v2418 = vunpack.c.l.b16 %v568
    %v2419 = vunpack.c.h.b16 %v568
    %v2420 = vunpack.c.l.b16 %v569
    %v2421 = vunpack.c.h.b16 %v569
    %v2422 = vunpack.c.l.b16 %v570
    %v2423 = vunpack.c.h.b16 %v570
    %v2424 = vunpack.c.l.b16 %v571
    %v2425 = vunpack.c.h.b16 %v571
    %v2426 = vunpack.c.l.b16 %v572
    %v2427 = vunpack.c.h.b16 %v572
    %v2428 = vunpack.c.l.b16 %v573
    %v2429 = vunpack.c.h.b16 %v573
    %v2430 = vunpack.c.l.b16 %v574
    %v2431 = vunpack.c.h.b16 %v574
    %v2432 = vunpack.c.l.b16 %v575
    %v2433 = vunpack.c.h.b16 %v575
    %v2434 = vunpack.c.l.b16 %v576
    %v2435 = vunpack.c.h.b16 %v576
    %v2436 = vunpack.c.l.b16 %v577
    %v2437 = vunpack.c.h.b16 %v577
    %v2438 = vunpack.c.l.b16 %v578
    %v2439 = vunpack.c.h.b16 %v578
    %v2440 = vunpack.c.l.b16 %v579
    %v2441 = vunpack.c.h.b16 %v579
    %v2442 = vunpack.c.l.b16 %v580
    %v2443 = vunpack.c.h.b16 %v580
    %v2444 = vunpack.c.l.b16 %v581
    %v2445 = vunpack.c.h.b16 %v581
    %v2446 = vunpack.c.l.b16 %v582
    %v2447 = vunpack.c.h.b16 %v582
    %v2448 = vunpack.c.l.b16 %v583
    %v2449 = vunpack.c.h.b16 %v583
    %v2450 = vunpack.c.l.b16 %v584
    %v2451 = vunpack.c.h.b16 %v584
    %v2452 = vunpack.c.l.b16 %v585
    %v2453 = vunpack.c.h.b16 %v585
    %v2454 = vunpack.c.l.b16 %v586
    %v2455 = vunpack.c.h.b16 %v586
    %v2456 = vunpack.c.l.b16 %v587
    %v2457 = vunpack.c.h.b16 %v587
    %v2458 = vunpack.c.l.b16 %v588
    %v2459 = vunpack.c.h.b16 %v588
    %v2460 = vunpack.c.l.b16 %v589
    %v2461 = vunpack.c.h.b16 %v589
    %v2462 = vunpack.c.l.b16 %v590
    %v2463 = vunpack.c.h.b16 %v590
    %v2464 = vunpack.c.l.b16 %v591
    %v2465 = vunpack.c.h.b16 %v591
    %v2466 = vunpack.c.l.b16 %v592
    %v2467 = vunpack.c.h.b16 %v592
    %v2468 = vunpack.c.l.b16 %v593
    %v2469 = vunpack.c.h.b16 %v593
    %v2470 = vunpack.c.l.b16 %v594
    %v2471 = vunpack.c.h.b16 %v594
    %v2472 = vunpack.c.l.b16 %v595
    %v2473 = vunpack.c.h.b16 %v595
    %v2474 = vunpack.c.l.b16 %v596
    %v2475 = vunpack.c.h.b16 %v596
    %v2476 = vunpack.c.l.b16 %v597
    %v2477 = vunpack.c.h.b16 %v597
    %v2478 = vunpack.c.l.b16 %v598
    %v2479 = vunpack.c.h.b16 %v598
    %v2480 = vunpack.c.l.b16 %v599
    %v2481 = vunpack.c.h.b16 %v599
    %v2482 = vunpack.c.l.b16 %v600
    %v2483 = vunpack.c.h.b16 %v600
    %v2484 = vunpack.c.l.b16 %v601
    %v2485 = vunpack.c.h.b16 %v601
    %v2486 = vunpack.c.l.b16 %v602
    %v2487 = vunpack.c.h.b16 %v602
    %v2488 = vunpack.c.l.b16 %v603
    %v2489 = vunpack.c.h.b16 %v603
    %v2490 = vunpack.c.l.b16 %v604
    %v2491 = vunpack.c.h.b16 %v604
    %v2492 = vunpack.c.l.b16 %v605
    %v2493 = vunpack.c.h.b16 %v605
    %v2494 = vunpack.c.l.b16 %v606
    %v2495 = vunpack.c.h.b16 %v606
    %v2496 = vunpack.c.l.b16 %v607
    %v2497 = vunpack.c.h.b16 %v607
    %v2498 = vunpack.c.l.b16 %v608
    %v2499 = vunpack.c.h.b16 %v608
    %v2500 = vunpack.c.l.b16 %v609
    %v2501 = vunpack.c.h.b16 %v609
    %v2502 = vunpack.c.l.b16 %v610
    %v2503 = vunpack.c.h.b16 %v610
    %v2504 = vunpack.c.l.b16 %v611
    %v2505 = vunpack.c.h.b16 %v611
    %v2506 = vunpack.c.l.b16 %v612
    %v2507 = vunpack.c.h.b16 %v612
    %v2508 = vunpack.c.l.b16 %v613
    %v2509 = vunpack.c.h.b16 %v613
    %v2510 = vunpack.c.l.b16 %v614
    %v2511 = vunpack.c.h.b16 %v614
    %v2512 = vunpack.c.l.b16 %v615
    %v2513 = vunpack.c.h.b16 %v615
    %v2514 = vunpack.c.l.b16 %v616
    %v2515 = vunpack.c.h.b16 %v616
    %v2516 = vunpack.c.l.b16 %v617
    %v2517 = vunpack.c.h.b16 %v617
    %v2518 = vunpack.c.l.b16 %v618
    %v2519 = vunpack.c.h.b16 %v618
    %v2520 = vunpack.c.l.b16 %v619
    %v2521 = vunpack.c.h.b16 %v619
    %v2522 = vunpack.c.l.b16 %v620
    %v2523 = vunpack.c.h.b16 %v620
    %v2524 = vunpack.c.l.b16 %v621
    %v2525 = vunpack.c.h.b16 %v621
    %v2526 = vunpack.c.l.b16 %v622
    %v2527 = vunpack.c.h.b16 %v622
    %v2528 = vunpack.c.l.b16 %v623
    %v2529 = vunpack.c.h.b16 %v623
    %v2530 = vunpack.c.l.b16 %v624
    %v2531 = vunpack.c.h.b16 %v624
    %v2532 = vunpack.c.l.b16 %v625
    %v2533 = vunpack.c.h.b16 %v625
    %v2534 = vunpack.c.l.b16 %v626
    %v2535 = vunpack.c.h.b16 %v626
    %v2536 = vunpack.c.l.b16 %v627
    %v2537 = vunpack.c.h.b16 %v627
    %v2538 = vunpack.c.l.b16 %v628
    %v2539 = vunpack.c.h.b16 %v628
    %v2540 = vunpack.c.l.b16 %v629
    %v2541 = vunpack.c.h.b16 %v629
    %v2542 = vunpack.c.l.b16 %v630
    %v2543 = vunpack.c.h.b16 %v630
    %v2544 = vunpack.c.l.b16 %v631
    %v2545 = vunpack.c.h.b16 %v631
    %v2546 = vunpack.c.l.b16 %v632
    %v2547 = vunpack.c.h.b16 %v632
    %v2548 = vunpack.c.l.b16 %v633
    %v2549 = vunpack.c.h.b16 %v633
    %v2550 = vunpack.c.l.b16 %v634
    %v2551 = vunpack.c.h.b16 %v634
    %v2552 = vunpack.c.l.b16 %v635
    %v2553 = vunpack.c.h.b16 %v635
    %v2554 = vunpack.c.l.b16 %v636
    %v2555 = vunpack.c.h.b16 %v636
    %v2556 = vunpack.c.l.b16 %v637
    %v2557 = vunpack.c.h.b16 %v637
    %v2558 = vunpack.c.l.b16 %v638
    %v2559 = vunpack.c.h.b16 %v638
    %v2560 = vunpack.c.l.b16 %v639
    %v2561 = vunpack.c.h.b16 %v639
    %v2562 = vunpack.c.l.b16 %v640
    %v2563 = vunpack.c.h.b16 %v640
    %v2564 = vunpack.c.l.b16 %v641
    %v2565 = vunpack.c.h.b16 %v641
    %v2566 = vunpack.c.l.b16 %v642
    %v2567 = vunpack.c.h.b16 %v642
    %v2568 = vunpack.c.l.b16 %v643
    %v2569 = vunpack.c.h.b16 %v643
    %v2570 = vunpack.c.l.b16 %v644
    %v2571 = vunpack.c.h.b16 %v644
    %v2572 = vunpack.c.l.b16 %v645
    %v2573 = vunpack.c.h.b16 %v645
    %v2574 = vunpack.c.l.b16 %v646
    %v2575 = vunpack.c.h.b16 %v646
    %v2576 = vunpack.c.l.b16 %v647
    %v2577 = vunpack.c.h.b16 %v647
    %v2578 = vunpack.c.l.b16 %v648
    %v2579 = vunpack.c.h.b16 %v648
    %v2580 = vunpack.c.l.b16 %v649
    %v2581 = vunpack.c.h.b16 %v649
    %v2582 = vunpack.c.l.b16 %v650
    %v2583 = vunpack.c.h.b16 %v650
    %v2584 = vunpack.c.l.b16 %v651
    %v2585 = vunpack.c.h.b16 %v651
    %v2586 = vunpack.c.l.b16 %v652
    %v2587 = vunpack.c.h.b16 %v652
    %v2588 = vunpack.c.l.b16 %v653
    %v2589 = vunpack.c.h.b16 %v653
    %v2590 = vunpack.c.l.b16 %v654
    %v2591 = vunpack.c.h.b16 %v654
    %v2592 = vunpack.c.l.b16 %v655
    %v2593 = vunpack.c.h.b16 %v655
    %v2594 = vunpack.c.l.b16 %v656
    %v2595 = vunpack.c.h.b16 %v656
    %v2596 = vunpack.c.l.b16 %v657
    %v2597 = vunpack.c.h.b16 %v657
    %v2598 = vunpack.c.l.b16 %v658
    %v2599 = vunpack.c.h.b16 %v658
    %v2600 = vunpack.c.l.b16 %v659
    %v2601 = vunpack.c.h.b16 %v659
    %v2602 = vunpack.c.l.b16 %v660
    %v2603 = vunpack.c.h.b16 %v660
    %v2604 = vunpack.c.l.b16 %v661
    %v2605 = vunpack.c.h.b16 %v661
    %v2606 = vunpack.c.l.b16 %v662
    %v2607 = vunpack.c.h.b16 %v662
    %v2608 = vunpack.c.l.b16 %v663
    %v2609 = vunpack.c.h.b16 %v663
    %v2610 = vunpack.c.l.b16 %v664
    %v2611 = vunpack.c.h.b16 %v664
    %v2612 = vunpack.c.l.b16 %v665
    %v2613 = vunpack.c.h.b16 %v665
    %v2614 = vunpack.c.l.b16 %v666
    %v2615 = vunpack.c.h.b16 %v666
    %v2616 = vunpack.c.l.b16 %v667
    %v2617 = vunpack.c.h.b16 %v667
    %v2618 = vunpack.c.l.b16 %v668
    %v2619 = vunpack.c.h.b16 %v668
    %v2620 = vunpack.c.l.b16 %v669
    %v2621 = vunpack.c.h.b16 %v669
    %v2622 = vunpack.c.l.b16 %v670
    %v2623 = vunpack.c.h.b16 %v670
    %v2624 = vunpack.c.l.b16 %v671
    %v2625 = vunpack.c.h.b16 %v671
    %v2626 = vunpack.c.l.b16 %v672
    %v2627 = vunpack.c.h.b16 %v672
    %v2628 = vunpack.c.l.b16 %v673
    %v2629 = vunpack.c.h.b16 %v673
    %v2630 = vunpack.c.l.b16 %v674
    %v2631 = vunpack.c.h.b16 %v674
    %v2632 = vunpack.c.l.b16 %v675
    %v2633 = vunpack.c.h.b16 %v675
    %v2634 = vunpack.c.l.b16 %v676
    %v2635 = vunpack.c.h.b16 %v676
    %v2636 = vunpack.c.l.b16 %v677
    %v2637 = vunpack.c.h.b16 %v677
    %v2638 = vunpack.c.l.b16 %v678
    %v2639 = vunpack.c.h.b16 %v678
    %v2640 = vunpack.c.l.b16 %v679
    %v2641 = vunpack.c.h.b16 %v679
    %v2642 = vunpack.c.l.b16 %v680
    %v2643 = vunpack.c.h.b16 %v680
    %v2644 = vunpack.c.l.b16 %v681
    %v2645 = vunpack.c.h.b16 %v681
    %v2646 = vunpack.c.l.b16 %v682
    %v2647 = vunpack.c.h.b16 %v682
    %v2648 = vunpack.c.l.b16 %v683
    %v2649 = vunpack.c.h.b16 %v683
    %v2650 = vunpack.c.l.b16 %v684
    %v2651 = vunpack.c.h.b16 %v684
    %v2652 = vunpack.c.l.b16 %v685
    %v2653 = vunpack.c.h.b16 %v685
    %v2654 = vunpack.c.l.b16 %v686
    %v2655 = vunpack.c.h.b16 %v686
    %v2656 = vunpack.c.l.b16 %v687
    %v2657 = vunpack.c.h.b16 %v687
    %v2658 = vunpack.c.l.b16 %v688
    %v2659 = vunpack.c.h.b16 %v688
    %v2660 = vunpack.c.l.b16 %v689
    %v2661 = vunpack.c.h.b16 %v689
    %v2662 = vunpack.c.l.b16 %v690
    %v2663 = vunpack.c.h.b16 %v690
    %v2664 = vunpack.c.l.b16 %v691
    %v2665 = vunpack.c.h.b16 %v691
    %v2666 = vunpack.c.l.b16 %v692
    %v2667 = vunpack.c.h.b16 %v692
    %v2668 = vunpack.c.l.b16 %v693
    %v2669 = vunpack.c.h.b16 %v693
    %v2670 = vunpack.c.l.b16 %v694
    %v2671 = vunpack.c.h.b16 %v694
    %v2672 = vunpack.c.l.b16 %v695
    %v2673 = vunpack.c.h.b16 %v695
    %v2674 = vunpack.c.l.b16 %v696
    %v2675 = vunpack.c.h.b16 %v696
    %v2676 = vunpack.c.l.b16 %v697
    %v2677 = vunpack.c.h.b16 %v697
    %v2678 = vunpack.c.l.b16 %v698
    %v2679 = vunpack.c.h.b16 %v698
    %v2680 = vunpack.c.l.b16 %v699
    %v2681 = vunpack.c.h.b16 %v699
    %v2682 = vunpack.c.l.b16 %v700
    %v2683 = vunpack.c.h.b16 %v700
    %v2684 = vunpack.c.l.b16 %v701
    %v2685 = vunpack.c.h.b16 %v701
    %v2686 = vunpack.c.l.b16 %v702
    %v2687 = vunpack.c.h.b16 %v702
    %v2688 = vunpack.c.l.b16 %v703
    %v2689 = vunpack.c.h.b16 %v703
    %v2690 = vunpack.c.l.b16 %v704
    %v2691 = vunpack.c.h.b16 %v704
    %v2692 = vunpack.c.l.b16 %v705
    %v2693 = vunpack.c.h.b16 %v705
    %v2694 = vunpack.c.l.b16 %v706
    %v2695 = vunpack.c.h.b16 %v706
    %v2696 = vunpack.c.l.b16 %v707
    %v2697 = vunpack.c.h.b16 %v707
    %v2698 = vunpack.c.l.b16 %v708
    %v2699 = vunpack.c.h.b16 %v708
    %v2700 = vunpack.c.l.b16 %v709
    %v2701 = vunpack.c.h.b16 %v709
    %v2702 = vunpack.c.l.b16 %v710
    %v2703 = vunpack.c.h.b16 %v710
    %v2704 = vunpack.c.l.b16 %v711
    %v2705 = vunpack.c.h.b16 %v711
    %v2706 = vunpack.c.l.b16 %v712
    %v2707 = vunpack.c.h.b16 %v712
    %v2708 = vunpack.c.l.b16 %v713
    %v2709 = vunpack.c.h.b16 %v713
    %v2710 = vunpack.c.l.b16 %v714
    %v2711 = vunpack.c.h.b16 %v714
    %v2712 = vunpack.c.l.b16 %v715
    %v2713 = vunpack.c.h.b16 %v715
    %v2714 = vunpack.c.l.b16 %v716
    %v2715 = vunpack.c.h.b16 %v716
    %v2716 = vunpack.c.l.b16 %v717
    %v2717 = vunpack.c.h.b16 %v717
    %v2718 = vunpack.c.l.b16 %v718
    %v2719 = vunpack.c.h.b16 %v718
    %v2720 = vunpack.c.l.b16 %v719
    %v2721 = vunpack.c.h.b16 %v719
    %v2722 = vunpack.c.l.b16 %v720
    %v2723 = vunpack.c.h.b16 %v720
    %v2724 = vunpack.c.l.b16 %v721
    %v2725 = vunpack.c.h.b16 %v721
    %v2726 = vunpack.c.l.b16 %v722
    %v2727 = vunpack.c.h.b16 %v722
    %v2728 = vunpack.c.l.b16 %v723
    %v2729 = vunpack.c.h.b16 %v723
    %v2730 = vunpack.c.l.b16 %v724
    %v2731 = vunpack.c.h.b16 %v724
    %v2732 = vunpack.c.l.b16 %v725
    %v2733 = vunpack.c.h.b16 %v725
    %v2734 = vunpack.c.l.b16 %v726
    %v2735 = vunpack.c.h.b16 %v726
    %v2736 = vunpack.c.l.b16 %v727
    %v2737 = vunpack.c.h.b16 %v727
    %v2738 = vunpack.c.l.b16 %v728
    %v2739 = vunpack.c.h.b16 %v728
    %v2740 = vunpack.c.l.b16 %v729
    %v2741 = vunpack.c.h.b16 %v729
    %v2742 = vunpack.c.l.b16 %v730
    %v2743 = vunpack.c.h.b16 %v730
    %v2744 = vunpack.c.l.b16 %v731
    %v2745 = vunpack.c.h.b16 %v731
    %v2746 = vunpack.c.l.b16 %v732
    %v2747 = vunpack.c.h.b16 %v732
    %v2748 = vunpack.c.l.b16 %v733
    %v2749 = vunpack.c.h.b16 %v733
    %v2750 = vunpack.c.l.b16 %v734
    %v2751 = vunpack.c.h.b16 %v734
    %v2752 = vunpack.c.l.b16 %v735
    %v2753 = vunpack.c.h.b16 %v735
    %v2754 = vunpack.c.l.b16 %v736
    %v2755 = vunpack.c.h.b16 %v736
    %v2756 = vunpack.c.l.b16 %v737
    %v2757 = vunpack.c.h.b16 %v737
    %v2758 = vunpack.c.l.b16 %v738
    %v2759 = vunpack.c.h.b16 %v738
    %v2760 = vunpack.c.l.b16 %v739
    %v2761 = vunpack.c.h.b16 %v739
    %v2762 = vunpack.c.l.b16 %v740
    %v2763 = vunpack.c.h.b16 %v740
    %v2764 = vunpack.c.l.b16 %v741
    %v2765 = vunpack.c.h.b16 %v741
    %v2766 = vunpack.c.l.b16 %v742
    %v2767 = vunpack.c.h.b16 %v742
    %v2768 = vunpack.c.l.b16 %v743
    %v2769 = vunpack.c.h.b16 %v743
    %v2770 = vunpack.c.l.b16 %v744
    %v2771 = vunpack.c.h.b16 %v744
    %v2772 = vunpack.c.l.b16 %v745
    %v2773 = vunpack.c.h.b16 %v745
    %v2774 = vunpack.c.l.b16 %v746
    %v2775 = vunpack.c.h.b16 %v746
    %v2776 = vunpack.c.l.b16 %v747
    %v2777 = vunpack.c.h.b16 %v747
    %v2778 = vunpack.c.l.b16 %v748
    %v2779 = vunpack.c.h.b16 %v748
    %v2780 = vunpack.c.l.b16 %v749
    %v2781 = vunpack.c.h.b16 %v749
    %v2782 = vunpack.c.l.b16 %v750
    %v2783 = vunpack.c.h.b16 %v750
    %v2784 = vunpack.c.l.b16 %v751
    %v2785 = vunpack.c.h.b16 %v751
    %v2786 = vunpack.c.l.b16 %v752
    %v2787 = vunpack.c.h.b16 %v752
    %v2788 = vunpack.c.l.b16 %v753
    %v2789 = vunpack.c.h.b16 %v753
    %v2790 = vunpack.c.l.b16 %v754
    %v2791 = vunpack.c.h.b16 %v754
    %v2792 = vunpack.c.l.b16 %v755
    %v2793 = vunpack.c.h.b16 %v755
    %v2794 = vunpack.c.l.b16 %v756
    %v2795 = vunpack.c.h.b16 %v756
    %v2796 = vunpack.c.l.b16 %v757
    %v2797 = vunpack.c.h.b16 %v757
    %v2798 = vunpack.c.l.b16 %v758
    %v2799 = vunpack.c.h.b16 %v758
    %v2800 = vunpack.c.l.b16 %v759
    %v2801 = vunpack.c.h.b16 %v759
    %v2802 = vunpack.c.l.b16 %v760
    %v2803 = vunpack.c.h.b16 %v760
    %v2804 = vunpack.c.l.b16 %v761
    %v2805 = vunpack.c.h.b16 %v761
    %v2806 = vunpack.c.l.b16 %v762
    %v2807 = vunpack.c.h.b16 %v762
    %v2808 = vunpack.c.l.b16 %v763
    %v2809 = vunpack.c.h.b16 %v763
    %v2810 = vunpack.c.l.b16 %v764
    %v2811 = vunpack.c.h.b16 %v764
    %v2812 = vunpack.c.l.b16 %v765
    %v2813 = vunpack.c.h.b16 %v765
    %v2814 = vunpack.c.l.b16 %v766
    %v2815 = vunpack.c.h.b16 %v766
    %v2816 = vunpack.c.l.b16 %v767
    %v2817 = vunpack.c.h.b16 %v767
    %v2818 = vunpack.c.l.b16 %v768
    %v2819 = vunpack.c.h.b16 %v768
    %v2820 = vunpack.c.l.b16 %v769
    %v2821 = vunpack.c.h.b16 %v769
    %v2822 = vunpack.c.l.b16 %v770
    %v2823 = vunpack.c.h.b16 %v770
    %v2824 = vunpack.c.l.b16 %v771
    %v2825 = vunpack.c.h.b16 %v771
    %v2826 = vunpack.c.l.b16 %v772
    %v2827 = vunpack.c.h.b16 %v772
    %v2828 = vunpack.c.l.b16 %v773
    %v2829 = vunpack.c.h.b16 %v773
    %v2830 = vunpack.c.l.b16 %v774
    %v2831 = vunpack.c.h.b16 %v774
    %v2832 = vunpack.c.l.b16 %v775
    %v2833 = vunpack.c.h.b16 %v775
    %v2834 = vunpack.c.l.b16 %v776
    %v2835 = vunpack.c.h.b16 %v776
    %v2836 = vunpack.c.l.b16 %v777
    %v2837 = vunpack.c.h.b16 %v777
    %v2838 = vunpack.c.l.b16 %v778
    %v2839 = vunpack.c.h.b16 %v778
    %v2840 = vunpack.c.l.b16 %v779
    %v2841 = vunpack.c.h.b16 %v779
    %v2842 = vunpack.c.l.b16 %v780
    %v2843 = vunpack.c.h.b16 %v780
    %v2844 = vunpack.c.l.b16 %v781
    %v2845 = vunpack.c.h.b16 %v781
    %v2846 = vunpack.c.l.b16 %v782
    %v2847 = vunpack.c.h.b16 %v782
    %v2848 = vunpack.c.l.b16 %v783
    %v2849 = vunpack.c.h.b16 %v783
    %v2850 = vunpack.c.l.b16 %v784
    %v2851 = vunpack.c.h.b16 %v784
    %v2852 = vunpack.c.l.b16 %v785
    %v2853 = vunpack.c.h.b16 %v785
    %v2854 = vunpack.c.l.b16 %v786
    %v2855 = vunpack.c.h.b16 %v786
    %v2856 = vunpack.c.l.b16 %v787
    %v2857 = vunpack.c.h.b16 %v787
    %v2858 = vunpack.c.l.b16 %v788
    %v2859 = vunpack.c.h.b16 %v788
    %v2860 = vunpack.c.l.b16 %v789
    %v2861 = vunpack.c.h.b16 %v789
    %v2862 = vunpack.c.l.b16 %v790
    %v2863 = vunpack.c.h.b16 %v790
    %v2864 = vunpack.c.l.b16 %v791
    %v2865 = vunpack.c.h.b16 %v791
    %v2866 = vunpack.c.l.b16 %v792
    %v2867 = vunpack.c.h.b16 %v792
    %v2868 = vunpack.c.l.b16 %v793
    %v2869 = vunpack.c.h.b16 %v793
    %v2870 = vunpack.c.l.b16 %v794
    %v2871 = vunpack.c.h.b16 %v794
    %v2872 = vunpack.c.l.b16 %v795
    %v2873 = vunpack.c.h.b16 %v795
    %v2874 = vunpack.c.l.b16 %v796
    %v2875 = vunpack.c.h.b16 %v796
    %v2876 = vunpack.c.l.b16 %v797
    %v2877 = vunpack.c.h.b16 %v797
    %v2878 = vunpack.c.l.b16 %v798
    %v2879 = vunpack.c.h.b16 %v798
    %v2880 = vunpack.c.l.b16 %v799
    %v2881 = vunpack.c.h.b16 %v799
    %v2882 = vunpack.c.l.b16 %v800
    %v2883 = vunpack.c.h.b16 %v800
    %v2884 = vunpack.c.l.b16 %v801
    %v2885 = vunpack.c.h.b16 %v801
    %v2886 = vunpack.c.l.b16 %v802
    %v2887 = vunpack.c.h.b16 %v802
    %v2888 = vunpack.c.l.b16 %v803
    %v2889 = vunpack.c.h.b16 %v803
    %v2890 = vunpack.c.l.b16 %v804
    %v2891 = vunpack.c.h.b16 %v804
    %v2892 = vunpack.c.l.b16 %v805
    %v2893 = vunpack.c.h.b16 %v805
    %v2894 = vunpack.c.l.b16 %v806
    %v2895 = vunpack.c.h.b16 %v806
    %v2896 = vunpack.c.l.b16 %v807
    %v2897 = vunpack.c.h.b16 %v807
    %v2898 = vunpack.c.l.b16 %v808
    %v2899 = vunpack.c.h.b16 %v808
    %v2900 = vunpack.c.l.b16 %v809
    %v2901 = vunpack.c.h.b16 %v809
    %v2902 = vunpack.c.l.b16 %v810
    %v2903 = vunpack.c.h.b16 %v810
    %v2904 = vunpack.c.l.b16 %v811
    %v2905 = vunpack.c.h.b16 %v811
    %v2906 = vunpack.c.l.b16 %v812
    %v2907 = vunpack.c.h.b16 %v812
    %v2908 = vunpack.c.l.b16 %v813
    %v2909 = vunpack.c.h.b16 %v813
    %v2910 = vunpack.c.l.b16 %v814
    %v2911 = vunpack.c.h.b16 %v814
    %v2912 = vunpack.c.l.b16 %v815
    %v2913 = vunpack.c.h.b16 %v815
    %v2914 = vunpack.c.l.b16 %v816
    %v2915 = vunpack.c.h.b16 %v816
    %v2916 = vunpack.c.l.b16 %v817
    %v2917 = vunpack.c.h.b16 %v817
    %v2918 = vpack.c.b16 %v1768, %v1766
    %v2919 = vpack.c.b16 %v1769, %v1767
    %v2920 = vpack.c.b16 %v1772, %v1770
    %v2921 = vpack.c.b16 %v1773, %v1771
    %v2922 = vpack.c.b16 %v1776, %v1774
    %v2923 = vpack.c.b16 %v1777, %v1775
    %v2924 = vpack.c.b16 %v1780, %v1778
    %v2925 = vpack.c.b16 %v1781, %v1779
    %v2926 = vpack.c.b16 %v1784, %v1782
    %v2927 = vpack.c.b16 %v1785, %v1783
    %v2928 = vpack.c.b16 %v1788, %v1786
    %v2929 = vpack.c.b16 %v1789, %v1787
    %v2930 = vpack.c.b16 %v1792, %v1790
    %v2931 = vpack.c.b16 %v1793, %v1791
    %v2932 = vpack.c.b16 %v1796, %v1794
    %v2933 = vpack.c.b16 %v1797, %v1795
    %v2934 = vpack.c.b16 %v1800, %v1798
    %v2935 = vpack.c.b16 %v1801, %v1799
    %v2936 = vpack.c.b16 %v1804, %v1802
    %v2937 = vpack.c.b16 %v1805, %v1803
    %v2938 = vpack.c.b16 %v1808, %v1806
    %v2939 = vpack.c.b16 %v1809, %v1807
    %v2940 = vpack.c.b16 %v1812, %v1810
    %v2941 = vpack.c.b16 %v1813, %v1811
    %v2942 = vpack.c.b16 %v1816, %v1814
    %v2943 = vpack.c.b16 %v1817, %v1815
    %v2944 = vpack.c.b16 %v1820, %v1818
    %v2945 = vpack.c.b16 %v1821, %v1819
    %v2946 = vpack.c.b16 %v1824, %v1822
    %v2947 = vpack.c.b16 %v1825, %v1823
    %v2948 = vpack.c.b16 %v1828, %v1826
    %v2949 = vpack.c.b16 %v1829, %v1827
    %v2950 = vpack.c.b16 %v1832, %v1830
    %v2951 = vpack.c.b16 %v1833, %v1831
    %v2952 = vpack.c.b16 %v1836, %v1834
    %v2953 = vpack.c.b16 %v1837, %v1835
    %v2954 = vpack.c.b16 %v1840, %v1838
    %v2955 = vpack.c.b16 %v1841, %v1839
    %v2956 = vpack.c.b16 %v1844, %v1842
    %v2957 = vpack.c.b16 %v1845, %v1843
    %v2958 = vpack.c.b16 %v1848, %v1846
    %v2959 = vpack.c.b16 %v1849, %v1847
    %v2960 = vpack.c.b16 %v1852, %v1850
    %v2961 = vpack.c.b16 %v1853, %v1851
    %v2962 = vpack.c.b16 %v1856, %v1854
    %v2963 = vpack.c.b16 %v1857, %v1855
    %v2964 = vpack.c.b16 %v1860, %v1858
    %v2965 = vpack.c.b16 %v1861, %v1859
    %v2966 = vpack.c.b16 %v1864, %v1862
    %v2967 = vpack.c.b16 %v1865, %v1863
    %v2968 = vpack.c.b16 %v1868, %v1866
    %v2969 = vpack.c.b16 %v1869, %v1867
    %v2970 = vpack.c.b16 %v1872, %v1870
    %v2971 = vpack.c.b16 %v1873, %v1871
    %v2972 = vpack.c.b16 %v1876, %v1874
    %v2973 = vpack.c.b16 %v1877, %v1875
    %v2974 = vpack.c.b16 %v1880, %v1878
    %v2975 = vpack.c.b16 %v1881, %v1879
    %v2976 = vpack.c.b16 %v1884, %v1882
    %v2977 = vpack.c.b16 %v1885, %v1883
    %v2978 = vpack.c.b16 %v1888, %v1886
    %v2979 = vpack.c.b16 %v1889, %v1887
    %v2980 = vpack.c.b16 %v1892, %v1890
    %v2981 = vpack.c.b16 %v1893, %v1891
    %v2982 = vpack.c.b16 %v1896, %v1894
    %v2983 = vpack.c.b16 %v1897, %v1895
    %v2984 = vpack.c.b16 %v1900, %v1898
    %v2985 = vpack.c.b16 %v1901, %v1899
    %v2986 = vpack.c.b16 %v1904, %v1902
    %v2987 = vpack.c.b16 %v1905, %v1903
    %v2988 = vpack.c.b16 %v1908, %v1906
    %v2989 = vpack.c.b16 %v1909, %v1907
    %v2990 = vpack.c.b16 %v1912, %v1910
    %v2991 = vpack.c.b16 %v1913, %v1911
    %v2992 = vpack.c.b16 %v1916, %v1914
    %v2993 = vpack.c.b16 %v1917, %v1915
    %v2994 = vpack.c.b16 %v1920, %v1918
    %v2995 = vpack.c.b16 %v1921, %v1919
    %v2996 = vpack.c.b16 %v1924, %v1922
    %v2997 = vpack.c.b16 %v1925, %v1923
    %v2998 = vpack.c.b16 %v1928, %v1926
    %v2999 = vpack.c.b16 %v1929, %v1927
    %v3000 = vpack.c.b16 %v1932, %v1930
    %v3001 = vpack.c.b16 %v1933, %v1931
    %v3002 = vpack.c.b16 %v1936, %v1934
    %v3003 = vpack.c.b16 %v1937, %v1935
    %v3004 = vpack.c.b16 %v1940, %v1938
    %v3005 = vpack.c.b16 %v1941, %v1939
    %v3006 = vpack.c.b16 %v1944, %v1942
    %v3007 = vpack.c.b16 %v1945, %v1943
    %v3008 = vpack.c.b16 %v1948, %v1946
    %v3009 = vpack.c.b16 %v1949, %v1947
    %v3010 = vpack.c.b16 %v1952, %v1950
    %v3011 = vpack.c.b16 %v1953, %v1951
    %v3012 = vpack.c.b16 %v1956, %v1954
    %v3013 = vpack.c.b16 %v1957, %v1955
    %v3014 = vpack.c.b16 %v1960, %v1958
    %v3015 = vpack.c.b16 %v1961, %v1959
    %v3016 = vpack.c.b16 %v1964, %v1962
    %v3017 = vpack.c.b16 %v1965, %v1963
    %v3018 = vpack.c.b16 %v1968, %v1966
    %v3019 = vpack.c.b16 %v1969, %v1967
    %v3020 = vpack.c.b16 %v1972, %v1970
    %v3021 = vpack.c.b16 %v1973, %v1971
    %v3022 = vpack.c.b16 %v1976, %v1974
    %v3023 = vpack.c.b16 %v1977, %v1975
    %v3024 = vpack.c.b16 %v1980, %v1978
    %v3025 = vpack.c.b16 %v1981, %v1979
    %v3026 = vpack.c.b16 %v1984, %v1982
    %v3027 = vpack.c.b16 %v1985, %v1983
    %v3028 = vpack.c.b16 %v1988, %v1986
    %v3029 = vpack.c.b16 %v1989, %v1987
    %v3030 = vpack.c.b16 %v1992, %v1990
    %v3031 = vpack.c.b16 %v1993, %v1991
    %v3032 = vpack.c.b16 %v1996, %v1994
    %v3033 = vpack.c.b16 %v1997, %v1995
    %v3034 = vpack.c.b16 %v2000, %v1998
    %v3035 = vpack.c.b16 %v2001, %v1999
    %v3036 = vpack.c.b16 %v2004, %v2002
    %v3037 = vpack.c.b16 %v2005, %v2003
    %v3038 = vpack.c.b16 %v2008, %v2006
    %v3039 = vpack.c.b16 %v2009, %v2007
    %v3040 = vpack.c.b16 %v2012, %v2010
    %v3041 = vpack.c.b16 %v2013, %v2011
    %v3042 = vpack.c.b16 %v2016, %v2014
    %v3043 = vpack.c.b16 %v2017, %v2015
    %v3044 = vpack.c.b16 %v2020, %v2018
    %v3045 = vpack.c.b16 %v2021, %v2019
    %v3046 = vpack.c.b16 %v2024, %v2022
    %v3047 = vpack.c.b16 %v2025, %v2023
    %v3048 = vpack.c.b16 %v2028, %v2026
    %v3049 = vpack.c.b16 %v2029, %v2027
    %v3050 = vpack.c.b16 %v2032, %v2030
    %v3051 = vpack.c.b16 %v2033, %v2031
    %v3052 = vpack.c.b16 %v2036, %v2034
    %v3053 = vpack.c.b16 %v2037, %v2035
    %v3054 = vpack.c.b16 %v2040, %v2038
    %v3055 = vpack.c.b16 %v2041, %v2039
    %v3056 = vpack.c.b16 %v2044, %v2042
    %v3057 = vpack.c.b16 %v2045, %v2043
    %v3058 = vpack.c.b16 %v2048, %v2046
    %v3059 = vpack.c.b16 %v2049, %v2047
    %v3060 = vpack.c.b16 %v2052, %v2050
    %v3061 = vpack.c.b16 %v2053, %v2051
    %v3062 = vpack.c.b16 %v2056, %v2054
    %v3063 = vpack.c.b16 %v2057, %v2055
    %v3064 = vpack.c.b16 %v2060, %v2058
    %v3065 = vpack.c.b16 %v2061, %v2059
    %v3066 = vpack.c.b16 %v2064, %v2062
    %v3067 = vpack.c.b16 %v2065, %v2063
    %v3068 = vpack.c.b16 %v2068, %v2066
    %v3069 = vpack.c.b16 %v2069, %v2067
    %v3070 = vpack.c.b16 %v2072, %v2070
    %v3071 = vpack.c.b16 %v2073, %v2071
    %v3072 = vpack.c.b16 %v2076, %v2074
    %v3073 = vpack.c.b16 %v2077, %v2075
    %v3074 = vpack.c.b16 %v2080, %v2078
    %v3075 = vpack.c.b16 %v2081, %v2079
    %v3076 = vpack.c.b16 %v2084, %v2082
    %v3077 = vpack.c.b16 %v2085, %v2083
    %v3078 = vpack.c.b16 %v2088, %v2086
    %v3079 = vpack.c.b16 %v2089, %v2087
    %v3080 = vpack.c.b16 %v2092, %v2090
    %v3081 = vpack.c.b16 %v2093, %v2091
    %v3082 = vpack.c.b16 %v2096, %v2094
    %v3083 = vpack.c.b16 %v2097, %v2095
    %v3084 = vpack.c.b16 %v2100, %v2098
    %v3085 = vpack.c.b16 %v2101, %v2099
    %v3086 = vpack.c.b16 %v2104, %v2102
    %v3087 = vpack.c.b16 %v2105, %v2103
    %v3088 = vpack.c.b16 %v2108, %v2106
    %v3089 = vpack.c.b16 %v2109, %v2107
    %v3090 = vpack.c.b16 %v2112, %v2110
    %v3091 = vpack.c.b16 %v2113, %v2111
    %v3092 = vpack.c.b16 %v2116, %v2114
    %v3093 = vpack.c.b16 %v2117, %v2115
    %v3094 = vpack.c.b16 %v2120, %v2118
    %v3095 = vpack.c.b16 %v2121, %v2119
    %v3096 = vpack.c.b16 %v2124, %v2122
    %v3097 = vpack.c.b16 %v2125, %v2123
    %v3098 = vpack.c.b16 %v2128, %v2126
    %v3099 = vpack.c.b16 %v2129, %v2127
    %v3100 = vpack.c.b16 %v2132, %v2130
    %v3101 = vpack.c.b16 %v2133, %v2131
    %v3102 = vpack.c.b16 %v2136, %v2134
    %v3103 = vpack.c.b16 %v2137, %v2135
    %v3104 = vpack.c.b16 %v2140, %v2138
    %v3105 = vpack.c.b16 %v2141, %v2139
    %v3106 = vpack.c.b16 %v2144, %v2142
    %v3107 = vpack.c.b16 %v2145, %v2143
    %v3108 = vpack.c.b16 %v2148, %v2146
    %v3109 = vpack.c.b16 %v2149, %v2147
    %v3110 = vpack.c.b16 %v2152, %v2150
    %v3111 = vpack.c.b16 %v2153, %v2151
    %v3112 = vpack.c.b16 %v2156, %v2154
    %v3113 = vpack.c.b16 %v2157, %v2155
    %v3114 = vpack.c.b16 %v2160, %v2158
    %v3115 = vpack.c.b16 %v2161, %v2159
    %v3116 = vpack.c.b16 %v2164, %v2162
    %v3117 = vpack.c.b16 %v2165, %v2163
    %v3118 = vpack.c.b16 %v2168, %v2166
    %v3119 = vpack.c.b16 %v2169, %v2167
    %v3120 = vpack.c.b16 %v2172, %v2170
    %v3121 = vpack.c.b16 %v2173, %v2171
    %v3122 = vpack.c.b16 %v2176, %v2174
    %v3123 = vpack.c.b16 %v2177, %v2175
    %v3124 = vpack.c.b16 %v2180, %v2178
    %v3125 = vpack.c.b16 %v2181, %v2179
    %v3126 = vpack.c.b16 %v2184, %v2182
    %v3127 = vpack.c.b16 %v2185, %v2183
    %v3128 = vpack.c.b16 %v2188, %v2186
    %v3129 = vpack.c.b16 %v2189, %v2187
    %v3130 = vpack.c.b16 %v2192, %v2190
    %v3131 = vpack.c.b16 %v2193, %v2191
    %v3132 = vpack.c.b16 %v2196, %v2194
    %v3133 = vpack.c.b16 %v2197, %v2195
    %v3134 = vpack.c.b16 %v2200, %v2198
    %v3135 = vpack.c.b16 %v2201, %v2199
    %v3136 = vpack.c.b16 %v2204, %v2202
    %v3137 = vpack.c.b16 %v2205, %v2203
    %v3138 = vpack.c.b16 %v2208, %v2206
    %v3139 = vpack.c.b16 %v2209, %v2207
    %v3140 = vpack.c.b16 %v2212, %v2210
    %v3141 = vpack.c.b16 %v2213, %v2211
    %v3142 = vpack.c.b16 %v2216, %v2214
    %v3143 = vpack.c.b16 %v2217, %v2215
    %v3144 = vpack.c.b16 %v2220, %v2218
    %v3145 = vpack.c.b16 %v2221, %v2219
    %v3146 = vpack.c.b16 %v2224, %v2222
    %v3147 = vpack.c.b16 %v2225, %v2223
    %v3148 = vpack.c.b16 %v2228, %v2226
    %v3149 = vpack.c.b16 %v2229, %v2227
    %v3150 = vpack.c.b16 %v2232, %v2230
    %v3151 = vpack.c.b16 %v2233, %v2231
    %v3152 = vpack.c.b16 %v2236, %v2234
    %v3153 = vpack.c.b16 %v2237, %v2235
    %v3154 = vpack.c.b16 %v2240, %v2238
    %v3155 = vpack.c.b16 %v2241, %v2239
    %v3156 = vpack.c.b16 %v2244, %v2242
    %v3157 = vpack.c.b16 %v2245, %v2243
    %v3158 = vpack.c.b16 %v2248, %v2246
    %v3159 = vpack.c.b16 %v2249, %v2247
    %v3160 = vpack.c.b16 %v2252, %v2250
    %v3161 = vpack.c.b16 %v2253, %v2251
    %v3162 = vpack.c.b16 %v2256, %v2254
    %v3163 = vpack.c.b16 %v2257, %v2255
    %v3164 = vpack.c.b16 %v2260, %v2258
    %v3165 = vpack.c.b16 %v2261, %v2259
    %v3166 = vpack.c.b16 %v2264, %v2262
    %v3167 = vpack.c.b16 %v2265, %v2263
    %v3168 = vpack.c.b16 %v2268, %v2266
    %v3169 = vpack.c.b16 %v2269, %v2267
    %v3170 = vpack.c.b16 %v2272, %v2270
    %v3171 = vpack.c.b16 %v2273, %v2271
    %v3172 = vpack.c.b16 %v2276, %v2274
    %v3173 = vpack.c.b16 %v2277, %v2275
    %v3174 = vpack.c.b16 %v2280, %v2278
    %v3175 = vpack.c.b16 %v2281, %v2279
    %v3176 = vpack.c.b16 %v2284, %v2282
    %v3177 = vpack.c.b16 %v2285, %v2283
    %v3178 = vpack.c.b16 %v2288, %v2286
    %v3179 = vpack.c.b16 %v2289, %v2287
    %v3180 = vpack.c.b16 %v2292, %v2290
    %v3181 = vpack.c.b16 %v2293, %v2291
    %v3182 = vpack.c.b16 %v2296, %v2294
    %v3183 = vpack.c.b16 %v2297, %v2295
    %v3184 = vpack.c.b16 %v2300, %v2298
    %v3185 = vpack.c.b16 %v2301, %v2299
    %v3186 = vpack.c.b16 %v2304, %v2302
    %v3187 = vpack.c.b16 %v2305, %v2303
    %v3188 = vpack.c.b16 %v2308, %v2306
    %v3189 = vpack.c.b16 %v2309, %v2307
    %v3190 = vpack.c.b16 %v2312, %v2310
    %v3191 = vpack.c.b16 %v2313, %v2311
    %v3192 = vpack.c.b16 %v2316, %v2314
    %v3193 = vpack.c.b16 %v2317, %v2315
    %v3194 = vpack.c.b16 %v2320, %v2318
    %v3195 = vpack.c.b16 %v2321, %v2319
    %v3196 = vpack.c.b16 %v2324, %v2322
    %v3197 = vpack.c.b16 %v2325, %v2323
    %v3198 = vpack.c.b16 %v2328, %v2326
    %v3199 = vpack.c.b16 %v2329, %v2327
    %v3200 = vpack.c.b16 %v2332, %v2330
    %v3201 = vpack.c.b16 %v2333, %v2331
    %v3202 = vpack.c.b16 %v2336, %v2334
    %v3203 = vpack.c.b16 %v2337, %v2335
    %v3204 = vpack.c.b16 %v2340, %v2338
    %v3205 = vpack.c.b16 %v2341, %v2339
    %v3206 = vpack.c.b16 %v2344, %v2342
    %v3207 = vpack.c.b16 %v2345, %v2343
    %v3208 = vpack.c.b16 %v2348, %v2346
    %v3209 = vpack.c.b16 %v2349, %v2347
    %v3210 = vpack.c.b16 %v2352, %v2350
    %v3211 = vpack.c.b16 %v2353, %v2351
    %v3212 = vpack.c.b16 %v2356, %v2354
    %v3213 = vpack.c.b16 %v2357, %v2355
    %v3214 = vpack.c.b16 %v2360, %v2358
    %v3215 = vpack.c.b16 %v2361, %v2359
    %v3216 = vpack.c.b16 %v2364, %v2362
    %v3217 = vpack.c.b16 %v2365, %v2363
    %v3218 = vpack.c.b16 %v2368, %v2366
    %v3219 = vpack.c.b16 %v2369, %v2367
    %v3220 = vpack.c.b16 %v2372, %v2370
    %v3221 = vpack.c.b16 %v2373, %v2371
    %v3222 = vpack.c.b16 %v2376, %v2374
    %v3223 = vpack.c.b16 %v2377, %v2375
    %v3224 = vpack.c.b16 %v2380, %v2378
    %v3225 = vpack.c.b16 %v2381, %v2379
    %v3226 = vpack.c.b16 %v2384, %v2382
    %v3227 = vpack.c.b16 %v2385, %v2383
    %v3228 = vpack.c.b16 %v2388, %v2386
    %v3229 = vpack.c.b16 %v2389, %v2387
    %v3230 = vpack.c.b16 %v2392, %v2390
    %v3231 = vpack.c.b16 %v2393, %v2391
    %v3232 = vpack.c.b16 %v2396, %v2394
    %v3233 = vpack.c.b16 %v2397, %v2395
    %v3234 = vpack.c.b16 %v2400, %v2398
    %v3235 = vpack.c.b16 %v2401, %v2399
    %v3236 = vpack.c.b16 %v2404, %v2402
    %v3237 = vpack.c.b16 %v2405, %v2403
    %v3238 = vpack.c.b16 %v2408, %v2406
    %v3239 = vpack.c.b16 %v2409, %v2407
    %v3240 = vpack.c.b16 %v2412, %v2410
    %v3241 = vpack.c.b16 %v2413, %v2411
    %v3242 = vpack.c.b16 %v2416, %v2414
    %v3243 = vpack.c.b16 %v2417, %v2415
    %v3244 = vpack.c.b16 %v2420, %v2418
    %v3245 = vpack.c.b16 %v2421, %v2419
    %v3246 = vpack.c.b16 %v2424, %v2422
    %v3247 = vpack.c.b16 %v2425, %v2423
    %v3248 = vpack.c.b16 %v2428, %v2426
    %v3249 = vpack.c.b16 %v2429, %v2427
    %v3250 = vpack.c.b16 %v2432, %v2430
    %v3251 = vpack.c.b16 %v2433, %v2431
    %v3252 = vpack.c.b16 %v2436, %v2434
    %v3253 = vpack.c.b16 %v2437, %v2435
    %v3254 = vpack.c.b16 %v2440, %v2438
    %v3255 = vpack.c.b16 %v2441, %v2439
    %v3256 = vpack.c.b16 %v2444, %v2442
    %v3257 = vpack.c.b16 %v2445, %v2443
    %v3258 = vpack.c.b16 %v2448, %v2446
    %v3259 = vpack.c.b16 %v2449, %v2447
    %v3260 = vpack.c.b16 %v2452, %v2450
    %v3261 = vpack.c.b16 %v2453, %v2451
    %v3262 = vpack.c.b16 %v2456, %v2454
    %v3263 = vpack.c.b16 %v2457, %v2455
    %v3264 = vpack.c.b16 %v2460, %v2458
    %v3265 = vpack.c.b16 %v2461, %v2459
    %v3266 = vpack.c.b16 %v2464, %v2462
    %v3267 = vpack.c.b16 %v2465, %v2463
    %v3268 = vpack.c.b16 %v2468, %v2466
    %v3269 = vpack.c.b16 %v2469, %v2467
    %v3270 = vpack.c.b16 %v2472, %v2470
    %v3271 = vpack.c.b16 %v2473, %v2471
    %v3272 = vpack.c.b16 %v2476, %v2474
    %v3273 = vpack.c.b16 %v2477, %v2475
    %v3274 = vpack.c.b16 %v2480, %v2478
    %v3275 = vpack.c.b16 %v2481, %v2479
    %v3276 = vpack.c.b16 %v2484, %v2482
    %v3277 = vpack.c.b16 %v2485, %v2483
    %v3278 = vpack.c.b16 %v2488, %v2486
    %v3279 = vpack.c.b16 %v2489, %v2487
    %v3280 = vpack.c.b16 %v2492, %v2490
    %v3281 = vpack.c.b16 %v2493, %v2491
    %v3282 = vpack.c.b16 %v2496, %v2494
    %v3283 = vpack.c.b16 %v2497, %v2495
    %v3284 = vpack.c.b16 %v2500, %v2498
    %v3285 = vpack.c.b16 %v2501, %v2499
    %v3286 = vpack.c.b16 %v2504, %v2502
    %v3287 = vpack.c.b16 %v2505, %v2503
    %v3288 = vpack.c.b16 %v2508, %v2506
    %v3289 = vpack.c.b16 %v2509, %v2507
    %v3290 = vpack.c.b16 %v2512, %v2510
    %v3291 = vpack.c.b16 %v2513, %v2511
    %v3292 = vpack.c.b16 %v2516, %v2514
    %v3293 = vpack.c.b16 %v2517, %v2515
    %v3294 = vpack.c.b16 %v2520, %v2518
    %v3295 = vpack.c.b16 %v2521, %v2519
    %v3296 = vpack.c.b16 %v2524, %v2522
    %v3297 = vpack.c.b16 %v2525, %v2523
    %v3298 = vpack.c.b16 %v2528, %v2526
    %v3299 = vpack.c.b16 %v2529, %v2527
    %v3300 = vpack.c.b16 %v2532, %v2530
    %v3301 = vpack.c.b16 %v2533, %v2531
    %v3302 = vpack.c.b16 %v2536, %v2534
    %v3303 = vpack.c.b16 %v2537, %v2535
    %v3304 = vpack.c.b16 %v2540, %v2538
    %v3305 = vpack.c.b16 %v2541, %v2539
    %v3306 = vpack.c.b16 %v2544, %v2542
    %v3307 = vpack.c.b16 %v2545, %v2543
    %v3308 = vpack.c.b16 %v2548, %v2546
    %v3309 = vpack.c.b16 %v2549, %v2547
    %v3310 = vpack.c.b16 %v2552, %v2550
    %v3311 = vpack.c.b16 %v2553, %v2551
    %v3312 = vpack.c.b16 %v2556, %v2554
    %v3313 = vpack.c.b16 %v2557, %v2555
    %v3314 = vpack.c.b16 %v2560, %v2558
    %v3315 = vpack.c.b16 %v2561, %v2559
    %v3316 = vpack.c.b16 %v2564, %v2562
    %v3317 = vpack.c.b16 %v2565, %v2563
    %v3318 = vpack.c.b16 %v2568, %v2566
    %v3319 = vpack.c.b16 %v2569, %v2567
    %v3320 = vpack.c.b16 %v2572, %v2570
    %v3321 = vpack.c.b16 %v2573, %v2571
    %v3322 = vpack.c.b16 %v2576, %v2574
    %v3323 = vpack.c.b16 %v2577, %v2575
    %v3324 = vpack.c.b16 %v2580, %v2578
    %v3325 = vpack.c.b16 %v2581, %v2579
    %v3326 = vpack.c.b16 %v2584, %v2582
    %v3327 = vpack.c.b16 %v2585, %v2583
    %v3328 = vpack.c.b16 %v2588, %v2586
    %v3329 = vpack.c.b16 %v2589, %v2587
    %v3330 = vpack.c.b16 %v2592, %v2590
    %v3331 = vpack.c.b16 %v2593, %v2591
    %v3332 = vpack.c.b16 %v2596, %v2594
    %v3333 = vpack.c.b16 %v2597, %v2595
    %v3334 = vpack.c.b16 %v2600, %v2598
    %v3335 = vpack.c.b16 %v2601, %v2599
    %v3336 = vpack.c.b16 %v2604, %v2602
    %v3337 = vpack.c.b16 %v2605, %v2603
    %v3338 = vpack.c.b16 %v2608, %v2606
    %v3339 = vpack.c.b16 %v2609, %v2607
    %v3340 = vpack.c.b16 %v2612, %v2610
    %v3341 = vpack.c.b16 %v2613, %v2611
    %v3342 = vpack.c.b16 %v2616, %v2614
    %v3343 = vpack.c.b16 %v2617, %v2615
    %v3344 = vpack.c.b16 %v2620, %v2618
    %v3345 = vpack.c.b16 %v2621, %v2619
    %v3346 = vpack.c.b16 %v2624, %v2622
    %v3347 = vpack.c.b16 %v2625, %v2623
    %v3348 = vpack.c.b16 %v2628, %v2626
    %v3349 = vpack.c.b16 %v2629, %v2627
    %v3350 = vpack.c.b16 %v2632, %v2630
    %v3351 = vpack.c.b16 %v2633, %v2631
    %v3352 = vpack.c.b16 %v2636, %v2634
    %v3353 = vpack.c.b16 %v2637, %v2635
    %v3354 = vpack.c.b16 %v2640, %v2638
    %v3355 = vpack.c.b16 %v2641, %v2639
    %v3356 = vpack.c.b16 %v2644, %v2642
    %v3357 = vpack.c.b16 %v2645, %v2643
    %v3358 = vpack.c.b16 %v2648, %v2646
    %v3359 = vpack.c.b16 %v2649, %v2647
    %v3360 = vpack.c.b16 %v2652, %v2650
    %v3361 = vpack.c.b16 %v2653, %v2651
    %v3362 = vpack.c.b16 %v2656, %v2654
    %v3363 = vpack.c.b16 %v2657, %v2655
    %v3364 = vpack.c.b16 %v2660, %v2658
    %v3365 = vpack.c.b16 %v2661, %v2659
    %v3366 = vpack.c.b16 %v2664, %v2662
    %v3367 = vpack.c.b16 %v2665, %v2663
    %v3368 = vpack.c.b16 %v2668, %v2666
    %v3369 = vpack.c.b16 %v2669, %v2667
    %v3370 = vpack.c.b16 %v2672, %v2670
    %v3371 = vpack.c.b16 %v2673, %v2671
    %v3372 = vpack.c.b16 %v2676, %v2674
    %v3373 = vpack.c.b16 %v2677, %v2675
    %v3374 = vpack.c.b16 %v2680, %v2678
    %v3375 = vpack.c.b16 %v2681, %v2679
    %v3376 = vpack.c.b16 %v2684, %v2682
    %v3377 = vpack.c.b16 %v2685, %v2683
    %v3378 = vpack.c.b16 %v2688, %v2686
    %v3379 = vpack.c.b16 %v2689, %v2687
    %v3380 = vpack.c.b16 %v2692, %v2690
    %v3381 = vpack.c.b16 %v2693, %v2691
    %v3382 = vpack.c.b16 %v2696, %v2694
    %v3383 = vpack.c.b16 %v2697, %v2695
    %v3384 = vpack.c.b16 %v2700, %v2698
    %v3385 = vpack.c.b16 %v2701, %v2699
    %v3386 = vpack.c.b16 %v2704, %v2702
    %v3387 = vpack.c.b16 %v2705, %v2703
    %v3388 = vpack.c.b16 %v2708, %v2706
    %v3389 = vpack.c.b16 %v2709, %v2707
    %v3390 = vpack.c.b16 %v2712, %v2710
    %v3391 = vpack.c.b16 %v2713, %v2711
    %v3392 = vpack.c.b16 %v2716, %v2714
    %v3393 = vpack.c.b16 %v2717, %v2715
    %v3394 = vpack.c.b16 %v2720, %v2718
    %v3395 = vpack.c.b16 %v2721, %v2719
    %v3396 = vpack.c.b16 %v2724, %v2722
    %v3397 = vpack.c.b16 %v2725, %v2723
    %v3398 = vpack.c.b16 %v2728, %v2726
    %v3399 = vpack.c.b16 %v2729, %v2727
    %v3400 = vpack.c.b16 %v2732, %v2730
    %v3401 = vpack.c.b16 %v2733, %v2731
    %v3402 = vpack.c.b16 %v2736, %v2734
    %v3403 = vpack.c.b16 %v2737, %v2735
    %v3404 = vpack.c.b16 %v2740, %v2738
    %v3405 = vpack.c.b16 %v2741, %v2739
    %v3406 = vpack.c.b16 %v2744, %v2742
    %v3407 = vpack.c.b16 %v2745, %v2743
    %v3408 = vpack.c.b16 %v2748, %v2746
    %v3409 = vpack.c.b16 %v2749, %v2747
    %v3410 = vpack.c.b16 %v2752, %v2750
    %v3411 = vpack.c.b16 %v2753, %v2751
    %v3412 = vpack.c.b16 %v2756, %v2754
    %v3413 = vpack.c.b16 %v2757, %v2755
    %v3414 = vpack.c.b16 %v2760, %v2758
    %v3415 = vpack.c.b16 %v2761, %v2759
    %v3416 = vpack.c.b16 %v2764, %v2762
    %v3417 = vpack.c.b16 %v2765, %v2763
    %v3418 = vpack.c.b16 %v2768, %v2766
    %v3419 = vpack.c.b16 %v2769, %v2767
    %v3420 = vpack.c.b16 %v2772, %v2770
    %v3421 = vpack.c.b16 %v2773, %v2771
    %v3422 = vpack.c.b16 %v2776, %v2774
    %v3423 = vpack.c.b16 %v2777, %v2775
    %v3424 = vpack.c.b16 %v2780, %v2778
    %v3425 = vpack.c.b16 %v2781, %v2779
    %v3426 = vpack.c.b16 %v2784, %v2782
    %v3427 = vpack.c.b16 %v2785, %v2783
    %v3428 = vpack.c.b16 %v2788, %v2786
    %v3429 = vpack.c.b16 %v2789, %v2787
    %v3430 = vpack.c.b16 %v2792, %v2790
    %v3431 = vpack.c.b16 %v2793, %v2791
    %v3432 = vpack.c.b16 %v2796, %v2794
    %v3433 = vpack.c.b16 %v2797, %v2795
    %v3434 = vpack.c.b16 %v2800, %v2798
    %v3435 = vpack.c.b16 %v2801, %v2799
    %v3436 = vpack.c.b16 %v2804, %v2802
    %v3437 = vpack.c.b16 %v2805, %v2803
    %v3438 = vpack.c.b16 %v2808, %v2806
    %v3439 = vpack.c.b16 %v2809, %v2807
    %v3440 = vpack.c.b16 %v2812, %v2810
    %v3441 = vpack.c.b16 %v2813, %v2811
    %v3442 = vpack.c.b16 %v2816, %v2814
    %v3443 = vpack.c.b16 %v2817, %v2815
    %v3444 = vpack.c.b16 %v2820, %v2818
    %v3445 = vpack.c.b16 %v2821, %v2819
    %v3446 = vpack.c.b16 %v2824, %v2822
    %v3447 = vpack.c.b16 %v2825, %v2823
    %v3448 = vpack.c.b16 %v2828, %v2826
    %v3449 = vpack.c.b16 %v2829, %v2827
    %v3450 = vpack.c.b16 %v2832, %v2830
    %v3451 = vpack.c.b16 %v2833, %v2831
    %v3452 = vpack.c.b16 %v2836, %v2834
    %v3453 = vpack.c.b16 %v2837, %v2835
    %v3454 = vpack.c.b16 %v2840, %v2838
    %v3455 = vpack.c.b16 %v2841, %v2839
    %v3456 = vpack.c.b16 %v2844, %v2842
    %v3457 = vpack.c.b16 %v2845, %v2843
    %v3458 = vpack.c.b16 %v2848, %v2846
    %v3459 = vpack.c.b16 %v2849, %v2847
    %v3460 = vpack.c.b16 %v2852, %v2850
    %v3461 = vpack.c.b16 %v2853, %v2851
    %v3462 = vpack.c.b16 %v2856, %v2854
    %v3463 = vpack.c.b16 %v2857, %v2855
    %v3464 = vpack.c.b16 %v2860, %v2858
    %v3465 = vpack.c.b16 %v2861, %v2859
    %v3466 = vpack.c.b16 %v2864, %v2862
    %v3467 = vpack.c.b16 %v2865, %v2863
    %v3468 = vpack.c.b16 %v2868, %v2866
    %v3469 = vpack.c.b16 %v2869, %v2867
    %v3470 = vpack.c.b16 %v2872, %v2870
    %v3471 = vpack.c.b16 %v2873, %v2871
    %v3472 = vpack.c.b16 %v2876, %v2874
    %v3473 = vpack.c.b16 %v2877, %v2875
    %v3474 = vpack.c.b16 %v2880, %v2878
    %v3475 = vpack.c.b16 %v2881, %v2879
    %v3476 = vpack.c.b16 %v2884, %v2882
    %v3477 = vpack.c.b16 %v2885, %v2883
    %v3478 = vpack.c.b16 %v2888, %v2886
    %v3479 = vpack.c.b16 %v2889, %v2887
    %v3480 = vpack.c.b16 %v2892, %v2890
    %v3481 = vpack.c.b16 %v2893, %v2891
    %v3482 = vpack.c.b16 %v2896, %v2894
    %v3483 = vpack.c.b16 %v2897, %v2895
    %v3484 = vpack.c.b16 %v2900, %v2898
    %v3485 = vpack.c.b16 %v2901, %v2899
    %v3486 = vpack.c.b16 %v2904, %v2902
    %v3487 = vpack.c.b16 %v2905, %v2903
    %v3488 = vpack.c.b16 %v2908, %v2906
    %v3489 = vpack.c.b16 %v2909, %v2907
    %v3490 = vpack.c.b16 %v2912, %v2910
    %v3491 = vpack.c.b16 %v2913, %v2911
    %v3492 = vpack.c.b16 %v2916, %v2914
    %v3493 = vpack.c.b16 %v2917, %v2915
    %4070 = vmatprep.subr.bf16.mxu0 %v2919
    %4071 = vmatpush1.bf16.msra.mxu0 %v2918
    %4072 = vmatprep.subr.bf16.mxu0 %v2921
    %4073 = vmatpush1.bf16.msra.mxu0 %v2920
    %4074 = vmatprep.subr.bf16.mxu0 %v2923
    %4075 = vmatpush1.bf16.msra.mxu0 %v2922
    %4076 = vmatprep.subr.bf16.mxu0 %v2925
    %4077 = vmatpush1.bf16.msra.mxu0 %v2924
    %4078 = vmatprep.subr.bf16.mxu0 %v2927
    %4079 = vmatpush1.bf16.msra.mxu0 %v2926
    %4080 = vmatprep.subr.bf16.mxu0 %v2929
    %4081 = vmatpush1.bf16.msra.mxu0 %v2928
    %4082 = vmatprep.subr.bf16.mxu0 %v2931
    %4083 = vmatpush1.bf16.msra.mxu0 %v2930
    %4084 = vmatprep.subr.bf16.mxu0 %v2933
    %4085 = vmatpush1.bf16.msra.mxu0 %v2932
    %4086 = vmatprep.subr.bf16.mxu0 %v2935
    %4087 = vmatpush1.bf16.msra.mxu0 %v2934
    %4088 = vmatprep.subr.bf16.mxu0 %v2937
    %4089 = vmatpush1.bf16.msra.mxu0 %v2936
    %4090 = vmatprep.subr.bf16.mxu0 %v2939
    %4091 = vmatpush1.bf16.msra.mxu0 %v2938
    %4092 = vmatprep.subr.bf16.mxu0 %v2941
    %4093 = vmatpush1.bf16.msra.mxu0 %v2940
    %4094 = vmatprep.subr.bf16.mxu0 %v2943
    %4095 = vmatpush1.bf16.msra.mxu0 %v2942
    %4096 = vmatprep.subr.bf16.mxu0 %v2945
    %4097 = vmatpush1.bf16.msra.mxu0 %v2944
    %4098 = vmatprep.subr.bf16.mxu0 %v2947
    %4099 = vmatpush1.bf16.msra.mxu0 %v2946
    %4100 = vmatprep.subr.bf16.mxu0 %v2949
    %4101 = vmatpush1.bf16.msra.mxu0 %v2948
    %4102 = vmatprep.mubr.bf16.mxu0 %v1047
    %4103 = vmatmul.mubr.bf16.gmra.mrb[0].mxu0 %v1046
    %v4104 = vpop.f32.mrb[0].mxu0
    %v4105 = vadd.f32 %v823, %v4104
    %v4106 = vpop.f32.mrb[0].mxu0
    %v4107 = vadd.f32 %v827, %v4106
    %v4108 = vpop.f32.mrb[0].mxu0
    %v4109 = vadd.f32 %v823, %v4108
    %v4110 = vpop.f32.mrb[0].mxu0
    %v4111 = vadd.f32 %v827, %v4110
    %4112 = vmatprep.mubr.bf16.mxu0 %v1083
    %4113 = vmatmul.mubr.bf16.gmra.mrb[0].mxu0 %v1082
    %v4114 = vpop.f32.mrb[0].mxu0
    %v4115 = vadd.f32 %v823, %v4114
    %v4116 = vpop.f32.mrb[0].mxu0
    %v4117 = vadd.f32 %v827, %v4116
    %v4118 = vpop.f32.mrb[0].mxu0
    %v4119 = vadd.f32 %v823, %v4118
    %v4120 = vpop.f32.mrb[0].mxu0
    %v4121 = vadd.f32 %v827, %v4120
    %4122 = vdwg.mxu0
    %4123 = vmatprep.subr.bf16.mxu0 %v2951
    %4124 = vmatpush1.bf16.msra.mxu0 %v2950
    %4125 = vmatprep.subr.bf16.mxu0 %v2953
    %4126 = vmatpush1.bf16.msra.mxu0 %v2952
    %4127 = vmatprep.subr.bf16.mxu0 %v2955
    %4128 = vmatpush1.bf16.msra.mxu0 %v2954
    %4129 = vmatprep.subr.bf16.mxu0 %v2957
    %4130 = vmatpush1.bf16.msra.mxu0 %v2956
    %4131 = vmatprep.subr.bf16.mxu0 %v2959
    %4132 = vmatpush1.bf16.msra.mxu0 %v2958
    %4133 = vmatprep.subr.bf16.mxu0 %v2961
    %4134 = vmatpush1.bf16.msra.mxu0 %v2960
    %4135 = vmatprep.subr.bf16.mxu0 %v2963
    %4136 = vmatpush1.bf16.msra.mxu0 %v2962
    %4137 = vmatprep.subr.bf16.mxu0 %v2965
    %4138 = vmatpush1.bf16.msra.mxu0 %v2964
    %4139 = vmatprep.subr.bf16.mxu0 %v2967
    %4140 = vmatpush1.bf16.msra.mxu0 %v2966
    %4141 = vmatprep.subr.bf16.mxu0 %v2969
    %4142 = vmatpush1.bf16.msra.mxu0 %v2968
    %4143 = vmatprep.subr.bf16.mxu0 %v2971
    %4144 = vmatpush1.bf16.msra.mxu0 %v2970
    %4145 = vmatprep.subr.bf16.mxu0 %v2973
    %4146 = vmatpush1.bf16.msra.mxu0 %v2972
    %4147 = vmatprep.subr.bf16.mxu0 %v2975
    %4148 = vmatpush1.bf16.msra.mxu0 %v2974
    %4149 = vmatprep.subr.bf16.mxu0 %v2977
    %4150 = vmatpush1.bf16.msra.mxu0 %v2976
    %4151 = vmatprep.subr.bf16.mxu0 %v2979
    %4152 = vmatpush1.bf16.msra.mxu0 %v2978
    %4153 = vmatprep.subr.bf16.mxu0 %v2981
    %4154 = vmatpush1.bf16.msra.mxu0 %v2980
    %4155 = vmatprep.mubr.bf16.mxu0 %v1049
    %4156 = vmatmul.mubr.bf16.gmra.mrb[0].mxu0 %v1048
    %v4157 = vpop.f32.mrb[0].mxu0
    %v4158 = vadd.f32 %v4105, %v4157
    %v4159 = vpop.f32.mrb[0].mxu0
    %v4160 = vadd.f32 %v4107, %v4159
    %v4161 = vpop.f32.mrb[0].mxu0
    %v4162 = vadd.f32 %v4109, %v4161
    %v4163 = vpop.f32.mrb[0].mxu0
    %v4164 = vadd.f32 %v4111, %v4163
    %4165 = vmatprep.mubr.bf16.mxu0 %v1085
    %4166 = vmatmul.mubr.bf16.gmra.mrb[0].mxu0 %v1084
    %v4167 = vpop.f32.mrb[0].mxu0
    %v4168 = vadd.f32 %v4115, %v4167
    %v4169 = vpop.f32.mrb[0].mxu0
    %v4170 = vadd.f32 %v4117, %v4169
    %v4171 = vpop.f32.mrb[0].mxu0
    %v4172 = vadd.f32 %v4119, %v4171
    %v4173 = vpop.f32.mrb[0].mxu0
    %v4174 = vadd.f32 %v4121, %v4173
    %4175 = vdwg.mxu0
    %4176 = vmatprep.subr.bf16.mxu0 %v2983
    %4177 = vmatpush1.bf16.msra.mxu0 %v2982
    %4178 = vmatprep.subr.bf16.mxu0 %v2985
    %4179 = vmatpush1.bf16.msra.mxu0 %v2984
    %4180 = vmatprep.subr.bf16.mxu0 %v2987
    %4181 = vmatpush1.bf16.msra.mxu0 %v2986
    %4182 = vmatprep.subr.bf16.mxu0 %v2989
    %4183 = vmatpush1.bf16.msra.mxu0 %v2988
    %4184 = vmatprep.subr.bf16.mxu0 %v2991
    %4185 = vmatpush1.bf16.msra.mxu0 %v2990
    %4186 = vmatprep.subr.bf16.mxu0 %v2993
    %4187 = vmatpush1.bf16.msra.mxu0 %v2992
    %4188 = vmatprep.subr.bf16.mxu0 %v2995
    %4189 = vmatpush1.bf16.msra.mxu0 %v2994
    %4190 = vmatprep.subr.bf16.mxu0 %v2997
    %4191 = vmatpush1.bf16.msra.mxu0 %v2996
    %4192 = vmatprep.subr.bf16.mxu0 %v2999
    %4193 = vmatpush1.bf16.msra.mxu0 %v2998
    %4194 = vmatprep.subr.bf16.mxu0 %v3001
    %4195 = vmatpush1.bf16.msra.mxu0 %v3000
    %4196 = vmatprep.subr.bf16.mxu0 %v3003
    %4197 = vmatpush1.bf16.msra.mxu0 %v3002
    %4198 = vmatprep.subr.bf16.mxu0 %v3005
    %4199 = vmatpush1.bf16.msra.mxu0 %v3004
    %4200 = vmatprep.subr.bf16.mxu0 %v3007
    %4201 = vmatpush1.bf16.msra.mxu0 %v3006
    %4202 = vmatprep.subr.bf16.mxu0 %v3009
    %4203 = vmatpush1.bf16.msra.mxu0 %v3008
    %4204 = vmatprep.subr.bf16.mxu0 %v3011
    %4205 = vmatpush1.bf16.msra.mxu0 %v3010
    %4206 = vmatprep.subr.bf16.mxu0 %v3013
    %4207 = vmatpush1.bf16.msra.mxu0 %v3012
    %4208 = vmatprep.mubr.bf16.mxu0 %v1051
    %4209 = vmatmul.mubr.bf16.gmra.mrb[0].mxu0 %v1050
    %v4210 = vpop.f32.mrb[0].mxu0
    %v4211 = vadd.f32 %v4158, %v4210
    %v4212 = vpop.f32.mrb[0].mxu0
    %v4213 = vadd.f32 %v4160, %v4212
    %v4214 = vpop.f32.mrb[0].mxu0
    %v4215 = vadd.f32 %v4162, %v4214
    %v4216 = vpop.f32.mrb[0].mxu0
    %v4217 = vadd.f32 %v4164, %v4216
    %4218 = vmatprep.mubr.bf16.mxu0 %v1087
    %4219 = vmatmul.mubr.bf16.gmra.mrb[0].mxu0 %v1086
    %v4220 = vpop.f32.mrb[0].mxu0
    %v4221 = vadd.f32 %v4168, %v4220
    %v4222 = vpop.f32.mrb[0].mxu0
    %v4223 = vadd.f32 %v4170, %v4222
    %v4224 = vpop.f32.mrb[0].mxu0
    %v4225 = vadd.f32 %v4172, %v4224
    %v4226 = vpop.f32.mrb[0].mxu0
    %v4227 = vadd.f32 %v4174, %v4226
    %4228 = vdwg.mxu0
    %4229 = vmatprep.subr.bf16.mxu0 %v3015
    %4230 = vmatpush1.bf16.msra.mxu0 %v3014
    %4231 = vmatprep.subr.bf16.mxu0 %v3017
    %4232 = vmatpush1.bf16.msra.mxu0 %v3016
    %4233 = vmatprep.subr.bf16.mxu0 %v3019
    %4234 = vmatpush1.bf16.msra.mxu0 %v3018
    %4235 = vmatprep.subr.bf16.mxu0 %v3021
    %4236 = vmatpush1.bf16.msra.mxu0 %v3020
    %4237 = vmatprep.subr.bf16.mxu0 %v3023
    %4238 = vmatpush1.bf16.msra.mxu0 %v3022
    %4239 = vmatprep.subr.bf16.mxu0 %v3025
    %4240 = vmatpush1.bf16.msra.mxu0 %v3024
    %4241 = vmatprep.subr.bf16.mxu0 %v3027
    %4242 = vmatpush1.bf16.msra.mxu0 %v3026
    %4243 = vmatprep.subr.bf16.mxu0 %v3029
    %4244 = vmatpush1.bf16.msra.mxu0 %v3028
    %4245 = vmatprep.subr.bf16.mxu0 %v3031
    %4246 = vmatpush1.bf16.msra.mxu0 %v3030
    %4247 = vmatprep.subr.bf16.mxu0 %v3033
    %4248 = vmatpush1.bf16.msra.mxu0 %v3032
    %4249 = vmatprep.subr.bf16.mxu0 %v3035
    %4250 = vmatpush1.bf16.msra.mxu0 %v3034
    %4251 = vmatprep.subr.bf16.mxu0 %v3037
    %4252 = vmatpush1.bf16.msra.mxu0 %v3036
    %4253 = vmatprep.subr.bf16.mxu0 %v3039
    %4254 = vmatpush1.bf16.msra.mxu0 %v3038
    %4255 = vmatprep.subr.bf16.mxu0 %v3041
    %4256 = vmatpush1.bf16.msra.mxu0 %v3040
    %4257 = vmatprep.subr.bf16.mxu0 %v3043
    %4258 = vmatpush1.bf16.msra.mxu0 %v3042
    %4259 = vmatprep.subr.bf16.mxu0 %v3045
    %4260 = vmatpush1.bf16.msra.mxu0 %v3044
    %4261 = vmatprep.mubr.bf16.mxu0 %v1053
    %4262 = vmatmul.mubr.bf16.gmra.mrb[0].mxu0 %v1052
    %v4263 = vpop.f32.mrb[0].mxu0
    %v4264 = vadd.f32 %v4211, %v4263
    %v4265 = vpop.f32.mrb[0].mxu0
    %v4266 = vadd.f32 %v4213, %v4265
    %v4267 = vpop.f32.mrb[0].mxu0
    %v4268 = vadd.f32 %v4215, %v4267
    %v4269 = vpop.f32.mrb[0].mxu0
    %v4270 = vadd.f32 %v4217, %v4269
    %4271 = vmatprep.mubr.bf16.mxu0 %v1089
    %4272 = vmatmul.mubr.bf16.gmra.mrb[0].mxu0 %v1088
    %v4273 = vpop.f32.mrb[0].mxu0
    %v4274 = vadd.f32 %v4221, %v4273
    %v4275 = vpop.f32.mrb[0].mxu0
    %v4276 = vadd.f32 %v4223, %v4275
    %v4277 = vpop.f32.mrb[0].mxu0
    %v4278 = vadd.f32 %v4225, %v4277
    %v4279 = vpop.f32.mrb[0].mxu0
    %v4280 = vadd.f32 %v4227, %v4279
    %4281 = vdwg.mxu0
    %4282 = vmatprep.subr.bf16.mxu0 %v3047
    %4283 = vmatpush1.bf16.msra.mxu0 %v3046
    %4284 = vmatprep.subr.bf16.mxu0 %v3049
    %4285 = vmatpush1.bf16.msra.mxu0 %v3048
    %4286 = vmatprep.subr.bf16.mxu0 %v3051
    %4287 = vmatpush1.bf16.msra.mxu0 %v3050
    %4288 = vmatprep.subr.bf16.mxu0 %v3053
    %4289 = vmatpush1.bf16.msra.mxu0 %v3052
    %4290 = vmatprep.subr.bf16.mxu0 %v3055
    %4291 = vmatpush1.bf16.msra.mxu0 %v3054
    %4292 = vmatprep.subr.bf16.mxu0 %v3057
    %4293 = vmatpush1.bf16.msra.mxu0 %v3056
    %4294 = vmatprep.subr.bf16.mxu0 %v3059
    %4295 = vmatpush1.bf16.msra.mxu0 %v3058
    %4296 = vmatprep.subr.bf16.mxu0 %v3061
    %4297 = vmatpush1.bf16.msra.mxu0 %v3060
    %4298 = vmatprep.subr.bf16.mxu0 %v3063
    %4299 = vmatpush1.bf16.msra.mxu0 %v3062
    %4300 = vmatprep.subr.bf16.mxu0 %v3065
    %4301 = vmatpush1.bf16.msra.mxu0 %v3064
    %4302 = vmatprep.subr.bf16.mxu0 %v3067
    %4303 = vmatpush1.bf16.msra.mxu0 %v3066
    %4304 = vmatprep.subr.bf16.mxu0 %v3069
    %4305 = vmatpush1.bf16.msra.mxu0 %v3068
    %4306 = vmatprep.subr.bf16.mxu0 %v3071
    %4307 = vmatpush1.bf16.msra.mxu0 %v3070
    %4308 = vmatprep.subr.bf16.mxu0 %v3073
    %4309 = vmatpush1.bf16.msra.mxu0 %v3072
    %4310 = vmatprep.subr.bf16.mxu0 %v3075
    %4311 = vmatpush1.bf16.msra.mxu0 %v3074
    %4312 = vmatprep.subr.bf16.mxu0 %v3077
    %4313 = vmatpush1.bf16.msra.mxu0 %v3076
    %4314 = vmatprep.mubr.bf16.mxu0 %v1055
    %4315 = vmatmul.mubr.bf16.gmra.mrb[0].mxu0 %v1054
    %v4316 = vpop.f32.mrb[0].mxu0
    %v4317 = vadd.f32 %v4264, %v4316
    %v4318 = vpop.f32.mrb[0].mxu0
    %v4319 = vadd.f32 %v4266, %v4318
    %v4320 = vpop.f32.mrb[0].mxu0
    %v4321 = vadd.f32 %v4268, %v4320
    %v4322 = vpop.f32.mrb[0].mxu0
    %v4323 = vadd.f32 %v4270, %v4322
    %4324 = vmatprep.mubr.bf16.mxu0 %v1091
    %4325 = vmatmul.mubr.bf16.gmra.mrb[0].mxu0 %v1090
    %v4326 = vpop.f32.mrb[0].mxu0
    %v4327 = vadd.f32 %v4274, %v4326
    %v4328 = vpop.f32.mrb[0].mxu0
    %v4329 = vadd.f32 %v4276, %v4328
    %v4330 = vpop.f32.mrb[0].mxu0
    %v4331 = vadd.f32 %v4278, %v4330
    %v4332 = vpop.f32.mrb[0].mxu0
    %v4333 = vadd.f32 %v4280, %v4332
    %4334 = vdwg.mxu0
    %4335 = vmatprep.subr.bf16.mxu0 %v3079
    %4336 = vmatpush1.bf16.msra.mxu0 %v3078
    %4337 = vmatprep.subr.bf16.mxu0 %v3081
    %4338 = vmatpush1.bf16.msra.mxu0 %v3080
    %4339 = vmatprep.subr.bf16.mxu0 %v3083
    %4340 = vmatpush1.bf16.msra.mxu0 %v3082
    %4341 = vmatprep.subr.bf16.mxu0 %v3085
    %4342 = vmatpush1.bf16.msra.mxu0 %v3084
    %4343 = vmatprep.subr.bf16.mxu0 %v3087
    %4344 = vmatpush1.bf16.msra.mxu0 %v3086
    %4345 = vmatprep.subr.bf16.mxu0 %v3089
    %4346 = vmatpush1.bf16.msra.mxu0 %v3088
    %4347 = vmatprep.subr.bf16.mxu0 %v3091
    %4348 = vmatpush1.bf16.msra.mxu0 %v3090
    %4349 = vmatprep.subr.bf16.mxu0 %v3093
    %4350 = vmatpush1.bf16.msra.mxu0 %v3092
    %4351 = vmatprep.subr.bf16.mxu0 %v3095
    %4352 = vmatpush1.bf16.msra.mxu0 %v3094
    %4353 = vmatprep.subr.bf16.mxu0 %v3097
    %4354 = vmatpush1.bf16.msra.mxu0 %v3096
    %4355 = vmatprep.subr.bf16.mxu0 %v3099
    %4356 = vmatpush1.bf16.msra.mxu0 %v3098
    %4357 = vmatprep.subr.bf16.mxu0 %v3101
    %4358 = vmatpush1.bf16.msra.mxu0 %v3100
    %4359 = vmatprep.subr.bf16.mxu0 %v3103
    %4360 = vmatpush1.bf16.msra.mxu0 %v3102
    %4361 = vmatprep.subr.bf16.mxu0 %v3105
    %4362 = vmatpush1.bf16.msra.mxu0 %v3104
    %4363 = vmatprep.subr.bf16.mxu0 %v3107
    %4364 = vmatpush1.bf16.msra.mxu0 %v3106
    %4365 = vmatprep.subr.bf16.mxu0 %v3109
    %4366 = vmatpush1.bf16.msra.mxu0 %v3108
    %4367 = vmatprep.mubr.bf16.mxu0 %v1057
    %4368 = vmatmul.mubr.bf16.gmra.mrb[0].mxu0 %v1056
    %v4369 = vpop.f32.mrb[0].mxu0
    %v4370 = vadd.f32 %v4317, %v4369
    %v4371 = vpop.f32.mrb[0].mxu0
    %v4372 = vadd.f32 %v4319, %v4371
    %v4373 = vpop.f32.mrb[0].mxu0
    %v4374 = vadd.f32 %v4321, %v4373
    %v4375 = vpop.f32.mrb[0].mxu0
    %v4376 = vadd.f32 %v4323, %v4375
    %4377 = vmatprep.mubr.bf16.mxu0 %v1093
    %4378 = vmatmul.mubr.bf16.gmra.mrb[0].mxu0 %v1092
    %v4379 = vpop.f32.mrb[0].mxu0
    %v4380 = vadd.f32 %v4327, %v4379
    %v4381 = vpop.f32.mrb[0].mxu0
    %v4382 = vadd.f32 %v4329, %v4381
    %v4383 = vpop.f32.mrb[0].mxu0
    %v4384 = vadd.f32 %v4331, %v4383
    %v4385 = vpop.f32.mrb[0].mxu0
    %v4386 = vadd.f32 %v4333, %v4385
    %4387 = vdwg.mxu0
    %4388 = vmatprep.subr.bf16.mxu0 %v3111
    %4389 = vmatpush1.bf16.msra.mxu0 %v3110
    %4390 = vmatprep.subr.bf16.mxu0 %v3113
    %4391 = vmatpush1.bf16.msra.mxu0 %v3112
    %4392 = vmatprep.subr.bf16.mxu0 %v3115
    %4393 = vmatpush1.bf16.msra.mxu0 %v3114
    %4394 = vmatprep.subr.bf16.mxu0 %v3117
    %4395 = vmatpush1.bf16.msra.mxu0 %v3116
    %4396 = vmatprep.subr.bf16.mxu0 %v3119
    %4397 = vmatpush1.bf16.msra.mxu0 %v3118
    %4398 = vmatprep.subr.bf16.mxu0 %v3121
    %4399 = vmatpush1.bf16.msra.mxu0 %v3120
    %4400 = vmatprep.subr.bf16.mxu0 %v3123
    %4401 = vmatpush1.bf16.msra.mxu0 %v3122
    %4402 = vmatprep.subr.bf16.mxu0 %v3125
    %4403 = vmatpush1.bf16.msra.mxu0 %v3124
    %4404 = vmatprep.subr.bf16.mxu0 %v3127
    %4405 = vmatpush1.bf16.msra.mxu0 %v3126
    %4406 = vmatprep.subr.bf16.mxu0 %v3129
    %4407 = vmatpush1.bf16.msra.mxu0 %v3128
    %4408 = vmatprep.subr.bf16.mxu0 %v3131
    %4409 = vmatpush1.bf16.msra.mxu0 %v3130
    %4410 = vmatprep.subr.bf16.mxu0 %v3133
    %4411 = vmatpush1.bf16.msra.mxu0 %v3132
    %4412 = vmatprep.subr.bf16.mxu0 %v3135
    %4413 = vmatpush1.bf16.msra.mxu0 %v3134
    %4414 = vmatprep.subr.bf16.mxu0 %v3137
    %4415 = vmatpush1.bf16.msra.mxu0 %v3136
    %4416 = vmatprep.subr.bf16.mxu0 %v3139
    %4417 = vmatpush1.bf16.msra.mxu0 %v3138
    %4418 = vmatprep.subr.bf16.mxu0 %v3141
    %4419 = vmatpush1.bf16.msra.mxu0 %v3140
    %4420 = vmatprep.mubr.bf16.mxu0 %v1059
    %4421 = vmatmul.mubr.bf16.gmra.mrb[0].mxu0 %v1058
    %v4422 = vpop.f32.mrb[0].mxu0
    %v4423 = vadd.f32 %v4370, %v4422
    %v4424 = vpop.f32.mrb[0].mxu0
    %v4425 = vadd.f32 %v4372, %v4424
    %v4426 = vpop.f32.mrb[0].mxu0
    %v4427 = vadd.f32 %v4374, %v4426
    %v4428 = vpop.f32.mrb[0].mxu0
    %v4429 = vadd.f32 %v4376, %v4428
    %4430 = vmatprep.mubr.bf16.mxu0 %v1095
    %4431 = vmatmul.mubr.bf16.gmra.mrb[0].mxu0 %v1094
    %v4432 = vpop.f32.mrb[0].mxu0
    %v4433 = vadd.f32 %v4380, %v4432
    %v4434 = vpop.f32.mrb[0].mxu0
    %v4435 = vadd.f32 %v4382, %v4434
    %v4436 = vpop.f32.mrb[0].mxu0
    %v4437 = vadd.f32 %v4384, %v4436
    %v4438 = vpop.f32.mrb[0].mxu0
    %v4439 = vadd.f32 %v4386, %v4438
    %4440 = vdwg.mxu0
    %4441 = vmatprep.subr.bf16.mxu0 %v3143
    %4442 = vmatpush1.bf16.msra.mxu0 %v3142
    %4443 = vmatprep.subr.bf16.mxu0 %v3145
    %4444 = vmatpush1.bf16.msra.mxu0 %v3144
    %4445 = vmatprep.subr.bf16.mxu0 %v3147
    %4446 = vmatpush1.bf16.msra.mxu0 %v3146
    %4447 = vmatprep.subr.bf16.mxu0 %v3149
    %4448 = vmatpush1.bf16.msra.mxu0 %v3148
    %4449 = vmatprep.subr.bf16.mxu0 %v3151
    %4450 = vmatpush1.bf16.msra.mxu0 %v3150
    %4451 = vmatprep.subr.bf16.mxu0 %v3153
    %4452 = vmatpush1.bf16.msra.mxu0 %v3152
    %4453 = vmatprep.subr.bf16.mxu0 %v3155
    %4454 = vmatpush1.bf16.msra.mxu0 %v3154
    %4455 = vmatprep.subr.bf16.mxu0 %v3157
    %4456 = vmatpush1.bf16.msra.mxu0 %v3156
    %4457 = vmatprep.subr.bf16.mxu0 %v3159
    %4458 = vmatpush1.bf16.msra.mxu0 %v3158
    %4459 = vmatprep.subr.bf16.mxu0 %v3161
    %4460 = vmatpush1.bf16.msra.mxu0 %v3160
    %4461 = vmatprep.subr.bf16.mxu0 %v3163
    %4462 = vmatpush1.bf16.msra.mxu0 %v3162
    %4463 = vmatprep.subr.bf16.mxu0 %v3165
    %4464 = vmatpush1.bf16.msra.mxu0 %v3164
    %4465 = vmatprep.subr.bf16.mxu0 %v3167
    %4466 = vmatpush1.bf16.msra.mxu0 %v3166
    %4467 = vmatprep.subr.bf16.mxu0 %v3169
    %4468 = vmatpush1.bf16.msra.mxu0 %v3168
    %4469 = vmatprep.subr.bf16.mxu0 %v3171
    %4470 = vmatpush1.bf16.msra.mxu0 %v3170
    %4471 = vmatprep.subr.bf16.mxu0 %v3173
    %4472 = vmatpush1.bf16.msra.mxu0 %v3172
    %4473 = vmatprep.mubr.bf16.mxu0 %v1061
    %4474 = vmatmul.mubr.bf16.gmra.mrb[0].mxu0 %v1060
    %v4475 = vpop.f32.mrb[0].mxu0
    %v4476 = vadd.f32 %v4423, %v4475
    %v4477 = vpop.f32.mrb[0].mxu0
    %v4478 = vadd.f32 %v4425, %v4477
    %v4479 = vpop.f32.mrb[0].mxu0
    %v4480 = vadd.f32 %v4427, %v4479
    %v4481 = vpop.f32.mrb[0].mxu0
    %v4482 = vadd.f32 %v4429, %v4481
    %4483 = vmatprep.mubr.bf16.mxu0 %v1097
    %4484 = vmatmul.mubr.bf16.gmra.mrb[0].mxu0 %v1096
    %v4485 = vpop.f32.mrb[0].mxu0
    %v4486 = vadd.f32 %v4433, %v4485
    %v4487 = vpop.f32.mrb[0].mxu0
    %v4488 = vadd.f32 %v4435, %v4487
    %v4489 = vpop.f32.mrb[0].mxu0
    %v4490 = vadd.f32 %v4437, %v4489
    %v4491 = vpop.f32.mrb[0].mxu0
    %v4492 = vadd.f32 %v4439, %v4491
    %4493 = vdwg.mxu0
    %4494 = vmatprep.subr.bf16.mxu0 %v3175
    %4495 = vmatpush1.bf16.msra.mxu0 %v3174
    %4496 = vmatprep.subr.bf16.mxu0 %v3177
    %4497 = vmatpush1.bf16.msra.mxu0 %v3176
    %4498 = vmatprep.subr.bf16.mxu0 %v3179
    %4499 = vmatpush1.bf16.msra.mxu0 %v3178
    %4500 = vmatprep.subr.bf16.mxu0 %v3181
    %4501 = vmatpush1.bf16.msra.mxu0 %v3180
    %4502 = vmatprep.subr.bf16.mxu0 %v3183
    %4503 = vmatpush1.bf16.msra.mxu0 %v3182
    %4504 = vmatprep.subr.bf16.mxu0 %v3185
    %4505 = vmatpush1.bf16.msra.mxu0 %v3184
    %4506 = vmatprep.subr.bf16.mxu0 %v3187
    %4507 = vmatpush1.bf16.msra.mxu0 %v3186
    %4508 = vmatprep.subr.bf16.mxu0 %v3189
    %4509 = vmatpush1.bf16.msra.mxu0 %v3188
    %4510 = vmatprep.subr.bf16.mxu0 %v3191
    %4511 = vmatpush1.bf16.msra.mxu0 %v3190
    %4512 = vmatprep.subr.bf16.mxu0 %v3193
    %4513 = vmatpush1.bf16.msra.mxu0 %v3192
    %4514 = vmatprep.subr.bf16.mxu0 %v3195
    %4515 = vmatpush1.bf16.msra.mxu0 %v3194
    %4516 = vmatprep.subr.bf16.mxu0 %v3197
    %4517 = vmatpush1.bf16.msra.mxu0 %v3196
    %4518 = vmatprep.subr.bf16.mxu0 %v3199
    %4519 = vmatpush1.bf16.msra.mxu0 %v3198
    %4520 = vmatprep.subr.bf16.mxu0 %v3201
    %4521 = vmatpush1.bf16.msra.mxu0 %v3200
    %4522 = vmatprep.subr.bf16.mxu0 %v3203
    %4523 = vmatpush1.bf16.msra.mxu0 %v3202
    %4524 = vmatprep.subr.bf16.mxu0 %v3205
    %4525 = vmatpush1.bf16.msra.mxu0 %v3204
    %4526 = vmatprep.mubr.bf16.mxu0 %v1063
    %4527 = vmatmul.mubr.bf16.gmra.mrb[0].mxu0 %v1062
    %v4528 = vpop.f32.mrb[0].mxu0
    %v4529 = vadd.f32 %v4476, %v4528
    %v4530 = vpop.f32.mrb[0].mxu0
    %v4531 = vadd.f32 %v4478, %v4530
    %v4532 = vpop.f32.mrb[0].mxu0
    %v4533 = vadd.f32 %v4480, %v4532
    %v4534 = vpop.f32.mrb[0].mxu0
    %v4535 = vadd.f32 %v4482, %v4534
    %4536 = vmatprep.mubr.bf16.mxu0 %v1099
    %4537 = vmatmul.mubr.bf16.gmra.mrb[0].mxu0 %v1098
    %v4538 = vpop.f32.mrb[0].mxu0
    %v4539 = vadd.f32 %v4486, %v4538
    %v4540 = vpop.f32.mrb[0].mxu0
    %v4541 = vadd.f32 %v4488, %v4540
    %v4542 = vpop.f32.mrb[0].mxu0
    %v4543 = vadd.f32 %v4490, %v4542
    %v4544 = vpop.f32.mrb[0].mxu0
    %v4545 = vadd.f32 %v4492, %v4544
    %4546 = vdwg.mxu0
    %4547 = vmatprep.subr.bf16.mxu0 %v3207
    %4548 = vmatpush1.bf16.msra.mxu0 %v3206
    %4549 = vmatprep.subr.bf16.mxu0 %v3209
    %4550 = vmatpush1.bf16.msra.mxu0 %v3208
    %4551 = vmatprep.subr.bf16.mxu0 %v3211
    %4552 = vmatpush1.bf16.msra.mxu0 %v3210
    %4553 = vmatprep.subr.bf16.mxu0 %v3213
    %4554 = vmatpush1.bf16.msra.mxu0 %v3212
    %4555 = vmatprep.subr.bf16.mxu0 %v3215
    %4556 = vmatpush1.bf16.msra.mxu0 %v3214
    %4557 = vmatprep.subr.bf16.mxu0 %v3217
    %4558 = vmatpush1.bf16.msra.mxu0 %v3216
    %4559 = vmatprep.subr.bf16.mxu0 %v3219
    %4560 = vmatpush1.bf16.msra.mxu0 %v3218
    %4561 = vmatprep.subr.bf16.mxu0 %v3221
    %4562 = vmatpush1.bf16.msra.mxu0 %v3220
    %4563 = vmatprep.subr.bf16.mxu0 %v3223
    %4564 = vmatpush1.bf16.msra.mxu0 %v3222
    %4565 = vmatprep.subr.bf16.mxu0 %v3225
    %4566 = vmatpush1.bf16.msra.mxu0 %v3224
    %4567 = vmatprep.subr.bf16.mxu0 %v3227
    %4568 = vmatpush1.bf16.msra.mxu0 %v3226
    %4569 = vmatprep.subr.bf16.mxu0 %v3229
    %4570 = vmatpush1.bf16.msra.mxu0 %v3228
    %4571 = vmatprep.subr.bf16.mxu0 %v3231
    %4572 = vmatpush1.bf16.msra.mxu0 %v3230
    %4573 = vmatprep.subr.bf16.mxu0 %v3233
    %4574 = vmatpush1.bf16.msra.mxu0 %v3232
    %4575 = vmatprep.subr.bf16.mxu0 %v3235
    %4576 = vmatpush1.bf16.msra.mxu0 %v3234
    %4577 = vmatprep.subr.bf16.mxu0 %v3237
    %4578 = vmatpush1.bf16.msra.mxu0 %v3236
    %4579 = vmatprep.mubr.bf16.mxu0 %v1065
    %4580 = vmatmul.mubr.bf16.gmra.mrb[0].mxu0 %v1064
    %v4581 = vpop.f32.mrb[0].mxu0
    %v4582 = vadd.f32 %v4529, %v4581
    %v4583 = vpop.f32.mrb[0].mxu0
    %v4584 = vadd.f32 %v4531, %v4583
    %v4585 = vpop.f32.mrb[0].mxu0
    %v4586 = vadd.f32 %v4533, %v4585
    %v4587 = vpop.f32.mrb[0].mxu0
    %v4588 = vadd.f32 %v4535, %v4587
    %4589 = vmatprep.mubr.bf16.mxu0 %v1101
    %4590 = vmatmul.mubr.bf16.gmra.mrb[0].mxu0 %v1100
    %v4591 = vpop.f32.mrb[0].mxu0
    %v4592 = vadd.f32 %v4539, %v4591
    %v4593 = vpop.f32.mrb[0].mxu0
    %v4594 = vadd.f32 %v4541, %v4593
    %v4595 = vpop.f32.mrb[0].mxu0
    %v4596 = vadd.f32 %v4543, %v4595
    %v4597 = vpop.f32.mrb[0].mxu0
    %v4598 = vadd.f32 %v4545, %v4597
    %4599 = vdwg.mxu0
    %4600 = vmatprep.subr.bf16.mxu0 %v3239
    %4601 = vmatpush1.bf16.msra.mxu0 %v3238
    %4602 = vmatprep.subr.bf16.mxu0 %v3241
    %4603 = vmatpush1.bf16.msra.mxu0 %v3240
    %4604 = vmatprep.subr.bf16.mxu0 %v3243
    %4605 = vmatpush1.bf16.msra.mxu0 %v3242
    %4606 = vmatprep.subr.bf16.mxu0 %v3245
    %4607 = vmatpush1.bf16.msra.mxu0 %v3244
    %4608 = vmatprep.subr.bf16.mxu0 %v3247
    %4609 = vmatpush1.bf16.msra.mxu0 %v3246
    %4610 = vmatprep.subr.bf16.mxu0 %v3249
    %4611 = vmatpush1.bf16.msra.mxu0 %v3248
    %4612 = vmatprep.subr.bf16.mxu0 %v3251
    %4613 = vmatpush1.bf16.msra.mxu0 %v3250
    %4614 = vmatprep.subr.bf16.mxu0 %v3253
    %4615 = vmatpush1.bf16.msra.mxu0 %v3252
    %4616 = vmatprep.subr.bf16.mxu0 %v3255
    %4617 = vmatpush1.bf16.msra.mxu0 %v3254
    %4618 = vmatprep.subr.bf16.mxu0 %v3257
    %4619 = vmatpush1.bf16.msra.mxu0 %v3256
    %4620 = vmatprep.subr.bf16.mxu0 %v3259
    %4621 = vmatpush1.bf16.msra.mxu0 %v3258
    %4622 = vmatprep.subr.bf16.mxu0 %v3261
    %4623 = vmatpush1.bf16.msra.mxu0 %v3260
    %4624 = vmatprep.subr.bf16.mxu0 %v3263
    %4625 = vmatpush1.bf16.msra.mxu0 %v3262
    %4626 = vmatprep.subr.bf16.mxu0 %v3265
    %4627 = vmatpush1.bf16.msra.mxu0 %v3264
    %4628 = vmatprep.subr.bf16.mxu0 %v3267
    %4629 = vmatpush1.bf16.msra.mxu0 %v3266
    %4630 = vmatprep.subr.bf16.mxu0 %v3269
    %4631 = vmatpush1.bf16.msra.mxu0 %v3268
    %4632 = vmatprep.mubr.bf16.mxu0 %v1067
    %4633 = vmatmul.mubr.bf16.gmra.mrb[0].mxu0 %v1066
    %v4634 = vpop.f32.mrb[0].mxu0
    %v4635 = vadd.f32 %v4582, %v4634
    %v4636 = vpop.f32.mrb[0].mxu0
    %v4637 = vadd.f32 %v4584, %v4636
    %v4638 = vpop.f32.mrb[0].mxu0
    %v4639 = vadd.f32 %v4586, %v4638
    %v4640 = vpop.f32.mrb[0].mxu0
    %v4641 = vadd.f32 %v4588, %v4640
    %4642 = vmatprep.mubr.bf16.mxu0 %v1103
    %4643 = vmatmul.mubr.bf16.gmra.mrb[0].mxu0 %v1102
    %v4644 = vpop.f32.mrb[0].mxu0
    %v4645 = vadd.f32 %v4592, %v4644
    %v4646 = vpop.f32.mrb[0].mxu0
    %v4647 = vadd.f32 %v4594, %v4646
    %v4648 = vpop.f32.mrb[0].mxu0
    %v4649 = vadd.f32 %v4596, %v4648
    %v4650 = vpop.f32.mrb[0].mxu0
    %v4651 = vadd.f32 %v4598, %v4650
    %4652 = vdwg.mxu0
    %4653 = vmatprep.subr.bf16.mxu0 %v3271
    %4654 = vmatpush1.bf16.msra.mxu0 %v3270
    %4655 = vmatprep.subr.bf16.mxu0 %v3273
    %4656 = vmatpush1.bf16.msra.mxu0 %v3272
    %4657 = vmatprep.subr.bf16.mxu0 %v3275
    %4658 = vmatpush1.bf16.msra.mxu0 %v3274
    %4659 = vmatprep.subr.bf16.mxu0 %v3277
    %4660 = vmatpush1.bf16.msra.mxu0 %v3276
    %4661 = vmatprep.subr.bf16.mxu0 %v3279
    %4662 = vmatpush1.bf16.msra.mxu0 %v3278
    %4663 = vmatprep.subr.bf16.mxu0 %v3281
    %4664 = vmatpush1.bf16.msra.mxu0 %v3280
    %4665 = vmatprep.subr.bf16.mxu0 %v3283
    %4666 = vmatpush1.bf16.msra.mxu0 %v3282
    %4667 = vmatprep.subr.bf16.mxu0 %v3285
    %4668 = vmatpush1.bf16.msra.mxu0 %v3284
    %4669 = vmatprep.subr.bf16.mxu0 %v3287
    %4670 = vmatpush1.bf16.msra.mxu0 %v3286
    %4671 = vmatprep.subr.bf16.mxu0 %v3289
    %4672 = vmatpush1.bf16.msra.mxu0 %v3288
    %4673 = vmatprep.subr.bf16.mxu0 %v3291
    %4674 = vmatpush1.bf16.msra.mxu0 %v3290
    %4675 = vmatprep.subr.bf16.mxu0 %v3293
    %4676 = vmatpush1.bf16.msra.mxu0 %v3292
    %4677 = vmatprep.subr.bf16.mxu0 %v3295
    %4678 = vmatpush1.bf16.msra.mxu0 %v3294
    %4679 = vmatprep.subr.bf16.mxu0 %v3297
    %4680 = vmatpush1.bf16.msra.mxu0 %v3296
    %4681 = vmatprep.subr.bf16.mxu0 %v3299
    %4682 = vmatpush1.bf16.msra.mxu0 %v3298
    %4683 = vmatprep.subr.bf16.mxu0 %v3301
    %4684 = vmatpush1.bf16.msra.mxu0 %v3300
    %4685 = vmatprep.mubr.bf16.mxu0 %v1069
    %4686 = vmatmul.mubr.bf16.gmra.mrb[0].mxu0 %v1068
    %v4687 = vpop.f32.mrb[0].mxu0
    %v4688 = vadd.f32 %v4635, %v4687
    %v4689 = vpop.f32.mrb[0].mxu0
    %v4690 = vadd.f32 %v4637, %v4689
    %v4691 = vpop.f32.mrb[0].mxu0
    %v4692 = vadd.f32 %v4639, %v4691
    %v4693 = vpop.f32.mrb[0].mxu0
    %v4694 = vadd.f32 %v4641, %v4693
    %4695 = vmatprep.mubr.bf16.mxu0 %v1105
    %4696 = vmatmul.mubr.bf16.gmra.mrb[0].mxu0 %v1104
    %v4697 = vpop.f32.mrb[0].mxu0
    %v4698 = vadd.f32 %v4645, %v4697
    %v4699 = vpop.f32.mrb[0].mxu0
    %v4700 = vadd.f32 %v4647, %v4699
    %v4701 = vpop.f32.mrb[0].mxu0
    %v4702 = vadd.f32 %v4649, %v4701
    %v4703 = vpop.f32.mrb[0].mxu0
    %v4704 = vadd.f32 %v4651, %v4703
    %4705 = vdwg.mxu0
    %4706 = vmatprep.subr.bf16.mxu0 %v3303
    %4707 = vmatpush1.bf16.msra.mxu0 %v3302
    %4708 = vmatprep.subr.bf16.mxu0 %v3305
    %4709 = vmatpush1.bf16.msra.mxu0 %v3304
    %4710 = vmatprep.subr.bf16.mxu0 %v3307
    %4711 = vmatpush1.bf16.msra.mxu0 %v3306
    %4712 = vmatprep.subr.bf16.mxu0 %v3309
    %4713 = vmatpush1.bf16.msra.mxu0 %v3308
    %4714 = vmatprep.subr.bf16.mxu0 %v3311
    %4715 = vmatpush1.bf16.msra.mxu0 %v3310
    %4716 = vmatprep.subr.bf16.mxu0 %v3313
    %4717 = vmatpush1.bf16.msra.mxu0 %v3312
    %4718 = vmatprep.subr.bf16.mxu0 %v3315
    %4719 = vmatpush1.bf16.msra.mxu0 %v3314
    %4720 = vmatprep.subr.bf16.mxu0 %v3317
    %4721 = vmatpush1.bf16.msra.mxu0 %v3316
    %4722 = vmatprep.subr.bf16.mxu0 %v3319
    %4723 = vmatpush1.bf16.msra.mxu0 %v3318
    %4724 = vmatprep.subr.bf16.mxu0 %v3321
    %4725 = vmatpush1.bf16.msra.mxu0 %v3320
    %4726 = vmatprep.subr.bf16.mxu0 %v3323
    %4727 = vmatpush1.bf16.msra.mxu0 %v3322
    %4728 = vmatprep.subr.bf16.mxu0 %v3325
    %4729 = vmatpush1.bf16.msra.mxu0 %v3324
    %4730 = vmatprep.subr.bf16.mxu0 %v3327
    %4731 = vmatpush1.bf16.msra.mxu0 %v3326
    %4732 = vmatprep.subr.bf16.mxu0 %v3329
    %4733 = vmatpush1.bf16.msra.mxu0 %v3328
    %4734 = vmatprep.subr.bf16.mxu0 %v3331
    %4735 = vmatpush1.bf16.msra.mxu0 %v3330
    %4736 = vmatprep.subr.bf16.mxu0 %v3333
    %4737 = vmatpush1.bf16.msra.mxu0 %v3332
    %4738 = vmatprep.mubr.bf16.mxu0 %v1071
    %4739 = vmatmul.mubr.bf16.gmra.mrb[0].mxu0 %v1070
    %v4740 = vpop.f32.mrb[0].mxu0
    %v4741 = vadd.f32 %v4688, %v4740
    %v4742 = vpop.f32.mrb[0].mxu0
    %v4743 = vadd.f32 %v4690, %v4742
    %v4744 = vpop.f32.mrb[0].mxu0
    %v4745 = vadd.f32 %v4692, %v4744
    %v4746 = vpop.f32.mrb[0].mxu0
    %v4747 = vadd.f32 %v4694, %v4746
    %4748 = vmatprep.mubr.bf16.mxu0 %v1107
    %4749 = vmatmul.mubr.bf16.gmra.mrb[0].mxu0 %v1106
    %v4750 = vpop.f32.mrb[0].mxu0
    %v4751 = vadd.f32 %v4698, %v4750
    %v4752 = vpop.f32.mrb[0].mxu0
    %v4753 = vadd.f32 %v4700, %v4752
    %v4754 = vpop.f32.mrb[0].mxu0
    %v4755 = vadd.f32 %v4702, %v4754
    %v4756 = vpop.f32.mrb[0].mxu0
    %v4757 = vadd.f32 %v4704, %v4756
    %4758 = vdwg.mxu0
    %4759 = vmatprep.subr.bf16.mxu0 %v3335
    %4760 = vmatpush1.bf16.msra.mxu0 %v3334
    %4761 = vmatprep.subr.bf16.mxu0 %v3337
    %4762 = vmatpush1.bf16.msra.mxu0 %v3336
    %4763 = vmatprep.subr.bf16.mxu0 %v3339
    %4764 = vmatpush1.bf16.msra.mxu0 %v3338
    %4765 = vmatprep.subr.bf16.mxu0 %v3341
    %4766 = vmatpush1.bf16.msra.mxu0 %v3340
    %4767 = vmatprep.subr.bf16.mxu0 %v3343
    %4768 = vmatpush1.bf16.msra.mxu0 %v3342
    %4769 = vmatprep.subr.bf16.mxu0 %v3345
    %4770 = vmatpush1.bf16.msra.mxu0 %v3344
    %4771 = vmatprep.subr.bf16.mxu0 %v3347
    %4772 = vmatpush1.bf16.msra.mxu0 %v3346
    %4773 = vmatprep.subr.bf16.mxu0 %v3349
    %4774 = vmatpush1.bf16.msra.mxu0 %v3348
    %4775 = vmatprep.subr.bf16.mxu0 %v3351
    %4776 = vmatpush1.bf16.msra.mxu0 %v3350
    %4777 = vmatprep.subr.bf16.mxu0 %v3353
    %4778 = vmatpush1.bf16.msra.mxu0 %v3352
    %4779 = vmatprep.subr.bf16.mxu0 %v3355
    %4780 = vmatpush1.bf16.msra.mxu0 %v3354
    %4781 = vmatprep.subr.bf16.mxu0 %v3357
    %4782 = vmatpush1.bf16.msra.mxu0 %v3356
    %4783 = vmatprep.subr.bf16.mxu0 %v3359
    %4784 = vmatpush1.bf16.msra.mxu0 %v3358
    %4785 = vmatprep.subr.bf16.mxu0 %v3361
    %4786 = vmatpush1.bf16.msra.mxu0 %v3360
    %4787 = vmatprep.subr.bf16.mxu0 %v3363
    %4788 = vmatpush1.bf16.msra.mxu0 %v3362
    %4789 = vmatprep.subr.bf16.mxu0 %v3365
    %4790 = vmatpush1.bf16.msra.mxu0 %v3364
    %4791 = vmatprep.mubr.bf16.mxu0 %v1073
    %4792 = vmatmul.mubr.bf16.gmra.mrb[0].mxu0 %v1072
    %v4793 = vpop.f32.mrb[0].mxu0
    %v4794 = vadd.f32 %v4741, %v4793
    %v4795 = vpop.f32.mrb[0].mxu0
    %v4796 = vadd.f32 %v4743, %v4795
    %v4797 = vpop.f32.mrb[0].mxu0
    %v4798 = vadd.f32 %v4745, %v4797
    %v4799 = vpop.f32.mrb[0].mxu0
    %v4800 = vadd.f32 %v4747, %v4799
    %4801 = vmatprep.mubr.bf16.mxu0 %v1109
    %4802 = vmatmul.mubr.bf16.gmra.mrb[0].mxu0 %v1108
    %v4803 = vpop.f32.mrb[0].mxu0
    %v4804 = vadd.f32 %v4751, %v4803
    %v4805 = vpop.f32.mrb[0].mxu0
    %v4806 = vadd.f32 %v4753, %v4805
    %v4807 = vpop.f32.mrb[0].mxu0
    %v4808 = vadd.f32 %v4755, %v4807
    %v4809 = vpop.f32.mrb[0].mxu0
    %v4810 = vadd.f32 %v4757, %v4809
    %4811 = vdwg.mxu0
    %4812 = vmatprep.subr.bf16.mxu0 %v3367
    %4813 = vmatpush1.bf16.msra.mxu0 %v3366
    %4814 = vmatprep.subr.bf16.mxu0 %v3369
    %4815 = vmatpush1.bf16.msra.mxu0 %v3368
    %4816 = vmatprep.subr.bf16.mxu0 %v3371
    %4817 = vmatpush1.bf16.msra.mxu0 %v3370
    %4818 = vmatprep.subr.bf16.mxu0 %v3373
    %4819 = vmatpush1.bf16.msra.mxu0 %v3372
    %4820 = vmatprep.subr.bf16.mxu0 %v3375
    %4821 = vmatpush1.bf16.msra.mxu0 %v3374
    %4822 = vmatprep.subr.bf16.mxu0 %v3377
    %4823 = vmatpush1.bf16.msra.mxu0 %v3376
    %4824 = vmatprep.subr.bf16.mxu0 %v3379
    %4825 = vmatpush1.bf16.msra.mxu0 %v3378
    %4826 = vmatprep.subr.bf16.mxu0 %v3381
    %4827 = vmatpush1.bf16.msra.mxu0 %v3380
    %4828 = vmatprep.subr.bf16.mxu0 %v3383
    %4829 = vmatpush1.bf16.msra.mxu0 %v3382
    %4830 = vmatprep.subr.bf16.mxu0 %v3385
    %4831 = vmatpush1.bf16.msra.mxu0 %v3384
    %4832 = vmatprep.subr.bf16.mxu0 %v3387
    %4833 = vmatpush1.bf16.msra.mxu0 %v3386
    %4834 = vmatprep.subr.bf16.mxu0 %v3389
    %4835 = vmatpush1.bf16.msra.mxu0 %v3388
    %4836 = vmatprep.subr.bf16.mxu0 %v3391
    %4837 = vmatpush1.bf16.msra.mxu0 %v3390
    %4838 = vmatprep.subr.bf16.mxu0 %v3393
    %4839 = vmatpush1.bf16.msra.mxu0 %v3392
    %4840 = vmatprep.subr.bf16.mxu0 %v3395
    %4841 = vmatpush1.bf16.msra.mxu0 %v3394
    %4842 = vmatprep.subr.bf16.mxu0 %v3397
    %4843 = vmatpush1.bf16.msra.mxu0 %v3396
    %4844 = vmatprep.mubr.bf16.mxu0 %v1075
    %4845 = vmatmul.mubr.bf16.gmra.mrb[0].mxu0 %v1074
    %v4846 = vpop.f32.mrb[0].mxu0
    %v4847 = vadd.f32 %v4794, %v4846
    %v4848 = vpop.f32.mrb[0].mxu0
    %v4849 = vadd.f32 %v4796, %v4848
    %v4850 = vpop.f32.mrb[0].mxu0
    %v4851 = vadd.f32 %v4798, %v4850
    %v4852 = vpop.f32.mrb[0].mxu0
    %v4853 = vadd.f32 %v4800, %v4852
    %4854 = vmatprep.mubr.bf16.mxu0 %v1111
    %4855 = vmatmul.mubr.bf16.gmra.mrb[0].mxu0 %v1110
    %v4856 = vpop.f32.mrb[0].mxu0
    %v4857 = vadd.f32 %v4804, %v4856
    %v4858 = vpop.f32.mrb[0].mxu0
    %v4859 = vadd.f32 %v4806, %v4858
    %v4860 = vpop.f32.mrb[0].mxu0
    %v4861 = vadd.f32 %v4808, %v4860
    %v4862 = vpop.f32.mrb[0].mxu0
    %v4863 = vadd.f32 %v4810, %v4862
    %4864 = vdwg.mxu0
    %4865 = vmatprep.subr.bf16.mxu0 %v3399
    %4866 = vmatpush1.bf16.msra.mxu0 %v3398
    %4867 = vmatprep.subr.bf16.mxu0 %v3401
    %4868 = vmatpush1.bf16.msra.mxu0 %v3400
    %4869 = vmatprep.subr.bf16.mxu0 %v3403
    %4870 = vmatpush1.bf16.msra.mxu0 %v3402
    %4871 = vmatprep.subr.bf16.mxu0 %v3405
    %4872 = vmatpush1.bf16.msra.mxu0 %v3404
    %4873 = vmatprep.subr.bf16.mxu0 %v3407
    %4874 = vmatpush1.bf16.msra.mxu0 %v3406
    %4875 = vmatprep.subr.bf16.mxu0 %v3409
    %4876 = vmatpush1.bf16.msra.mxu0 %v3408
    %4877 = vmatprep.subr.bf16.mxu0 %v3411
    %4878 = vmatpush1.bf16.msra.mxu0 %v3410
    %4879 = vmatprep.subr.bf16.mxu0 %v3413
    %4880 = vmatpush1.bf16.msra.mxu0 %v3412
    %4881 = vmatprep.subr.bf16.mxu0 %v3415
    %4882 = vmatpush1.bf16.msra.mxu0 %v3414
    %4883 = vmatprep.subr.bf16.mxu0 %v3417
    %4884 = vmatpush1.bf16.msra.mxu0 %v3416
    %4885 = vmatprep.subr.bf16.mxu0 %v3419
    %4886 = vmatpush1.bf16.msra.mxu0 %v3418
    %4887 = vmatprep.subr.bf16.mxu0 %v3421
    %4888 = vmatpush1.bf16.msra.mxu0 %v3420
    %4889 = vmatprep.subr.bf16.mxu0 %v3423
    %4890 = vmatpush1.bf16.msra.mxu0 %v3422
    %4891 = vmatprep.subr.bf16.mxu0 %v3425
    %4892 = vmatpush1.bf16.msra.mxu0 %v3424
    %4893 = vmatprep.subr.bf16.mxu0 %v3427
    %4894 = vmatpush1.bf16.msra.mxu0 %v3426
    %4895 = vmatprep.subr.bf16.mxu0 %v3429
    %4896 = vmatpush1.bf16.msra.mxu0 %v3428
    %4897 = vmatprep.mubr.bf16.mxu0 %v1077
    %4898 = vmatmul.mubr.bf16.gmra.mrb[0].mxu0 %v1076
    %v4899 = vpop.f32.mrb[0].mxu0
    %v4900 = vadd.f32 %v4847, %v4899
    %v4901 = vpop.f32.mrb[0].mxu0
    %v4902 = vadd.f32 %v4849, %v4901
    %v4903 = vpop.f32.mrb[0].mxu0
    %v4904 = vadd.f32 %v4851, %v4903
    %v4905 = vpop.f32.mrb[0].mxu0
    %v4906 = vadd.f32 %v4853, %v4905
    %4907 = vmatprep.mubr.bf16.mxu0 %v1113
    %4908 = vmatmul.mubr.bf16.gmra.mrb[0].mxu0 %v1112
    %v4909 = vpop.f32.mrb[0].mxu0
    %v4910 = vadd.f32 %v4857, %v4909
    %v4911 = vpop.f32.mrb[0].mxu0
    %v4912 = vadd.f32 %v4859, %v4911
    %v4913 = vpop.f32.mrb[0].mxu0
    %v4914 = vadd.f32 %v4861, %v4913
    %v4915 = vpop.f32.mrb[0].mxu0
    %v4916 = vadd.f32 %v4863, %v4915
    %4917 = vdwg.mxu0
    %4918 = vmatprep.subr.bf16.mxu0 %v3431
    %4919 = vmatpush1.bf16.msra.mxu0 %v3430
    %4920 = vmatprep.subr.bf16.mxu0 %v3433
    %4921 = vmatpush1.bf16.msra.mxu0 %v3432
    %4922 = vmatprep.subr.bf16.mxu0 %v3435
    %4923 = vmatpush1.bf16.msra.mxu0 %v3434
    %4924 = vmatprep.subr.bf16.mxu0 %v3437
    %4925 = vmatpush1.bf16.msra.mxu0 %v3436
    %4926 = vmatprep.subr.bf16.mxu0 %v3439
    %4927 = vmatpush1.bf16.msra.mxu0 %v3438
    %4928 = vmatprep.subr.bf16.mxu0 %v3441
    %4929 = vmatpush1.bf16.msra.mxu0 %v3440
    %4930 = vmatprep.subr.bf16.mxu0 %v3443
    %4931 = vmatpush1.bf16.msra.mxu0 %v3442
    %4932 = vmatprep.subr.bf16.mxu0 %v3445
    %4933 = vmatpush1.bf16.msra.mxu0 %v3444
    %4934 = vmatprep.subr.bf16.mxu0 %v3447
    %4935 = vmatpush1.bf16.msra.mxu0 %v3446
    %4936 = vmatprep.subr.bf16.mxu0 %v3449
    %4937 = vmatpush1.bf16.msra.mxu0 %v3448
    %4938 = vmatprep.subr.bf16.mxu0 %v3451
    %4939 = vmatpush1.bf16.msra.mxu0 %v3450
    %4940 = vmatprep.subr.bf16.mxu0 %v3453
    %4941 = vmatpush1.bf16.msra.mxu0 %v3452
    %4942 = vmatprep.subr.bf16.mxu0 %v3455
    %4943 = vmatpush1.bf16.msra.mxu0 %v3454
    %4944 = vmatprep.subr.bf16.mxu0 %v3457
    %4945 = vmatpush1.bf16.msra.mxu0 %v3456
    %4946 = vmatprep.subr.bf16.mxu0 %v3459
    %4947 = vmatpush1.bf16.msra.mxu0 %v3458
    %4948 = vmatprep.subr.bf16.mxu0 %v3461
    %4949 = vmatpush1.bf16.msra.mxu0 %v3460
    %4950 = vmatprep.mubr.bf16.mxu0 %v1079
    %4951 = vmatmul.mubr.bf16.gmra.mrb[0].mxu0 %v1078
    %v4952 = vpop.f32.mrb[0].mxu0
    %v4953 = vadd.f32 %v4900, %v4952
    %v4954 = vpop.f32.mrb[0].mxu0
    %v4955 = vadd.f32 %v4902, %v4954
    %v4956 = vpop.f32.mrb[0].mxu0
    %v4957 = vadd.f32 %v4904, %v4956
    %v4958 = vpop.f32.mrb[0].mxu0
    %v4959 = vadd.f32 %v4906, %v4958
    %4960 = vmatprep.mubr.bf16.mxu0 %v1115
    %4961 = vmatmul.mubr.bf16.gmra.mrb[0].mxu0 %v1114
    %v4962 = vpop.f32.mrb[0].mxu0
    %v4963 = vadd.f32 %v4910, %v4962
    %v4964 = vpop.f32.mrb[0].mxu0
    %v4965 = vadd.f32 %v4912, %v4964
    %v4966 = vpop.f32.mrb[0].mxu0
    %v4967 = vadd.f32 %v4914, %v4966
    %v4968 = vpop.f32.mrb[0].mxu0
    %v4969 = vadd.f32 %v4916, %v4968
    %4970 = vdwg.mxu0
    %4971 = vmatprep.subr.bf16.mxu0 %v3463
    %4972 = vmatpush1.bf16.msra.mxu0 %v3462
    %4973 = vmatprep.subr.bf16.mxu0 %v3465
    %4974 = vmatpush1.bf16.msra.mxu0 %v3464
    %4975 = vmatprep.subr.bf16.mxu0 %v3467
    %4976 = vmatpush1.bf16.msra.mxu0 %v3466
    %4977 = vmatprep.subr.bf16.mxu0 %v3469
    %4978 = vmatpush1.bf16.msra.mxu0 %v3468
    %4979 = vmatprep.subr.bf16.mxu0 %v3471
    %4980 = vmatpush1.bf16.msra.mxu0 %v3470
    %4981 = vmatprep.subr.bf16.mxu0 %v3473
    %4982 = vmatpush1.bf16.msra.mxu0 %v3472
    %4983 = vmatprep.subr.bf16.mxu0 %v3475
    %4984 = vmatpush1.bf16.msra.mxu0 %v3474
    %4985 = vmatprep.subr.bf16.mxu0 %v3477
    %4986 = vmatpush1.bf16.msra.mxu0 %v3476
    %4987 = vmatprep.subr.bf16.mxu0 %v3479
    %4988 = vmatpush1.bf16.msra.mxu0 %v3478
    %4989 = vmatprep.subr.bf16.mxu0 %v3481
    %4990 = vmatpush1.bf16.msra.mxu0 %v3480
    %4991 = vmatprep.subr.bf16.mxu0 %v3483
    %4992 = vmatpush1.bf16.msra.mxu0 %v3482
    %4993 = vmatprep.subr.bf16.mxu0 %v3485
    %4994 = vmatpush1.bf16.msra.mxu0 %v3484
    %4995 = vmatprep.subr.bf16.mxu0 %v3487
    %4996 = vmatpush1.bf16.msra.mxu0 %v3486
    %4997 = vmatprep.subr.bf16.mxu0 %v3489
    %4998 = vmatpush1.bf16.msra.mxu0 %v3488
    %4999 = vmatprep.subr.bf16.mxu0 %v3491
    %5000 = vmatpush1.bf16.msra.mxu0 %v3490
    %5001 = vmatprep.subr.bf16.mxu0 %v3493
    %5002 = vmatpush1.bf16.msra.mxu0 %v3492
    %5003 = vmatprep.mubr.bf16.mxu0 %v1081
    %5004 = vmatmul.mubr.bf16.gmra.mrb[0].mxu0 %v1080
    %v5005 = vpop.f32.mrb[0].mxu0
    %v5006 = vadd.f32 %v4953, %v5005
    %v5007 = vpop.f32.mrb[0].mxu0
    %v5008 = vadd.f32 %v4955, %v5007
    %v5009 = vpop.f32.mrb[0].mxu0
    %v5010 = vadd.f32 %v4957, %v5009
    %v5011 = vpop.f32.mrb[0].mxu0
    %v5012 = vadd.f32 %v4959, %v5011
    %5013 = vmatprep.mubr.bf16.mxu0 %v1117
    %5014 = vmatmul.mubr.bf16.gmra.mrb[0].mxu0 %v1116
    %v5015 = vpop.f32.mrb[0].mxu0
    %v5016 = vadd.f32 %v4963, %v5015
    %v5017 = vpop.f32.mrb[0].mxu0
    %v5018 = vadd.f32 %v4965, %v5017
    %v5019 = vpop.f32.mrb[0].mxu0
    %v5020 = vadd.f32 %v4967, %v5019
    %v5021 = vpop.f32.mrb[0].mxu0
    %v5022 = vadd.f32 %v4969, %v5021
    %5023 = vdwg.mxu0
    %v5024 = vpack.c.bf16 %v5010, %v5006
    %v5025 = vpack.c.bf16 %v5012, %v5008
    %v5026 = vpack.c.bf16 %v5020, %v5016
    %v5027 = vpack.c.bf16 %v5022, %v5018
    %v5028 = vld [vmem:[%s3] sm:$0xf]
    %v5029 = vld [vmem:[%s3 + $0x4] sm:$0xf]
    %v5030 = vld [vmem:[%s3 + $0x8] sm:$0xf]
    %v5031 = vld [vmem:[%s3 + $0xc] sm:$0xf]
    %v5032 = vld [vmem:[%s3 + $0x10] sm:$0xf]
    %v5033 = vld [vmem:[%s3 + $0x14] sm:$0xf]
    %v5034 = vld [vmem:[%s3 + $0x18] sm:$0xf]
    %v5035 = vld [vmem:[%s3 + $0x1c] sm:$0xf]
    %v5036 = vld [vmem:[%s3 + $0x20] sm:$0xf]
    %v5037 = vld [vmem:[%s3 + $0x24] sm:$0xf]
    %v5038 = vld [vmem:[%s3 + $0x28] sm:$0xf]
    %v5039 = vld [vmem:[%s3 + $0x2c] sm:$0xf]
    %v5040 = vld [vmem:[%s3 + $0x30] sm:$0xf]
    %v5041 = vld [vmem:[%s3 + $0x34] sm:$0xf]
    %v5042 = vld [vmem:[%s3 + $0x38] sm:$0xf]
    %v5043 = vld [vmem:[%s3 + $0x3c] sm:$0xf]
    %v5044 = vld [vmem:[%s3 + $0x40] sm:$0xf]
    %v5045 = vld [vmem:[%s3 + $0x44] sm:$0xf]
    %v5046 = vld [vmem:[%s3 + $0x48] sm:$0xf]
    %v5047 = vld [vmem:[%s3 + $0x4c] sm:$0xf]
    %v5048 = vld [vmem:[%s3 + $0x50] sm:$0xf]
    %v5049 = vld [vmem:[%s3 + $0x54] sm:$0xf]
    %v5050 = vld [vmem:[%s3 + $0x58] sm:$0xf]
    %v5051 = vld [vmem:[%s3 + $0x5c] sm:$0xf]
    %v5052 = vld [vmem:[%s3 + $0x60] sm:$0xf]
    %v5053 = vld [vmem:[%s3 + $0x64] sm:$0xf]
    %v5054 = vld [vmem:[%s3 + $0x68] sm:$0xf]
    %v5055 = vld [vmem:[%s3 + $0x6c] sm:$0xf]
    %v5056 = vld [vmem:[%s3 + $0x70] sm:$0xf]
    %v5057 = vld [vmem:[%s3 + $0x74] sm:$0xf]
    %v5058 = vld [vmem:[%s3 + $0x78] sm:$0xf]
    %v5059 = vld [vmem:[%s3 + $0x7c] sm:$0xf]
    %s5060 = scalar_lea.vmem %s3, 128
    %v5061 = vld [vmem:[%s5060] sm:$0xf]
    %v5062 = vld [vmem:[%s5060 + $0x4] sm:$0xf]
    %v5063 = vld [vmem:[%s5060 + $0x8] sm:$0xf]
    %v5064 = vld [vmem:[%s5060 + $0xc] sm:$0xf]
    %v5065 = vld [vmem:[%s5060 + $0x10] sm:$0xf]
    %v5066 = vld [vmem:[%s5060 + $0x14] sm:$0xf]
    %v5067 = vld [vmem:[%s5060 + $0x18] sm:$0xf]
    %v5068 = vld [vmem:[%s5060 + $0x1c] sm:$0xf]
    %v5069 = vld [vmem:[%s5060 + $0x20] sm:$0xf]
    %v5070 = vld [vmem:[%s5060 + $0x24] sm:$0xf]
    %v5071 = vld [vmem:[%s5060 + $0x28] sm:$0xf]
    %v5072 = vld [vmem:[%s5060 + $0x2c] sm:$0xf]
    %v5073 = vld [vmem:[%s5060 + $0x30] sm:$0xf]
    %v5074 = vld [vmem:[%s5060 + $0x34] sm:$0xf]
    %v5075 = vld [vmem:[%s5060 + $0x38] sm:$0xf]
    %v5076 = vld [vmem:[%s5060 + $0x3c] sm:$0xf]
    %v5077 = vld [vmem:[%s5060 + $0x40] sm:$0xf]
    %v5078 = vld [vmem:[%s5060 + $0x44] sm:$0xf]
    %v5079 = vld [vmem:[%s5060 + $0x48] sm:$0xf]
    %v5080 = vld [vmem:[%s5060 + $0x4c] sm:$0xf]
    %v5081 = vld [vmem:[%s5060 + $0x50] sm:$0xf]
    %v5082 = vld [vmem:[%s5060 + $0x54] sm:$0xf]
    %v5083 = vld [vmem:[%s5060 + $0x58] sm:$0xf]
    %v5084 = vld [vmem:[%s5060 + $0x5c] sm:$0xf]
    %v5085 = vld [vmem:[%s5060 + $0x60] sm:$0xf]
    %v5086 = vld [vmem:[%s5060 + $0x64] sm:$0xf]
    %v5087 = vld [vmem:[%s5060 + $0x68] sm:$0xf]
    %v5088 = vld [vmem:[%s5060 + $0x6c] sm:$0xf]
    %v5089 = vld [vmem:[%s5060 + $0x70] sm:$0xf]
    %v5090 = vld [vmem:[%s5060 + $0x74] sm:$0xf]
    %v5091 = vld [vmem:[%s5060 + $0x78] sm:$0xf]
    %v5092 = vld [vmem:[%s5060 + $0x7c] sm:$0xf]
    %vm5093 = vsmask.f32 7424
    %v5095 = vshrl.u32 %v5024, 16
    %v5097 = vshll.u32 %v5024, 16
    %v5099 = vrot.slane %v5097, 1
    %v5100 = vor.u32 %v5095, %v5099
    %v5102 = vshll.u32 %v5026, 16
    %v5104 = vrot.slane %v5102, 1
    %v5105 = vsel %vm5093, %v5100, %v5104
    %v5107 = vshrl.u32 %v5025, 16
    %v5109 = vshll.u32 %v5025, 16
    %v5111 = vrot.slane %v5109, 1
    %v5112 = vor.u32 %v5107, %v5111
    %v5114 = vshll.u32 %v5027, 16
    %v5116 = vrot.slane %v5114, 1
    %v5117 = vsel %vm5093, %v5112, %v5116
    %v5118 = vshrl.u32 %v5026, 16
    %v5120 = vor.u32 %v5118, %v5104
    %v5121 = vshrl.u32 %v5027, 16
    %v5123 = vor.u32 %v5121, %v5116
    %v5160 = vunpack.c.l.b16 %v5061
    %v5161 = vunpack.c.l.b16 %v5062
    %v5162 = vunpack.c.l.b16 %v5063
    %v5163 = vunpack.c.l.b16 %v5064
    %v5164 = vunpack.c.l.b16 %v5065
    %v5165 = vunpack.c.l.b16 %v5066
    %v5166 = vunpack.c.l.b16 %v5067
    %v5167 = vunpack.c.l.b16 %v5068
    %v5168 = vunpack.c.l.b16 %v5069
    %v5169 = vunpack.c.l.b16 %v5070
    %v5170 = vunpack.c.l.b16 %v5071
    %v5171 = vunpack.c.l.b16 %v5072
    %v5172 = vunpack.c.l.b16 %v5073
    %v5173 = vunpack.c.l.b16 %v5074
    %v5174 = vunpack.c.l.b16 %v5075
    %v5175 = vunpack.c.l.b16 %v5076
    %v5176 = vunpack.c.l.b16 %v5077
    %v5177 = vunpack.c.l.b16 %v5078
    %v5178 = vunpack.c.l.b16 %v5079
    %v5179 = vunpack.c.l.b16 %v5080
    %v5180 = vunpack.c.l.b16 %v5081
    %v5181 = vunpack.c.l.b16 %v5082
    %v5182 = vunpack.c.l.b16 %v5083
    %v5183 = vunpack.c.l.b16 %v5084
    %v5184 = vunpack.c.l.b16 %v5085
    %v5185 = vunpack.c.l.b16 %v5086
    %v5186 = vunpack.c.l.b16 %v5087
    %v5187 = vunpack.c.l.b16 %v5088
    %v5188 = vunpack.c.l.b16 %v5089
    %v5189 = vunpack.c.l.b16 %v5090
    %v5190 = vunpack.c.l.b16 %v5091
    %v5191 = vunpack.c.l.b16 %v5092
    %v5192 = vpack.c.b16 %v5161, %v5160
    %v5193 = vpack.c.b16 %v5163, %v5162
    %v5194 = vpack.c.b16 %v5165, %v5164
    %v5195 = vpack.c.b16 %v5167, %v5166
    %v5196 = vpack.c.b16 %v5169, %v5168
    %v5197 = vpack.c.b16 %v5171, %v5170
    %v5198 = vpack.c.b16 %v5173, %v5172
    %v5199 = vpack.c.b16 %v5175, %v5174
    %v5200 = vpack.c.b16 %v5177, %v5176
    %v5201 = vpack.c.b16 %v5179, %v5178
    %v5202 = vpack.c.b16 %v5181, %v5180
    %v5203 = vpack.c.b16 %v5183, %v5182
    %v5204 = vpack.c.b16 %v5185, %v5184
    %v5205 = vpack.c.b16 %v5187, %v5186
    %v5206 = vpack.c.b16 %v5189, %v5188
    %v5207 = vpack.c.b16 %v5191, %v5190
    %5224 = vmatprep.subr.bf16.mxu0 0
    %5225 = vmatpush1.bf16.msra.mxu0 %v5192
    %5226 = vmatprep.subr.bf16.mxu0 0
    %5227 = vmatpush1.bf16.msra.mxu0 %v5193
    %5228 = vmatprep.subr.bf16.mxu0 0
    %5229 = vmatpush1.bf16.msra.mxu0 %v5194
    %5230 = vmatprep.subr.bf16.mxu0 0
    %5231 = vmatpush1.bf16.msra.mxu0 %v5195
    %5232 = vmatprep.subr.bf16.mxu0 0
    %5233 = vmatpush1.bf16.msra.mxu0 %v5196
    %5234 = vmatprep.subr.bf16.mxu0 0
    %5235 = vmatpush1.bf16.msra.mxu0 %v5197
    %5236 = vmatprep.subr.bf16.mxu0 0
    %5237 = vmatpush1.bf16.msra.mxu0 %v5198
    %5238 = vmatprep.subr.bf16.mxu0 0
    %5239 = vmatpush1.bf16.msra.mxu0 %v5199
    %5240 = vmatprep.subr.bf16.mxu0 0
    %5241 = vmatpush1.bf16.msra.mxu0 %v5200
    %5242 = vmatprep.subr.bf16.mxu0 0
    %5243 = vmatpush1.bf16.msra.mxu0 %v5201
    %5244 = vmatprep.subr.bf16.mxu0 0
    %5245 = vmatpush1.bf16.msra.mxu0 %v5202
    %5246 = vmatprep.subr.bf16.mxu0 0
    %5247 = vmatpush1.bf16.msra.mxu0 %v5203
    %5248 = vmatprep.subr.bf16.mxu0 0
    %5249 = vmatpush1.bf16.msra.mxu0 %v5204
    %5250 = vmatprep.subr.bf16.mxu0 0
    %5251 = vmatpush1.bf16.msra.mxu0 %v5205
    %5252 = vmatprep.subr.bf16.mxu0 0
    %5253 = vmatpush1.bf16.msra.mxu0 %v5206
    %5254 = vmatprep.subr.bf16.mxu0 0
    %5255 = vmatpush1.bf16.msra.mxu0 %v5207
    %5256 = vmatprep.mubr.bf16.mxu0 %v5117
    %5257 = vmatmul.mubr.bf16.gmra.mrb[0].mxu0 %v5105
    %v5258 = vpop.f32.mrb[0].mxu0
    %v5259 = vadd.f32 0.0, %v5258
    %v5260 = vpop.f32.mrb[0].mxu0
    %v5261 = vpop.f32.mrb[0].mxu0
    %v5262 = vadd.f32 0.0, %v5261
    %v5263 = vpop.f32.mrb[0].mxu0
    %5264 = vmatprep.mubr.bf16.mxu0 %v5123
    %5265 = vmatmul.mubr.bf16.gmra.mrb[0].mxu0 %v5120
    %v5266 = vpop.f32.mrb[0].mxu0
    %v5267 = vadd.f32 0.0, %v5266
    %v5268 = vpop.f32.mrb[0].mxu0
    %v5269 = vpop.f32.mrb[0].mxu0
    %v5270 = vpop.f32.mrb[0].mxu0
    %5271 = vdwg.mxu0
    %v5304 = vunpack.c.l.b16 %v5028
    %v5305 = vunpack.c.l.b16 %v5029
    %v5306 = vunpack.c.l.b16 %v5030
    %v5307 = vunpack.c.l.b16 %v5031
    %v5308 = vunpack.c.l.b16 %v5032
    %v5309 = vunpack.c.l.b16 %v5033
    %v5310 = vunpack.c.l.b16 %v5034
    %v5311 = vunpack.c.l.b16 %v5035
    %v5312 = vunpack.c.l.b16 %v5036
    %v5313 = vunpack.c.l.b16 %v5037
    %v5314 = vunpack.c.l.b16 %v5038
    %v5315 = vunpack.c.l.b16 %v5039
    %v5316 = vunpack.c.l.b16 %v5040
    %v5317 = vunpack.c.l.b16 %v5041
    %v5318 = vunpack.c.l.b16 %v5042
    %v5319 = vunpack.c.l.b16 %v5043
    %v5320 = vunpack.c.l.b16 %v5044
    %v5321 = vunpack.c.l.b16 %v5045
    %v5322 = vunpack.c.l.b16 %v5046
    %v5323 = vunpack.c.l.b16 %v5047
    %v5324 = vunpack.c.l.b16 %v5048
    %v5325 = vunpack.c.l.b16 %v5049
    %v5326 = vunpack.c.l.b16 %v5050
    %v5327 = vunpack.c.l.b16 %v5051
    %v5328 = vunpack.c.l.b16 %v5052
    %v5329 = vunpack.c.l.b16 %v5053
    %v5330 = vunpack.c.l.b16 %v5054
    %v5331 = vunpack.c.l.b16 %v5055
    %v5332 = vunpack.c.l.b16 %v5056
    %v5333 = vunpack.c.l.b16 %v5057
    %v5334 = vunpack.c.l.b16 %v5058
    %v5335 = vunpack.c.l.b16 %v5059
    %v5336 = vpack.c.b16 %v5305, %v5304
    %v5337 = vpack.c.b16 %v5307, %v5306
    %v5338 = vpack.c.b16 %v5309, %v5308
    %v5339 = vpack.c.b16 %v5311, %v5310
    %v5340 = vpack.c.b16 %v5313, %v5312
    %v5341 = vpack.c.b16 %v5315, %v5314
    %v5342 = vpack.c.b16 %v5317, %v5316
    %v5343 = vpack.c.b16 %v5319, %v5318
    %v5344 = vpack.c.b16 %v5321, %v5320
    %v5345 = vpack.c.b16 %v5323, %v5322
    %v5346 = vpack.c.b16 %v5325, %v5324
    %v5347 = vpack.c.b16 %v5327, %v5326
    %v5348 = vpack.c.b16 %v5329, %v5328
    %v5349 = vpack.c.b16 %v5331, %v5330
    %v5350 = vpack.c.b16 %v5333, %v5332
    %v5351 = vpack.c.b16 %v5335, %v5334
    %5368 = vmatprep.subr.bf16.mxu0 0
    %5369 = vmatpush1.bf16.msra.mxu0 %v5336
    %5370 = vmatprep.subr.bf16.mxu0 0
    %5371 = vmatpush1.bf16.msra.mxu0 %v5337
    %5372 = vmatprep.subr.bf16.mxu0 0
    %5373 = vmatpush1.bf16.msra.mxu0 %v5338
    %5374 = vmatprep.subr.bf16.mxu0 0
    %5375 = vmatpush1.bf16.msra.mxu0 %v5339
    %5376 = vmatprep.subr.bf16.mxu0 0
    %5377 = vmatpush1.bf16.msra.mxu0 %v5340
    %5378 = vmatprep.subr.bf16.mxu0 0
    %5379 = vmatpush1.bf16.msra.mxu0 %v5341
    %5380 = vmatprep.subr.bf16.mxu0 0
    %5381 = vmatpush1.bf16.msra.mxu0 %v5342
    %5382 = vmatprep.subr.bf16.mxu0 0
    %5383 = vmatpush1.bf16.msra.mxu0 %v5343
    %5384 = vmatprep.subr.bf16.mxu0 0
    %5385 = vmatpush1.bf16.msra.mxu0 %v5344
    %5386 = vmatprep.subr.bf16.mxu0 0
    %5387 = vmatpush1.bf16.msra.mxu0 %v5345
    %5388 = vmatprep.subr.bf16.mxu0 0
    %5389 = vmatpush1.bf16.msra.mxu0 %v5346
    %5390 = vmatprep.subr.bf16.mxu0 0
    %5391 = vmatpush1.bf16.msra.mxu0 %v5347
    %5392 = vmatprep.subr.bf16.mxu0 0
    %5393 = vmatpush1.bf16.msra.mxu0 %v5348
    %5394 = vmatprep.subr.bf16.mxu0 0
    %5395 = vmatpush1.bf16.msra.mxu0 %v5349
    %5396 = vmatprep.subr.bf16.mxu0 0
    %5397 = vmatpush1.bf16.msra.mxu0 %v5350
    %5398 = vmatprep.subr.bf16.mxu0 0
    %5399 = vmatpush1.bf16.msra.mxu0 %v5351
    %5400 = vmatprep.mubr.bf16.mxu0 %v5025
    %5401 = vmatmul.mubr.bf16.gmra.mrb[0].mxu0 %v5024
    %v5402 = vpop.f32.mrb[0].mxu0
    %v5403 = vadd.f32 %v5259, %v5402
    %v5404 = vpop.f32.mrb[0].mxu0
    %v5405 = vpop.f32.mrb[0].mxu0
    %v5406 = vadd.f32 %v5262, %v5405
    %v5407 = vpop.f32.mrb[0].mxu0
    %5408 = vmatprep.mubr.bf16.mxu0 %v5027
    %5409 = vmatmul.mubr.bf16.gmra.mrb[0].mxu0 %v5026
    %v5410 = vpop.f32.mrb[0].mxu0
    %v5411 = vadd.f32 %v5267, %v5410
    %v5412 = vpop.f32.mrb[0].mxu0
    %v5413 = vpop.f32.mrb[0].mxu0
    %v5414 = vpop.f32.mrb[0].mxu0
    %5415 = vdwg.mxu0
    %s5416 = scalar_lea.vmem %s3, 256
    %v5417 = vld [vmem:[%s5416] sm:$0xf]
    %v5418 = vld [vmem:[%s5416 + $0x4] sm:$0xf]
    %v5419 = vld [vmem:[%s5416 + $0x8] sm:$0xf]
    %v5420 = vld [vmem:[%s5416 + $0xc] sm:$0xf]
    %v5421 = vld [vmem:[%s5416 + $0x10] sm:$0xf]
    %v5422 = vld [vmem:[%s5416 + $0x14] sm:$0xf]
    %v5423 = vld [vmem:[%s5416 + $0x18] sm:$0xf]
    %v5424 = vld [vmem:[%s5416 + $0x1c] sm:$0xf]
    %v5425 = vld [vmem:[%s5416 + $0x20] sm:$0xf]
    %v5426 = vld [vmem:[%s5416 + $0x24] sm:$0xf]
    %v5427 = vld [vmem:[%s5416 + $0x28] sm:$0xf]
    %v5428 = vld [vmem:[%s5416 + $0x2c] sm:$0xf]
    %v5429 = vld [vmem:[%s5416 + $0x30] sm:$0xf]
    %v5430 = vld [vmem:[%s5416 + $0x34] sm:$0xf]
    %v5431 = vld [vmem:[%s5416 + $0x38] sm:$0xf]
    %v5432 = vld [vmem:[%s5416 + $0x3c] sm:$0xf]
    %v5433 = vld [vmem:[%s5416 + $0x40] sm:$0xf]
    %v5434 = vld [vmem:[%s5416 + $0x44] sm:$0xf]
    %v5435 = vld [vmem:[%s5416 + $0x48] sm:$0xf]
    %v5436 = vld [vmem:[%s5416 + $0x4c] sm:$0xf]
    %v5437 = vld [vmem:[%s5416 + $0x50] sm:$0xf]
    %v5438 = vld [vmem:[%s5416 + $0x54] sm:$0xf]
    %v5439 = vld [vmem:[%s5416 + $0x58] sm:$0xf]
    %v5440 = vld [vmem:[%s5416 + $0x5c] sm:$0xf]
    %v5441 = vld [vmem:[%s5416 + $0x60] sm:$0xf]
    %v5442 = vld [vmem:[%s5416 + $0x64] sm:$0xf]
    %v5443 = vld [vmem:[%s5416 + $0x68] sm:$0xf]
    %v5444 = vld [vmem:[%s5416 + $0x6c] sm:$0xf]
    %v5445 = vld [vmem:[%s5416 + $0x70] sm:$0xf]
    %v5446 = vld [vmem:[%s5416 + $0x74] sm:$0xf]
    %v5447 = vld [vmem:[%s5416 + $0x78] sm:$0xf]
    %v5448 = vld [vmem:[%s5416 + $0x7c] sm:$0xf]
    %vm5453 = vcmask 1046528
    %v5454 = vrot.slane %v5024, 1
    %v5455 = vrot.slane %v5026, 1
    %v5456 = vsel %vm5453, %v5454, %v5455
    %v5457 = vrot.slane %v5025, 1
    %v5458 = vrot.slane %v5027, 1
    %v5459 = vsel %vm5453, %v5457, %v5458
    %v5496 = vunpack.c.l.b16 %v5417
    %v5497 = vunpack.c.l.b16 %v5418
    %v5498 = vunpack.c.l.b16 %v5419
    %v5499 = vunpack.c.l.b16 %v5420
    %v5500 = vunpack.c.l.b16 %v5421
    %v5501 = vunpack.c.l.b16 %v5422
    %v5502 = vunpack.c.l.b16 %v5423
    %v5503 = vunpack.c.l.b16 %v5424
    %v5504 = vunpack.c.l.b16 %v5425
    %v5505 = vunpack.c.l.b16 %v5426
    %v5506 = vunpack.c.l.b16 %v5427
    %v5507 = vunpack.c.l.b16 %v5428
    %v5508 = vunpack.c.l.b16 %v5429
    %v5509 = vunpack.c.l.b16 %v5430
    %v5510 = vunpack.c.l.b16 %v5431
    %v5511 = vunpack.c.l.b16 %v5432
    %v5512 = vunpack.c.l.b16 %v5433
    %v5513 = vunpack.c.l.b16 %v5434
    %v5514 = vunpack.c.l.b16 %v5435
    %v5515 = vunpack.c.l.b16 %v5436
    %v5516 = vunpack.c.l.b16 %v5437
    %v5517 = vunpack.c.l.b16 %v5438
    %v5518 = vunpack.c.l.b16 %v5439
    %v5519 = vunpack.c.l.b16 %v5440
    %v5520 = vunpack.c.l.b16 %v5441
    %v5521 = vunpack.c.l.b16 %v5442
    %v5522 = vunpack.c.l.b16 %v5443
    %v5523 = vunpack.c.l.b16 %v5444
    %v5524 = vunpack.c.l.b16 %v5445
    %v5525 = vunpack.c.l.b16 %v5446
    %v5526 = vunpack.c.l.b16 %v5447
    %v5527 = vunpack.c.l.b16 %v5448
    %v5528 = vpack.c.b16 %v5497, %v5496
    %v5529 = vpack.c.b16 %v5499, %v5498
    %v5530 = vpack.c.b16 %v5501, %v5500
    %v5531 = vpack.c.b16 %v5503, %v5502
    %v5532 = vpack.c.b16 %v5505, %v5504
    %v5533 = vpack.c.b16 %v5507, %v5506
    %v5534 = vpack.c.b16 %v5509, %v5508
    %v5535 = vpack.c.b16 %v5511, %v5510
    %v5536 = vpack.c.b16 %v5513, %v5512
    %v5537 = vpack.c.b16 %v5515, %v5514
    %v5538 = vpack.c.b16 %v5517, %v5516
    %v5539 = vpack.c.b16 %v5519, %v5518
    %v5540 = vpack.c.b16 %v5521, %v5520
    %v5541 = vpack.c.b16 %v5523, %v5522
    %v5542 = vpack.c.b16 %v5525, %v5524
    %v5543 = vpack.c.b16 %v5527, %v5526
    %5560 = vmatprep.subr.bf16.mxu0 0
    %5561 = vmatpush1.bf16.msra.mxu0 %v5528
    %5562 = vmatprep.subr.bf16.mxu0 0
    %5563 = vmatpush1.bf16.msra.mxu0 %v5529
    %5564 = vmatprep.subr.bf16.mxu0 0
    %5565 = vmatpush1.bf16.msra.mxu0 %v5530
    %5566 = vmatprep.subr.bf16.mxu0 0
    %5567 = vmatpush1.bf16.msra.mxu0 %v5531
    %5568 = vmatprep.subr.bf16.mxu0 0
    %5569 = vmatpush1.bf16.msra.mxu0 %v5532
    %5570 = vmatprep.subr.bf16.mxu0 0
    %5571 = vmatpush1.bf16.msra.mxu0 %v5533
    %5572 = vmatprep.subr.bf16.mxu0 0
    %5573 = vmatpush1.bf16.msra.mxu0 %v5534
    %5574 = vmatprep.subr.bf16.mxu0 0
    %5575 = vmatpush1.bf16.msra.mxu0 %v5535
    %5576 = vmatprep.subr.bf16.mxu0 0
    %5577 = vmatpush1.bf16.msra.mxu0 %v5536
    %5578 = vmatprep.subr.bf16.mxu0 0
    %5579 = vmatpush1.bf16.msra.mxu0 %v5537
    %5580 = vmatprep.subr.bf16.mxu0 0
    %5581 = vmatpush1.bf16.msra.mxu0 %v5538
    %5582 = vmatprep.subr.bf16.mxu0 0
    %5583 = vmatpush1.bf16.msra.mxu0 %v5539
    %5584 = vmatprep.subr.bf16.mxu0 0
    %5585 = vmatpush1.bf16.msra.mxu0 %v5540
    %5586 = vmatprep.subr.bf16.mxu0 0
    %5587 = vmatpush1.bf16.msra.mxu0 %v5541
    %5588 = vmatprep.subr.bf16.mxu0 0
    %5589 = vmatpush1.bf16.msra.mxu0 %v5542
    %5590 = vmatprep.subr.bf16.mxu0 0
    %5591 = vmatpush1.bf16.msra.mxu0 %v5543
    %5592 = vmatprep.mubr.bf16.mxu0 %v5459
    %5593 = vmatmul.mubr.bf16.gmra.mrb[0].mxu0 %v5456
    %v5594 = vpop.f32.mrb[0].mxu0
    %v5595 = vadd.f32 0.0, %v5594
    %v5596 = vpop.f32.mrb[0].mxu0
    %v5597 = vpop.f32.mrb[0].mxu0
    %v5598 = vadd.f32 0.0, %v5597
    %v5599 = vpop.f32.mrb[0].mxu0
    %5600 = vmatprep.mubr.bf16.mxu0 %v5458
    %5601 = vmatmul.mubr.bf16.gmra.mrb[0].mxu0 %v5455
    %v5602 = vpop.f32.mrb[0].mxu0
    %v5603 = vadd.f32 0.0, %v5602
    %v5604 = vpop.f32.mrb[0].mxu0
    %v5605 = vpop.f32.mrb[0].mxu0
    %v5606 = vpop.f32.mrb[0].mxu0
    %5607 = vdwg.mxu0
    %v5608 = vadd.f32 %v5403, %v5595
    %v5609 = vadd.f32 %v5406, %v5598
    %v5610 = vadd.f32 %v5411, %v5603
    %s5611 = scalar_lea.vmem %s3, 384
    %v5612 = vld [vmem:[%s5611] sm:$0xf]
    %v5613 = vld [vmem:[%s5611 + $0x4] sm:$0xf]
    %v5614 = vld [vmem:[%s5611 + $0x8] sm:$0xf]
    %v5615 = vld [vmem:[%s5611 + $0xc] sm:$0xf]
    %v5616 = vld [vmem:[%s5611 + $0x10] sm:$0xf]
    %v5617 = vld [vmem:[%s5611 + $0x14] sm:$0xf]
    %v5618 = vld [vmem:[%s5611 + $0x18] sm:$0xf]
    %v5619 = vld [vmem:[%s5611 + $0x1c] sm:$0xf]
    %v5620 = vld [vmem:[%s5611 + $0x20] sm:$0xf]
    %v5621 = vld [vmem:[%s5611 + $0x24] sm:$0xf]
    %v5622 = vld [vmem:[%s5611 + $0x28] sm:$0xf]
    %v5623 = vld [vmem:[%s5611 + $0x2c] sm:$0xf]
    %v5624 = vld [vmem:[%s5611 + $0x30] sm:$0xf]
    %v5625 = vld [vmem:[%s5611 + $0x34] sm:$0xf]
    %v5626 = vld [vmem:[%s5611 + $0x38] sm:$0xf]
    %v5627 = vld [vmem:[%s5611 + $0x3c] sm:$0xf]
    %v5628 = vld [vmem:[%s5611 + $0x40] sm:$0xf]
    %v5629 = vld [vmem:[%s5611 + $0x44] sm:$0xf]
    %v5630 = vld [vmem:[%s5611 + $0x48] sm:$0xf]
    %v5631 = vld [vmem:[%s5611 + $0x4c] sm:$0xf]
    %v5632 = vld [vmem:[%s5611 + $0x50] sm:$0xf]
    %v5633 = vld [vmem:[%s5611 + $0x54] sm:$0xf]
    %v5634 = vld [vmem:[%s5611 + $0x58] sm:$0xf]
    %v5635 = vld [vmem:[%s5611 + $0x5c] sm:$0xf]
    %v5636 = vld [vmem:[%s5611 + $0x60] sm:$0xf]
    %v5637 = vld [vmem:[%s5611 + $0x64] sm:$0xf]
    %v5638 = vld [vmem:[%s5611 + $0x68] sm:$0xf]
    %v5639 = vld [vmem:[%s5611 + $0x6c] sm:$0xf]
    %v5640 = vld [vmem:[%s5611 + $0x70] sm:$0xf]
    %v5641 = vld [vmem:[%s5611 + $0x74] sm:$0xf]
    %v5642 = vld [vmem:[%s5611 + $0x78] sm:$0xf]
    %v5643 = vld [vmem:[%s5611 + $0x7c] sm:$0xf]
    %vm5644 = vsmask.f32 6400
    %v5645 = vrot.slane %v5095, 1
    %v5646 = vrot.slane %v5097, 2
    %v5647 = vor.u32 %v5645, %v5646
    %v5648 = vrot.slane %v5118, 1
    %v5649 = vrot.slane %v5102, 2
    %v5650 = vor.u32 %v5648, %v5649
    %v5651 = vsel %vm5644, %v5647, %v5650
    %v5652 = vrot.slane %v5107, 1
    %v5653 = vrot.slane %v5109, 2
    %v5654 = vor.u32 %v5652, %v5653
    %v5655 = vrot.slane %v5121, 1
    %v5656 = vrot.slane %v5114, 2
    %v5657 = vor.u32 %v5655, %v5656
    %v5658 = vsel %vm5644, %v5654, %v5657
    %v5695 = vunpack.c.l.b16 %v5612
    %v5696 = vunpack.c.l.b16 %v5613
    %v5697 = vunpack.c.l.b16 %v5614
    %v5698 = vunpack.c.l.b16 %v5615
    %v5699 = vunpack.c.l.b16 %v5616
    %v5700 = vunpack.c.l.b16 %v5617
    %v5701 = vunpack.c.l.b16 %v5618
    %v5702 = vunpack.c.l.b16 %v5619
    %v5703 = vunpack.c.l.b16 %v5620
    %v5704 = vunpack.c.l.b16 %v5621
    %v5705 = vunpack.c.l.b16 %v5622
    %v5706 = vunpack.c.l.b16 %v5623
    %v5707 = vunpack.c.l.b16 %v5624
    %v5708 = vunpack.c.l.b16 %v5625
    %v5709 = vunpack.c.l.b16 %v5626
    %v5710 = vunpack.c.l.b16 %v5627
    %v5711 = vunpack.c.l.b16 %v5628
    %v5712 = vunpack.c.l.b16 %v5629
    %v5713 = vunpack.c.l.b16 %v5630
    %v5714 = vunpack.c.l.b16 %v5631
    %v5715 = vunpack.c.l.b16 %v5632
    %v5716 = vunpack.c.l.b16 %v5633
    %v5717 = vunpack.c.l.b16 %v5634
    %v5718 = vunpack.c.l.b16 %v5635
    %v5719 = vunpack.c.l.b16 %v5636
    %v5720 = vunpack.c.l.b16 %v5637
    %v5721 = vunpack.c.l.b16 %v5638
    %v5722 = vunpack.c.l.b16 %v5639
    %v5723 = vunpack.c.l.b16 %v5640
    %v5724 = vunpack.c.l.b16 %v5641
    %v5725 = vunpack.c.l.b16 %v5642
    %v5726 = vunpack.c.l.b16 %v5643
    %v5727 = vpack.c.b16 %v5696, %v5695
    %v5728 = vpack.c.b16 %v5698, %v5697
    %v5729 = vpack.c.b16 %v5700, %v5699
    %v5730 = vpack.c.b16 %v5702, %v5701
    %v5731 = vpack.c.b16 %v5704, %v5703
    %v5732 = vpack.c.b16 %v5706, %v5705
    %v5733 = vpack.c.b16 %v5708, %v5707
    %v5734 = vpack.c.b16 %v5710, %v5709
    %v5735 = vpack.c.b16 %v5712, %v5711
    %v5736 = vpack.c.b16 %v5714, %v5713
    %v5737 = vpack.c.b16 %v5716, %v5715
    %v5738 = vpack.c.b16 %v5718, %v5717
    %v5739 = vpack.c.b16 %v5720, %v5719
    %v5740 = vpack.c.b16 %v5722, %v5721
    %v5741 = vpack.c.b16 %v5724, %v5723
    %v5742 = vpack.c.b16 %v5726, %v5725
    %5759 = vmatprep.subr.bf16.mxu0 0
    %5760 = vmatpush1.bf16.msra.mxu0 %v5727
    %5761 = vmatprep.subr.bf16.mxu0 0
    %5762 = vmatpush1.bf16.msra.mxu0 %v5728
    %5763 = vmatprep.subr.bf16.mxu0 0
    %5764 = vmatpush1.bf16.msra.mxu0 %v5729
    %5765 = vmatprep.subr.bf16.mxu0 0
    %5766 = vmatpush1.bf16.msra.mxu0 %v5730
    %5767 = vmatprep.subr.bf16.mxu0 0
    %5768 = vmatpush1.bf16.msra.mxu0 %v5731
    %5769 = vmatprep.subr.bf16.mxu0 0
    %5770 = vmatpush1.bf16.msra.mxu0 %v5732
    %5771 = vmatprep.subr.bf16.mxu0 0
    %5772 = vmatpush1.bf16.msra.mxu0 %v5733
    %5773 = vmatprep.subr.bf16.mxu0 0
    %5774 = vmatpush1.bf16.msra.mxu0 %v5734
    %5775 = vmatprep.subr.bf16.mxu0 0
    %5776 = vmatpush1.bf16.msra.mxu0 %v5735
    %5777 = vmatprep.subr.bf16.mxu0 0
    %5778 = vmatpush1.bf16.msra.mxu0 %v5736
    %5779 = vmatprep.subr.bf16.mxu0 0
    %5780 = vmatpush1.bf16.msra.mxu0 %v5737
    %5781 = vmatprep.subr.bf16.mxu0 0
    %5782 = vmatpush1.bf16.msra.mxu0 %v5738
    %5783 = vmatprep.subr.bf16.mxu0 0
    %5784 = vmatpush1.bf16.msra.mxu0 %v5739
    %5785 = vmatprep.subr.bf16.mxu0 0
    %5786 = vmatpush1.bf16.msra.mxu0 %v5740
    %5787 = vmatprep.subr.bf16.mxu0 0
    %5788 = vmatpush1.bf16.msra.mxu0 %v5741
    %5789 = vmatprep.subr.bf16.mxu0 0
    %5790 = vmatpush1.bf16.msra.mxu0 %v5742
    %5791 = vmatprep.mubr.bf16.mxu0 %v5658
    %5792 = vmatmul.mubr.bf16.gmra.mrb[0].mxu0 %v5651
    %v5793 = vpop.f32.mrb[0].mxu0
    %v5794 = vadd.f32 0.0, %v5793
    %v5795 = vpop.f32.mrb[0].mxu0
    %v5796 = vpop.f32.mrb[0].mxu0
    %v5797 = vadd.f32 0.0, %v5796
    %v5798 = vpop.f32.mrb[0].mxu0
    %5799 = vmatprep.mubr.bf16.mxu0 %v5657
    %5800 = vmatmul.mubr.bf16.gmra.mrb[0].mxu0 %v5650
    %v5801 = vpop.f32.mrb[0].mxu0
    %v5802 = vadd.f32 0.0, %v5801
    %v5803 = vpop.f32.mrb[0].mxu0
    %v5804 = vpop.f32.mrb[0].mxu0
    %v5805 = vpop.f32.mrb[0].mxu0
    %5806 = vdwg.mxu0
    %v5807 = vadd.f32 %v5608, %v5794
    %v5808 = vadd.f32 %v5609, %v5797
    %v5809 = vadd.f32 %v5610, %v5802
    %s5810 = scalar_lea.vmem %s3, 512
    %v5811 = vld [vmem:[%s5810] sm:$0xf]
    %v5812 = vld [vmem:[%s5810 + $0x4] sm:$0xf]
    %v5813 = vld [vmem:[%s5810 + $0x8] sm:$0xf]
    %v5814 = vld [vmem:[%s5810 + $0xc] sm:$0xf]
    %v5815 = vld [vmem:[%s5810 + $0x10] sm:$0xf]
    %v5816 = vld [vmem:[%s5810 + $0x14] sm:$0xf]
    %v5817 = vld [vmem:[%s5810 + $0x18] sm:$0xf]
    %v5818 = vld [vmem:[%s5810 + $0x1c] sm:$0xf]
    %v5819 = vld [vmem:[%s5810 + $0x20] sm:$0xf]
    %v5820 = vld [vmem:[%s5810 + $0x24] sm:$0xf]
    %v5821 = vld [vmem:[%s5810 + $0x28] sm:$0xf]
    %v5822 = vld [vmem:[%s5810 + $0x2c] sm:$0xf]
    %v5823 = vld [vmem:[%s5810 + $0x30] sm:$0xf]
    %v5824 = vld [vmem:[%s5810 + $0x34] sm:$0xf]
    %v5825 = vld [vmem:[%s5810 + $0x38] sm:$0xf]
    %v5826 = vld [vmem:[%s5810 + $0x3c] sm:$0xf]
    %v5827 = vld [vmem:[%s5810 + $0x40] sm:$0xf]
    %v5828 = vld [vmem:[%s5810 + $0x44] sm:$0xf]
    %v5829 = vld [vmem:[%s5810 + $0x48] sm:$0xf]
    %v5830 = vld [vmem:[%s5810 + $0x4c] sm:$0xf]
    %v5831 = vld [vmem:[%s5810 + $0x50] sm:$0xf]
    %v5832 = vld [vmem:[%s5810 + $0x54] sm:$0xf]
    %v5833 = vld [vmem:[%s5810 + $0x58] sm:$0xf]
    %v5834 = vld [vmem:[%s5810 + $0x5c] sm:$0xf]
    %v5835 = vld [vmem:[%s5810 + $0x60] sm:$0xf]
    %v5836 = vld [vmem:[%s5810 + $0x64] sm:$0xf]
    %v5837 = vld [vmem:[%s5810 + $0x68] sm:$0xf]
    %v5838 = vld [vmem:[%s5810 + $0x6c] sm:$0xf]
    %v5839 = vld [vmem:[%s5810 + $0x70] sm:$0xf]
    %v5840 = vld [vmem:[%s5810 + $0x74] sm:$0xf]
    %v5841 = vld [vmem:[%s5810 + $0x78] sm:$0xf]
    %v5842 = vld [vmem:[%s5810 + $0x7c] sm:$0xf]
    %vm5843 = vcmask 1045504
    %v5844 = vrot.slane %v5024, 2
    %v5845 = vrot.slane %v5026, 2
    %v5846 = vsel %vm5843, %v5844, %v5845
    %v5847 = vrot.slane %v5025, 2
    %v5848 = vrot.slane %v5027, 2
    %v5849 = vsel %vm5843, %v5847, %v5848
    %v5886 = vunpack.c.l.b16 %v5811
    %v5887 = vunpack.c.l.b16 %v5812
    %v5888 = vunpack.c.l.b16 %v5813
    %v5889 = vunpack.c.l.b16 %v5814
    %v5890 = vunpack.c.l.b16 %v5815
    %v5891 = vunpack.c.l.b16 %v5816
    %v5892 = vunpack.c.l.b16 %v5817
    %v5893 = vunpack.c.l.b16 %v5818
    %v5894 = vunpack.c.l.b16 %v5819
    %v5895 = vunpack.c.l.b16 %v5820
    %v5896 = vunpack.c.l.b16 %v5821
    %v5897 = vunpack.c.l.b16 %v5822
    %v5898 = vunpack.c.l.b16 %v5823
    %v5899 = vunpack.c.l.b16 %v5824
    %v5900 = vunpack.c.l.b16 %v5825
    %v5901 = vunpack.c.l.b16 %v5826
    %v5902 = vunpack.c.l.b16 %v5827
    %v5903 = vunpack.c.l.b16 %v5828
    %v5904 = vunpack.c.l.b16 %v5829
    %v5905 = vunpack.c.l.b16 %v5830
    %v5906 = vunpack.c.l.b16 %v5831
    %v5907 = vunpack.c.l.b16 %v5832
    %v5908 = vunpack.c.l.b16 %v5833
    %v5909 = vunpack.c.l.b16 %v5834
    %v5910 = vunpack.c.l.b16 %v5835
    %v5911 = vunpack.c.l.b16 %v5836
    %v5912 = vunpack.c.l.b16 %v5837
    %v5913 = vunpack.c.l.b16 %v5838
    %v5914 = vunpack.c.l.b16 %v5839
    %v5915 = vunpack.c.l.b16 %v5840
    %v5916 = vunpack.c.l.b16 %v5841
    %v5917 = vunpack.c.l.b16 %v5842
    %v5918 = vpack.c.b16 %v5887, %v5886
    %v5919 = vpack.c.b16 %v5889, %v5888
    %v5920 = vpack.c.b16 %v5891, %v5890
    %v5921 = vpack.c.b16 %v5893, %v5892
    %v5922 = vpack.c.b16 %v5895, %v5894
    %v5923 = vpack.c.b16 %v5897, %v5896
    %v5924 = vpack.c.b16 %v5899, %v5898
    %v5925 = vpack.c.b16 %v5901, %v5900
    %v5926 = vpack.c.b16 %v5903, %v5902
    %v5927 = vpack.c.b16 %v5905, %v5904
    %v5928 = vpack.c.b16 %v5907, %v5906
    %v5929 = vpack.c.b16 %v5909, %v5908
    %v5930 = vpack.c.b16 %v5911, %v5910
    %v5931 = vpack.c.b16 %v5913, %v5912
    %v5932 = vpack.c.b16 %v5915, %v5914
    %v5933 = vpack.c.b16 %v5917, %v5916
    %5950 = vmatprep.subr.bf16.mxu0 0
    %5951 = vmatpush1.bf16.msra.mxu0 %v5918
    %5952 = vmatprep.subr.bf16.mxu0 0
    %5953 = vmatpush1.bf16.msra.mxu0 %v5919
    %5954 = vmatprep.subr.bf16.mxu0 0
    %5955 = vmatpush1.bf16.msra.mxu0 %v5920
    %5956 = vmatprep.subr.bf16.mxu0 0
    %5957 = vmatpush1.bf16.msra.mxu0 %v5921
    %5958 = vmatprep.subr.bf16.mxu0 0
    %5959 = vmatpush1.bf16.msra.mxu0 %v5922
    %5960 = vmatprep.subr.bf16.mxu0 0
    %5961 = vmatpush1.bf16.msra.mxu0 %v5923
    %5962 = vmatprep.subr.bf16.mxu0 0
    %5963 = vmatpush1.bf16.msra.mxu0 %v5924
    %5964 = vmatprep.subr.bf16.mxu0 0
    %5965 = vmatpush1.bf16.msra.mxu0 %v5925
    %5966 = vmatprep.subr.bf16.mxu0 0
    %5967 = vmatpush1.bf16.msra.mxu0 %v5926
    %5968 = vmatprep.subr.bf16.mxu0 0
    %5969 = vmatpush1.bf16.msra.mxu0 %v5927
    %5970 = vmatprep.subr.bf16.mxu0 0
    %5971 = vmatpush1.bf16.msra.mxu0 %v5928
    %5972 = vmatprep.subr.bf16.mxu0 0
    %5973 = vmatpush1.bf16.msra.mxu0 %v5929
    %5974 = vmatprep.subr.bf16.mxu0 0
    %5975 = vmatpush1.bf16.msra.mxu0 %v5930
    %5976 = vmatprep.subr.bf16.mxu0 0
    %5977 = vmatpush1.bf16.msra.mxu0 %v5931
    %5978 = vmatprep.subr.bf16.mxu0 0
    %5979 = vmatpush1.bf16.msra.mxu0 %v5932
    %5980 = vmatprep.subr.bf16.mxu0 0
    %5981 = vmatpush1.bf16.msra.mxu0 %v5933
    %5982 = vmatprep.mubr.bf16.mxu0 %v5849
    %5983 = vmatmul.mubr.bf16.gmra.mrb[0].mxu0 %v5846
    %v5984 = vpop.f32.mrb[0].mxu0
    %v5985 = vadd.f32 0.0, %v5984
    %v5986 = vpop.f32.mrb[0].mxu0
    %v5987 = vpop.f32.mrb[0].mxu0
    %v5988 = vadd.f32 0.0, %v5987
    %v5989 = vpop.f32.mrb[0].mxu0
    %5990 = vmatprep.mubr.bf16.mxu0 %v5848
    %5991 = vmatmul.mubr.bf16.gmra.mrb[0].mxu0 %v5845
    %v5992 = vpop.f32.mrb[0].mxu0
    %v5993 = vadd.f32 0.0, %v5992
    %v5994 = vpop.f32.mrb[0].mxu0
    %v5995 = vpop.f32.mrb[0].mxu0
    %v5996 = vpop.f32.mrb[0].mxu0
    %5997 = vdwg.mxu0
    %v5998 = vadd.f32 %v5807, %v5985
    %v5999 = vadd.f32 %v5808, %v5988
    %v6000 = vadd.f32 %v5809, %v5993
    %s6001 = scalar_lea.vmem %s3, 640
    %v6002 = vld [vmem:[%s6001] sm:$0xf]
    %v6003 = vld [vmem:[%s6001 + $0x4] sm:$0xf]
    %v6004 = vld [vmem:[%s6001 + $0x8] sm:$0xf]
    %v6005 = vld [vmem:[%s6001 + $0xc] sm:$0xf]
    %v6006 = vld [vmem:[%s6001 + $0x10] sm:$0xf]
    %v6007 = vld [vmem:[%s6001 + $0x14] sm:$0xf]
    %v6008 = vld [vmem:[%s6001 + $0x18] sm:$0xf]
    %v6009 = vld [vmem:[%s6001 + $0x1c] sm:$0xf]
    %v6010 = vld [vmem:[%s6001 + $0x20] sm:$0xf]
    %v6011 = vld [vmem:[%s6001 + $0x24] sm:$0xf]
    %v6012 = vld [vmem:[%s6001 + $0x28] sm:$0xf]
    %v6013 = vld [vmem:[%s6001 + $0x2c] sm:$0xf]
    %v6014 = vld [vmem:[%s6001 + $0x30] sm:$0xf]
    %v6015 = vld [vmem:[%s6001 + $0x34] sm:$0xf]
    %v6016 = vld [vmem:[%s6001 + $0x38] sm:$0xf]
    %v6017 = vld [vmem:[%s6001 + $0x3c] sm:$0xf]
    %v6018 = vld [vmem:[%s6001 + $0x40] sm:$0xf]
    %v6019 = vld [vmem:[%s6001 + $0x44] sm:$0xf]
    %v6020 = vld [vmem:[%s6001 + $0x48] sm:$0xf]
    %v6021 = vld [vmem:[%s6001 + $0x4c] sm:$0xf]
    %v6022 = vld [vmem:[%s6001 + $0x50] sm:$0xf]
    %v6023 = vld [vmem:[%s6001 + $0x54] sm:$0xf]
    %v6024 = vld [vmem:[%s6001 + $0x58] sm:$0xf]
    %v6025 = vld [vmem:[%s6001 + $0x5c] sm:$0xf]
    %v6026 = vld [vmem:[%s6001 + $0x60] sm:$0xf]
    %v6027 = vld [vmem:[%s6001 + $0x64] sm:$0xf]
    %v6028 = vld [vmem:[%s6001 + $0x68] sm:$0xf]
    %v6029 = vld [vmem:[%s6001 + $0x6c] sm:$0xf]
    %v6030 = vld [vmem:[%s6001 + $0x70] sm:$0xf]
    %v6031 = vld [vmem:[%s6001 + $0x74] sm:$0xf]
    %v6032 = vld [vmem:[%s6001 + $0x78] sm:$0xf]
    %v6033 = vld [vmem:[%s6001 + $0x7c] sm:$0xf]
    %vm6034 = vsmask.f32 5376
    %v6035 = vrot.slane %v5095, 2
    %v6036 = vrot.slane %v5097, 3
    %v6037 = vor.u32 %v6035, %v6036
    %v6038 = vrot.slane %v5118, 2
    %v6039 = vrot.slane %v5102, 3
    %v6040 = vor.u32 %v6038, %v6039
    %v6041 = vsel %vm6034, %v6037, %v6040
    %v6042 = vrot.slane %v5107, 2
    %v6043 = vrot.slane %v5109, 3
    %v6044 = vor.u32 %v6042, %v6043
    %v6045 = vrot.slane %v5121, 2
    %v6046 = vrot.slane %v5114, 3
    %v6047 = vor.u32 %v6045, %v6046
    %v6048 = vsel %vm6034, %v6044, %v6047
    %v6085 = vunpack.c.l.b16 %v6002
    %v6086 = vunpack.c.l.b16 %v6003
    %v6087 = vunpack.c.l.b16 %v6004
    %v6088 = vunpack.c.l.b16 %v6005
    %v6089 = vunpack.c.l.b16 %v6006
    %v6090 = vunpack.c.l.b16 %v6007
    %v6091 = vunpack.c.l.b16 %v6008
    %v6092 = vunpack.c.l.b16 %v6009
    %v6093 = vunpack.c.l.b16 %v6010
    %v6094 = vunpack.c.l.b16 %v6011
    %v6095 = vunpack.c.l.b16 %v6012
    %v6096 = vunpack.c.l.b16 %v6013
    %v6097 = vunpack.c.l.b16 %v6014
    %v6098 = vunpack.c.l.b16 %v6015
    %v6099 = vunpack.c.l.b16 %v6016
    %v6100 = vunpack.c.l.b16 %v6017
    %v6101 = vunpack.c.l.b16 %v6018
    %v6102 = vunpack.c.l.b16 %v6019
    %v6103 = vunpack.c.l.b16 %v6020
    %v6104 = vunpack.c.l.b16 %v6021
    %v6105 = vunpack.c.l.b16 %v6022
    %v6106 = vunpack.c.l.b16 %v6023
    %v6107 = vunpack.c.l.b16 %v6024
    %v6108 = vunpack.c.l.b16 %v6025
    %v6109 = vunpack.c.l.b16 %v6026
    %v6110 = vunpack.c.l.b16 %v6027
    %v6111 = vunpack.c.l.b16 %v6028
    %v6112 = vunpack.c.l.b16 %v6029
    %v6113 = vunpack.c.l.b16 %v6030
    %v6114 = vunpack.c.l.b16 %v6031
    %v6115 = vunpack.c.l.b16 %v6032
    %v6116 = vunpack.c.l.b16 %v6033
    %v6117 = vpack.c.b16 %v6086, %v6085
    %v6118 = vpack.c.b16 %v6088, %v6087
    %v6119 = vpack.c.b16 %v6090, %v6089
    %v6120 = vpack.c.b16 %v6092, %v6091
    %v6121 = vpack.c.b16 %v6094, %v6093
    %v6122 = vpack.c.b16 %v6096, %v6095
    %v6123 = vpack.c.b16 %v6098, %v6097
    %v6124 = vpack.c.b16 %v6100, %v6099
    %v6125 = vpack.c.b16 %v6102, %v6101
    %v6126 = vpack.c.b16 %v6104, %v6103
    %v6127 = vpack.c.b16 %v6106, %v6105
    %v6128 = vpack.c.b16 %v6108, %v6107
    %v6129 = vpack.c.b16 %v6110, %v6109
    %v6130 = vpack.c.b16 %v6112, %v6111
    %v6131 = vpack.c.b16 %v6114, %v6113
    %v6132 = vpack.c.b16 %v6116, %v6115
    %6149 = vmatprep.subr.bf16.mxu0 0
    %6150 = vmatpush1.bf16.msra.mxu0 %v6117
    %6151 = vmatprep.subr.bf16.mxu0 0
    %6152 = vmatpush1.bf16.msra.mxu0 %v6118
    %6153 = vmatprep.subr.bf16.mxu0 0
    %6154 = vmatpush1.bf16.msra.mxu0 %v6119
    %6155 = vmatprep.subr.bf16.mxu0 0
    %6156 = vmatpush1.bf16.msra.mxu0 %v6120
    %6157 = vmatprep.subr.bf16.mxu0 0
    %6158 = vmatpush1.bf16.msra.mxu0 %v6121
    %6159 = vmatprep.subr.bf16.mxu0 0
    %6160 = vmatpush1.bf16.msra.mxu0 %v6122
    %6161 = vmatprep.subr.bf16.mxu0 0
    %6162 = vmatpush1.bf16.msra.mxu0 %v6123
    %6163 = vmatprep.subr.bf16.mxu0 0
    %6164 = vmatpush1.bf16.msra.mxu0 %v6124
    %6165 = vmatprep.subr.bf16.mxu0 0
    %6166 = vmatpush1.bf16.msra.mxu0 %v6125
    %6167 = vmatprep.subr.bf16.mxu0 0
    %6168 = vmatpush1.bf16.msra.mxu0 %v6126
    %6169 = vmatprep.subr.bf16.mxu0 0
    %6170 = vmatpush1.bf16.msra.mxu0 %v6127
    %6171 = vmatprep.subr.bf16.mxu0 0
    %6172 = vmatpush1.bf16.msra.mxu0 %v6128
    %6173 = vmatprep.subr.bf16.mxu0 0
    %6174 = vmatpush1.bf16.msra.mxu0 %v6129
    %6175 = vmatprep.subr.bf16.mxu0 0
    %6176 = vmatpush1.bf16.msra.mxu0 %v6130
    %6177 = vmatprep.subr.bf16.mxu0 0
    %6178 = vmatpush1.bf16.msra.mxu0 %v6131
    %6179 = vmatprep.subr.bf16.mxu0 0
    %6180 = vmatpush1.bf16.msra.mxu0 %v6132
    %6181 = vmatprep.mubr.bf16.mxu0 %v6048
    %6182 = vmatmul.mubr.bf16.gmra.mrb[0].mxu0 %v6041
    %v6183 = vpop.f32.mrb[0].mxu0
    %v6184 = vadd.f32 0.0, %v6183
    %v6185 = vpop.f32.mrb[0].mxu0
    %v6186 = vpop.f32.mrb[0].mxu0
    %v6187 = vadd.f32 0.0, %v6186
    %v6188 = vpop.f32.mrb[0].mxu0
    %6189 = vmatprep.mubr.bf16.mxu0 %v6047
    %6190 = vmatmul.mubr.bf16.gmra.mrb[0].mxu0 %v6040
    %v6191 = vpop.f32.mrb[0].mxu0
    %v6192 = vadd.f32 0.0, %v6191
    %v6193 = vpop.f32.mrb[0].mxu0
    %v6194 = vpop.f32.mrb[0].mxu0
    %v6195 = vpop.f32.mrb[0].mxu0
    %6196 = vdwg.mxu0
    %v6197 = vadd.f32 %v5998, %v6184
    %v6198 = vadd.f32 %v5999, %v6187
    %v6199 = vadd.f32 %v6000, %v6192
    %s6200 = scalar_lea.vmem %s3, 768
    %v6201 = vld [vmem:[%s6200] sm:$0xf]
    %v6202 = vld [vmem:[%s6200 + $0x4] sm:$0xf]
    %v6203 = vld [vmem:[%s6200 + $0x8] sm:$0xf]
    %v6204 = vld [vmem:[%s6200 + $0xc] sm:$0xf]
    %v6205 = vld [vmem:[%s6200 + $0x10] sm:$0xf]
    %v6206 = vld [vmem:[%s6200 + $0x14] sm:$0xf]
    %v6207 = vld [vmem:[%s6200 + $0x18] sm:$0xf]
    %v6208 = vld [vmem:[%s6200 + $0x1c] sm:$0xf]
    %v6209 = vld [vmem:[%s6200 + $0x20] sm:$0xf]
    %v6210 = vld [vmem:[%s6200 + $0x24] sm:$0xf]
    %v6211 = vld [vmem:[%s6200 + $0x28] sm:$0xf]
    %v6212 = vld [vmem:[%s6200 + $0x2c] sm:$0xf]
    %v6213 = vld [vmem:[%s6200 + $0x30] sm:$0xf]
    %v6214 = vld [vmem:[%s6200 + $0x34] sm:$0xf]
    %v6215 = vld [vmem:[%s6200 + $0x38] sm:$0xf]
    %v6216 = vld [vmem:[%s6200 + $0x3c] sm:$0xf]
    %v6217 = vld [vmem:[%s6200 + $0x40] sm:$0xf]
    %v6218 = vld [vmem:[%s6200 + $0x44] sm:$0xf]
    %v6219 = vld [vmem:[%s6200 + $0x48] sm:$0xf]
    %v6220 = vld [vmem:[%s6200 + $0x4c] sm:$0xf]
    %v6221 = vld [vmem:[%s6200 + $0x50] sm:$0xf]
    %v6222 = vld [vmem:[%s6200 + $0x54] sm:$0xf]
    %v6223 = vld [vmem:[%s6200 + $0x58] sm:$0xf]
    %v6224 = vld [vmem:[%s6200 + $0x5c] sm:$0xf]
    %v6225 = vld [vmem:[%s6200 + $0x60] sm:$0xf]
    %v6226 = vld [vmem:[%s6200 + $0x64] sm:$0xf]
    %v6227 = vld [vmem:[%s6200 + $0x68] sm:$0xf]
    %v6228 = vld [vmem:[%s6200 + $0x6c] sm:$0xf]
    %v6229 = vld [vmem:[%s6200 + $0x70] sm:$0xf]
    %v6230 = vld [vmem:[%s6200 + $0x74] sm:$0xf]
    %v6231 = vld [vmem:[%s6200 + $0x78] sm:$0xf]
    %v6232 = vld [vmem:[%s6200 + $0x7c] sm:$0xf]
    %vm6233 = vcmask 1044480
    %v6234 = vrot.slane %v5024, 3
    %v6235 = vrot.slane %v5026, 3
    %v6236 = vsel %vm6233, %v6234, %v6235
    %v6237 = vrot.slane %v5025, 3
    %v6238 = vrot.slane %v5027, 3
    %v6239 = vsel %vm6233, %v6237, %v6238
    %v6276 = vunpack.c.l.b16 %v6201
    %v6277 = vunpack.c.l.b16 %v6202
    %v6278 = vunpack.c.l.b16 %v6203
    %v6279 = vunpack.c.l.b16 %v6204
    %v6280 = vunpack.c.l.b16 %v6205
    %v6281 = vunpack.c.l.b16 %v6206
    %v6282 = vunpack.c.l.b16 %v6207
    %v6283 = vunpack.c.l.b16 %v6208
    %v6284 = vunpack.c.l.b16 %v6209
    %v6285 = vunpack.c.l.b16 %v6210
    %v6286 = vunpack.c.l.b16 %v6211
    %v6287 = vunpack.c.l.b16 %v6212
    %v6288 = vunpack.c.l.b16 %v6213
    %v6289 = vunpack.c.l.b16 %v6214
    %v6290 = vunpack.c.l.b16 %v6215
    %v6291 = vunpack.c.l.b16 %v6216
    %v6292 = vunpack.c.l.b16 %v6217
    %v6293 = vunpack.c.l.b16 %v6218
    %v6294 = vunpack.c.l.b16 %v6219
    %v6295 = vunpack.c.l.b16 %v6220
    %v6296 = vunpack.c.l.b16 %v6221
    %v6297 = vunpack.c.l.b16 %v6222
    %v6298 = vunpack.c.l.b16 %v6223
    %v6299 = vunpack.c.l.b16 %v6224
    %v6300 = vunpack.c.l.b16 %v6225
    %v6301 = vunpack.c.l.b16 %v6226
    %v6302 = vunpack.c.l.b16 %v6227
    %v6303 = vunpack.c.l.b16 %v6228
    %v6304 = vunpack.c.l.b16 %v6229
    %v6305 = vunpack.c.l.b16 %v6230
    %v6306 = vunpack.c.l.b16 %v6231
    %v6307 = vunpack.c.l.b16 %v6232
    %v6308 = vpack.c.b16 %v6277, %v6276
    %v6309 = vpack.c.b16 %v6279, %v6278
    %v6310 = vpack.c.b16 %v6281, %v6280
    %v6311 = vpack.c.b16 %v6283, %v6282
    %v6312 = vpack.c.b16 %v6285, %v6284
    %v6313 = vpack.c.b16 %v6287, %v6286
    %v6314 = vpack.c.b16 %v6289, %v6288
    %v6315 = vpack.c.b16 %v6291, %v6290
    %v6316 = vpack.c.b16 %v6293, %v6292
    %v6317 = vpack.c.b16 %v6295, %v6294
    %v6318 = vpack.c.b16 %v6297, %v6296
    %v6319 = vpack.c.b16 %v6299, %v6298
    %v6320 = vpack.c.b16 %v6301, %v6300
    %v6321 = vpack.c.b16 %v6303, %v6302
    %v6322 = vpack.c.b16 %v6305, %v6304
    %v6323 = vpack.c.b16 %v6307, %v6306
    %6340 = vmatprep.subr.bf16.mxu0 0
    %6341 = vmatpush1.bf16.msra.mxu0 %v6308
    %6342 = vmatprep.subr.bf16.mxu0 0
    %6343 = vmatpush1.bf16.msra.mxu0 %v6309
    %6344 = vmatprep.subr.bf16.mxu0 0
    %6345 = vmatpush1.bf16.msra.mxu0 %v6310
    %6346 = vmatprep.subr.bf16.mxu0 0
    %6347 = vmatpush1.bf16.msra.mxu0 %v6311
    %6348 = vmatprep.subr.bf16.mxu0 0
    %6349 = vmatpush1.bf16.msra.mxu0 %v6312
    %6350 = vmatprep.subr.bf16.mxu0 0
    %6351 = vmatpush1.bf16.msra.mxu0 %v6313
    %6352 = vmatprep.subr.bf16.mxu0 0
    %6353 = vmatpush1.bf16.msra.mxu0 %v6314
    %6354 = vmatprep.subr.bf16.mxu0 0
    %6355 = vmatpush1.bf16.msra.mxu0 %v6315
    %6356 = vmatprep.subr.bf16.mxu0 0
    %6357 = vmatpush1.bf16.msra.mxu0 %v6316
    %6358 = vmatprep.subr.bf16.mxu0 0
    %6359 = vmatpush1.bf16.msra.mxu0 %v6317
    %6360 = vmatprep.subr.bf16.mxu0 0
    %6361 = vmatpush1.bf16.msra.mxu0 %v6318
    %6362 = vmatprep.subr.bf16.mxu0 0
    %6363 = vmatpush1.bf16.msra.mxu0 %v6319
    %6364 = vmatprep.subr.bf16.mxu0 0
    %6365 = vmatpush1.bf16.msra.mxu0 %v6320
    %6366 = vmatprep.subr.bf16.mxu0 0
    %6367 = vmatpush1.bf16.msra.mxu0 %v6321
    %6368 = vmatprep.subr.bf16.mxu0 0
    %6369 = vmatpush1.bf16.msra.mxu0 %v6322
    %6370 = vmatprep.subr.bf16.mxu0 0
    %6371 = vmatpush1.bf16.msra.mxu0 %v6323
    %6372 = vmatprep.mubr.bf16.mxu0 %v6239
    %6373 = vmatmul.mubr.bf16.gmra.mrb[0].mxu0 %v6236
    %v6374 = vpop.f32.mrb[0].mxu0
    %v6375 = vadd.f32 0.0, %v6374
    %v6376 = vpop.f32.mrb[0].mxu0
    %v6377 = vpop.f32.mrb[0].mxu0
    %v6378 = vadd.f32 0.0, %v6377
    %v6379 = vpop.f32.mrb[0].mxu0
    %6380 = vmatprep.mubr.bf16.mxu0 %v6238
    %6381 = vmatmul.mubr.bf16.gmra.mrb[0].mxu0 %v6235
    %v6382 = vpop.f32.mrb[0].mxu0
    %v6383 = vadd.f32 0.0, %v6382
    %v6384 = vpop.f32.mrb[0].mxu0
    %v6385 = vpop.f32.mrb[0].mxu0
    %v6386 = vpop.f32.mrb[0].mxu0
    %6387 = vdwg.mxu0
    %v6388 = vadd.f32 %v6197, %v6375
    %v6389 = vadd.f32 %v6198, %v6378
    %v6390 = vadd.f32 %v6199, %v6383
    %v6391 = vld [vmem:[#allocation8] sm:$0x1]
    %v6393 = vlaneseq
    %v6394 = vshrl.u32 %v6393, 7
    %v6395 = vsub.s32 0, %v6394
    %v6396 = vrot.slane %v6391, %v6395
    %v6398 = vadd.f32 %v6388, %v6396
    %v6399 = vadd.f32 %v6389, %v6396
    %v6400 = vadd.f32 %v6390, %v6396
    %v6401 = vmax.f32 %v6398, 0.0
    %v6402 = vmax.f32 %v6399, 0.0
    %v6403 = vmax.f32 %v6400, 0.0
    %v6404 = vpack.c.bf16 %v6402, %v6401
    %v6405 = vpack.c.bf16 %v6403, %v6403
    %v6406 = vld [vmem:[#allocation10] sm:$0xf]
    %v6407 = vld [vmem:[#allocation10 + $0x4] sm:$0xf]
    %v6408 = vld [vmem:[#allocation10 + $0x8] sm:$0xf]
    %v6409 = vld [vmem:[#allocation10 + $0xc] sm:$0xf]
    %v6410 = vld [vmem:[#allocation10 + $0x10] sm:$0xf]
    %v6411 = vld [vmem:[#allocation10 + $0x14] sm:$0xf]
    %v6412 = vld [vmem:[#allocation10 + $0x18] sm:$0xf]
    %v6413 = vld [vmem:[#allocation10 + $0x1c] sm:$0xf]
    %s6414 = scalar_lea.vmem [#allocation10], 32
    %v6415 = vld [vmem:[%s6414] sm:$0xf]
    %v6416 = vld [vmem:[%s6414 + $0x4] sm:$0xf]
    %v6417 = vld [vmem:[%s6414 + $0x8] sm:$0xf]
    %v6418 = vld [vmem:[%s6414 + $0xc] sm:$0xf]
    %v6419 = vld [vmem:[%s6414 + $0x10] sm:$0xf]
    %v6420 = vld [vmem:[%s6414 + $0x14] sm:$0xf]
    %v6421 = vld [vmem:[%s6414 + $0x18] sm:$0xf]
    %v6422 = vld [vmem:[%s6414 + $0x1c] sm:$0xf]
    %v6424 = vshrl.u32 %v6404, 16
    %v6426 = vshll.u32 %v6404, 16
    %v6428 = vrot.slane %v6426, 1
    %v6429 = vor.u32 %v6424, %v6428
    %v6431 = vshll.u32 %v6405, 16
    %v6433 = vrot.slane %v6431, 1
    %v6434 = vsel %vm5093, %v6429, %v6433
    %v6435 = vshrl.u32 %v6405, 16
    %v6437 = vor.u32 %v6435, %v6433
    %v6446 = vunpack.c.l.b16 %v6415
    %v6447 = vunpack.c.l.b16 %v6416
    %v6448 = vunpack.c.l.b16 %v6417
    %v6449 = vunpack.c.l.b16 %v6418
    %v6450 = vunpack.c.l.b16 %v6419
    %v6451 = vunpack.c.l.b16 %v6420
    %v6452 = vunpack.c.l.b16 %v6421
    %v6453 = vunpack.c.l.b16 %v6422
    %v6454 = vpack.c.b16 %v6447, %v6446
    %v6455 = vpack.c.b16 %v6449, %v6448
    %v6456 = vpack.c.b16 %v6451, %v6450
    %v6457 = vpack.c.b16 %v6453, %v6452
    %vm6462 = vcmask 523264
    %v6464 = vsel %vm6462, %v6434, 0
    %v6467 = vsel %vm6462, %v6437, 0
    %6469 = vmatprep.subr.bf16.mxu0 0
    %6470 = vmatpush1.bf16.msra.mxu0 %v6454
    %6471 = vmatprep.subr.bf16.mxu0 0
    %6472 = vmatpush1.bf16.msra.mxu0 %v6455
    %6473 = vmatprep.subr.bf16.mxu0 0
    %6474 = vmatpush1.bf16.msra.mxu0 %v6456
    %6475 = vmatprep.subr.bf16.mxu0 0
    %6476 = vmatpush1.bf16.msra.mxu0 %v6457
    %6477 = vmatprep.subr.bf16.mxu0 0
    %6478 = vmatpush1.bf16.msra.mxu0 0
    %6479 = vmatprep.subr.bf16.mxu0 0
    %6480 = vmatpush1.bf16.msra.mxu0 0
    %6481 = vmatprep.subr.bf16.mxu0 0
    %6482 = vmatpush1.bf16.msra.mxu0 0
    %6483 = vmatprep.subr.bf16.mxu0 0
    %6484 = vmatpush1.bf16.msra.mxu0 0
    %6485 = vmatprep.subr.bf16.mxu0 0
    %6486 = vmatpush1.bf16.msra.mxu0 0
    %6487 = vmatprep.subr.bf16.mxu0 0
    %6488 = vmatpush1.bf16.msra.mxu0 0
    %6489 = vmatprep.subr.bf16.mxu0 0
    %6490 = vmatpush1.bf16.msra.mxu0 0
    %6491 = vmatprep.subr.bf16.mxu0 0
    %6492 = vmatpush1.bf16.msra.mxu0 0
    %6493 = vmatprep.subr.bf16.mxu0 0
    %6494 = vmatpush1.bf16.msra.mxu0 0
    %6495 = vmatprep.subr.bf16.mxu0 0
    %6496 = vmatpush1.bf16.msra.mxu0 0
    %6497 = vmatprep.subr.bf16.mxu0 0
    %6498 = vmatpush1.bf16.msra.mxu0 0
    %6499 = vmatprep.subr.bf16.mxu0 0
    %6500 = vmatpush1.bf16.msra.mxu0 0
    %6501 = vmatprep.mubr.bf16.mxu0 0
    %6502 = vmatmul.mubr.bf16.gmra.mrb[0].mxu0 %v6464
    %v6503 = vpop.f32.mrb[0].mxu0
    %v6504 = vadd.f32 0.0, %v6503
    %v6505 = vpop.f32.mrb[0].mxu0
    %v6506 = vpop.f32.mrb[0].mxu0
    %v6507 = vadd.f32 0.0, %v6506
    %v6508 = vpop.f32.mrb[0].mxu0
    %6509 = vmatprep.mubr.bf16.mxu0 0
    %6510 = vmatmul.mubr.bf16.gmra.mrb[0].mxu0 %v6467
    %v6511 = vpop.f32.mrb[0].mxu0
    %v6512 = vadd.f32 0.0, %v6511
    %v6513 = vpop.f32.mrb[0].mxu0
    %v6514 = vpop.f32.mrb[0].mxu0
    %v6515 = vpop.f32.mrb[0].mxu0
    %6516 = vdwg.mxu0
    %v6525 = vunpack.c.l.b16 %v6406
    %v6526 = vunpack.c.l.b16 %v6407
    %v6527 = vunpack.c.l.b16 %v6408
    %v6528 = vunpack.c.l.b16 %v6409
    %v6529 = vunpack.c.l.b16 %v6410
    %v6530 = vunpack.c.l.b16 %v6411
    %v6531 = vunpack.c.l.b16 %v6412
    %v6532 = vunpack.c.l.b16 %v6413
    %v6533 = vpack.c.b16 %v6526, %v6525
    %v6534 = vpack.c.b16 %v6528, %v6527
    %v6535 = vpack.c.b16 %v6530, %v6529
    %v6536 = vpack.c.b16 %v6532, %v6531
    %v6541 = vsel %vm6462, %v6404, 0
    %v6543 = vsel %vm6462, %v6405, 0
    %6545 = vmatprep.subr.bf16.mxu0 0
    %6546 = vmatpush1.bf16.msra.mxu0 %v6533
    %6547 = vmatprep.subr.bf16.mxu0 0
    %6548 = vmatpush1.bf16.msra.mxu0 %v6534
    %6549 = vmatprep.subr.bf16.mxu0 0
    %6550 = vmatpush1.bf16.msra.mxu0 %v6535
    %6551 = vmatprep.subr.bf16.mxu0 0
    %6552 = vmatpush1.bf16.msra.mxu0 %v6536
    %6553 = vmatprep.subr.bf16.mxu0 0
    %6554 = vmatpush1.bf16.msra.mxu0 0
    %6555 = vmatprep.subr.bf16.mxu0 0
    %6556 = vmatpush1.bf16.msra.mxu0 0
    %6557 = vmatprep.subr.bf16.mxu0 0
    %6558 = vmatpush1.bf16.msra.mxu0 0
    %6559 = vmatprep.subr.bf16.mxu0 0
    %6560 = vmatpush1.bf16.msra.mxu0 0
    %6561 = vmatprep.subr.bf16.mxu0 0
    %6562 = vmatpush1.bf16.msra.mxu0 0
    %6563 = vmatprep.subr.bf16.mxu0 0
    %6564 = vmatpush1.bf16.msra.mxu0 0
    %6565 = vmatprep.subr.bf16.mxu0 0
    %6566 = vmatpush1.bf16.msra.mxu0 0
    %6567 = vmatprep.subr.bf16.mxu0 0
    %6568 = vmatpush1.bf16.msra.mxu0 0
    %6569 = vmatprep.subr.bf16.mxu0 0
    %6570 = vmatpush1.bf16.msra.mxu0 0
    %6571 = vmatprep.subr.bf16.mxu0 0
    %6572 = vmatpush1.bf16.msra.mxu0 0
    %6573 = vmatprep.subr.bf16.mxu0 0
    %6574 = vmatpush1.bf16.msra.mxu0 0
    %6575 = vmatprep.subr.bf16.mxu0 0
    %6576 = vmatpush1.bf16.msra.mxu0 0
    %6577 = vmatprep.mubr.bf16.mxu0 0
    %6578 = vmatmul.mubr.bf16.gmra.mrb[0].mxu0 %v6541
    %v6579 = vpop.f32.mrb[0].mxu0
    %v6580 = vadd.f32 %v6504, %v6579
    %v6581 = vpop.f32.mrb[0].mxu0
    %v6582 = vpop.f32.mrb[0].mxu0
    %v6583 = vadd.f32 %v6507, %v6582
    %v6584 = vpop.f32.mrb[0].mxu0
    %6585 = vmatprep.mubr.bf16.mxu0 0
    %6586 = vmatmul.mubr.bf16.gmra.mrb[0].mxu0 %v6543
    %v6587 = vpop.f32.mrb[0].mxu0
    %v6588 = vadd.f32 %v6512, %v6587
    %v6589 = vpop.f32.mrb[0].mxu0
    %v6590 = vpop.f32.mrb[0].mxu0
    %v6591 = vpop.f32.mrb[0].mxu0
    %6592 = vdwg.mxu0
    %s6593 = scalar_lea.vmem [#allocation10], 64
    %v6594 = vld [vmem:[%s6593] sm:$0xf]
    %v6595 = vld [vmem:[%s6593 + $0x4] sm:$0xf]
    %v6596 = vld [vmem:[%s6593 + $0x8] sm:$0xf]
    %v6597 = vld [vmem:[%s6593 + $0xc] sm:$0xf]
    %v6598 = vld [vmem:[%s6593 + $0x10] sm:$0xf]
    %v6599 = vld [vmem:[%s6593 + $0x14] sm:$0xf]
    %v6600 = vld [vmem:[%s6593 + $0x18] sm:$0xf]
    %v6601 = vld [vmem:[%s6593 + $0x1c] sm:$0xf]
    %v6604 = vrot.slane %v6404, 1
    %v6605 = vrot.slane %v6405, 1
    %v6606 = vsel %vm5453, %v6604, %v6605
    %v6615 = vunpack.c.l.b16 %v6594
    %v6616 = vunpack.c.l.b16 %v6595
    %v6617 = vunpack.c.l.b16 %v6596
    %v6618 = vunpack.c.l.b16 %v6597
    %v6619 = vunpack.c.l.b16 %v6598
    %v6620 = vunpack.c.l.b16 %v6599
    %v6621 = vunpack.c.l.b16 %v6600
    %v6622 = vunpack.c.l.b16 %v6601
    %v6623 = vpack.c.b16 %v6616, %v6615
    %v6624 = vpack.c.b16 %v6618, %v6617
    %v6625 = vpack.c.b16 %v6620, %v6619
    %v6626 = vpack.c.b16 %v6622, %v6621
    %v6632 = vsel %vm6462, %v6606, 0
    %v6635 = vsel %vm6462, %v6605, 0
    %6637 = vmatprep.subr.bf16.mxu0 0
    %6638 = vmatpush1.bf16.msra.mxu0 %v6623
    %6639 = vmatprep.subr.bf16.mxu0 0
    %6640 = vmatpush1.bf16.msra.mxu0 %v6624
    %6641 = vmatprep.subr.bf16.mxu0 0
    %6642 = vmatpush1.bf16.msra.mxu0 %v6625
    %6643 = vmatprep.subr.bf16.mxu0 0
    %6644 = vmatpush1.bf16.msra.mxu0 %v6626
    %6645 = vmatprep.subr.bf16.mxu0 0
    %6646 = vmatpush1.bf16.msra.mxu0 0
    %6647 = vmatprep.subr.bf16.mxu0 0
    %6648 = vmatpush1.bf16.msra.mxu0 0
    %6649 = vmatprep.subr.bf16.mxu0 0
    %6650 = vmatpush1.bf16.msra.mxu0 0
    %6651 = vmatprep.subr.bf16.mxu0 0
    %6652 = vmatpush1.bf16.msra.mxu0 0
    %6653 = vmatprep.subr.bf16.mxu0 0
    %6654 = vmatpush1.bf16.msra.mxu0 0
    %6655 = vmatprep.subr.bf16.mxu0 0
    %6656 = vmatpush1.bf16.msra.mxu0 0
    %6657 = vmatprep.subr.bf16.mxu0 0
    %6658 = vmatpush1.bf16.msra.mxu0 0
    %6659 = vmatprep.subr.bf16.mxu0 0
    %6660 = vmatpush1.bf16.msra.mxu0 0
    %6661 = vmatprep.subr.bf16.mxu0 0
    %6662 = vmatpush1.bf16.msra.mxu0 0
    %6663 = vmatprep.subr.bf16.mxu0 0
    %6664 = vmatpush1.bf16.msra.mxu0 0
    %6665 = vmatprep.subr.bf16.mxu0 0
    %6666 = vmatpush1.bf16.msra.mxu0 0
    %6667 = vmatprep.subr.bf16.mxu0 0
    %6668 = vmatpush1.bf16.msra.mxu0 0
    %6669 = vmatprep.mubr.bf16.mxu0 0
    %6670 = vmatmul.mubr.bf16.gmra.mrb[0].mxu0 %v6632
    %v6671 = vpop.f32.mrb[0].mxu0
    %v6672 = vadd.f32 0.0, %v6671
    %v6673 = vpop.f32.mrb[0].mxu0
    %v6674 = vpop.f32.mrb[0].mxu0
    %v6675 = vadd.f32 0.0, %v6674
    %v6676 = vpop.f32.mrb[0].mxu0
    %6677 = vmatprep.mubr.bf16.mxu0 0
    %6678 = vmatmul.mubr.bf16.gmra.mrb[0].mxu0 %v6635
    %v6679 = vpop.f32.mrb[0].mxu0
    %v6680 = vadd.f32 0.0, %v6679
    %v6681 = vpop.f32.mrb[0].mxu0
    %v6682 = vpop.f32.mrb[0].mxu0
    %v6683 = vpop.f32.mrb[0].mxu0
    %6684 = vdwg.mxu0
    %v6685 = vadd.f32 %v6580, %v6672
    %v6686 = vadd.f32 %v6583, %v6675
    %v6687 = vadd.f32 %v6588, %v6680
    %v6688 = vld [vmem:[#allocation11] sm:$0x1]
    %v6690 = vlaneseq
    %v6691 = vshrl.u32 %v6690, 7
    %v6692 = vsub.s32 0, %v6691
    %v6693 = vrot.slane %v6688, %v6692
    %v6695 = vadd.f32 %v6685, %v6693
    %v6696 = vadd.f32 %v6686, %v6693
    %v6697 = vadd.f32 %v6687, %v6693
    %v6698 = vmax.f32 %v6695, 0.0
    %v6699 = vmax.f32 %v6696, 0.0
    %v6700 = vmax.f32 %v6697, 0.0
    %v6701 = vpack.c.bf16 %v6699, %v6698
    %v6702 = vpack.c.bf16 %v6700, %v6700
    %v6703 = vld [vmem:[#allocation13] sm:$0xff]
    %v6704 = vld [vmem:[#allocation13 + $0x8] sm:$0xff]
    %v6705 = vld [vmem:[#allocation13 + $0x10] sm:$0xff]
    %v6706 = vld [vmem:[#allocation13 + $0x18] sm:$0xff]
    %v6707 = vld [vmem:[#allocation13 + $0x20] sm:$0xff]
    %v6708 = vld [vmem:[#allocation13 + $0x28] sm:$0xff]
    %v6709 = vld [vmem:[#allocation13 + $0x30] sm:$0xff]
    %v6710 = vld [vmem:[#allocation13 + $0x38] sm:$0xff]
    %v6711 = vld [vmem:[#allocation13 + $0x40] sm:$0xff]
    %v6712 = vld [vmem:[#allocation13 + $0x48] sm:$0xff]
    %v6713 = vld [vmem:[#allocation13 + $0x50] sm:$0xff]
    %v6714 = vld [vmem:[#allocation13 + $0x58] sm:$0xff]
    %v6715 = vld [vmem:[#allocation13 + $0x60] sm:$0xff]
    %v6716 = vld [vmem:[#allocation13 + $0x68] sm:$0xff]
    %v6717 = vld [vmem:[#allocation13 + $0x70] sm:$0xff]
    %v6718 = vld [vmem:[#allocation13 + $0x78] sm:$0xff]
    %s6719 = scalar_lea.vmem [#allocation13], 128
    %v6720 = vld [vmem:[%s6719] sm:$0xff]
    %v6721 = vld [vmem:[%s6719 + $0x8] sm:$0xff]
    %v6722 = vld [vmem:[%s6719 + $0x10] sm:$0xff]
    %v6723 = vld [vmem:[%s6719 + $0x18] sm:$0xff]
    %v6724 = vld [vmem:[%s6719 + $0x20] sm:$0xff]
    %v6725 = vld [vmem:[%s6719 + $0x28] sm:$0xff]
    %v6726 = vld [vmem:[%s6719 + $0x30] sm:$0xff]
    %v6727 = vld [vmem:[%s6719 + $0x38] sm:$0xff]
    %v6728 = vld [vmem:[%s6719 + $0x40] sm:$0xff]
    %v6729 = vld [vmem:[%s6719 + $0x48] sm:$0xff]
    %v6730 = vld [vmem:[%s6719 + $0x50] sm:$0xff]
    %v6731 = vld [vmem:[%s6719 + $0x58] sm:$0xff]
    %v6732 = vld [vmem:[%s6719 + $0x60] sm:$0xff]
    %v6733 = vld [vmem:[%s6719 + $0x68] sm:$0xff]
    %v6734 = vld [vmem:[%s6719 + $0x70] sm:$0xff]
    %v6735 = vld [vmem:[%s6719 + $0x78] sm:$0xff]
    %v6737 = vshrl.u32 %v6701, 16
    %v6739 = vshll.u32 %v6701, 16
    %v6741 = vrot.slane %v6739, 1
    %v6742 = vor.u32 %v6737, %v6741
    %v6744 = vshll.u32 %v6702, 16
    %v6746 = vrot.slane %v6744, 1
    %v6747 = vsel %vm5093, %v6742, %v6746
    %v6748 = vshrl.u32 %v6702, 16
    %v6750 = vor.u32 %v6748, %v6746
    %v6769 = vunpack.c.l.b16 %v6720
    %v6770 = vunpack.c.h.b16 %v6720
    %v6771 = vunpack.c.l.b16 %v6721
    %v6772 = vunpack.c.h.b16 %v6721
    %v6773 = vunpack.c.l.b16 %v6722
    %v6774 = vunpack.c.h.b16 %v6722
    %v6775 = vunpack.c.l.b16 %v6723
    %v6776 = vunpack.c.h.b16 %v6723
    %v6777 = vunpack.c.l.b16 %v6724
    %v6778 = vunpack.c.h.b16 %v6724
    %v6779 = vunpack.c.l.b16 %v6725
    %v6780 = vunpack.c.h.b16 %v6725
    %v6781 = vunpack.c.l.b16 %v6726
    %v6782 = vunpack.c.h.b16 %v6726
    %v6783 = vunpack.c.l.b16 %v6727
    %v6784 = vunpack.c.h.b16 %v6727
    %v6785 = vunpack.c.l.b16 %v6728
    %v6786 = vunpack.c.h.b16 %v6728
    %v6787 = vunpack.c.l.b16 %v6729
    %v6788 = vunpack.c.h.b16 %v6729
    %v6789 = vunpack.c.l.b16 %v6730
    %v6790 = vunpack.c.h.b16 %v6730
    %v6791 = vunpack.c.l.b16 %v6731
    %v6792 = vunpack.c.h.b16 %v6731
    %v6793 = vunpack.c.l.b16 %v6732
    %v6794 = vunpack.c.h.b16 %v6732
    %v6795 = vunpack.c.l.b16 %v6733
    %v6796 = vunpack.c.h.b16 %v6733
    %v6797 = vunpack.c.l.b16 %v6734
    %v6798 = vunpack.c.h.b16 %v6734
    %v6799 = vunpack.c.l.b16 %v6735
    %v6800 = vunpack.c.h.b16 %v6735
    %v6801 = vpack.c.b16 %v6771, %v6769
    %v6802 = vpack.c.b16 %v6772, %v6770
    %v6803 = vpack.c.b16 %v6775, %v6773
    %v6804 = vpack.c.b16 %v6776, %v6774
    %v6805 = vpack.c.b16 %v6779, %v6777
    %v6806 = vpack.c.b16 %v6780, %v6778
    %v6807 = vpack.c.b16 %v6783, %v6781
    %v6808 = vpack.c.b16 %v6784, %v6782
    %v6809 = vpack.c.b16 %v6787, %v6785
    %v6810 = vpack.c.b16 %v6788, %v6786
    %v6811 = vpack.c.b16 %v6791, %v6789
    %v6812 = vpack.c.b16 %v6792, %v6790
    %v6813 = vpack.c.b16 %v6795, %v6793
    %v6814 = vpack.c.b16 %v6796, %v6794
    %v6815 = vpack.c.b16 %v6799, %v6797
    %v6816 = vpack.c.b16 %v6800, %v6798
    %6833 = vmatprep.subr.bf16.mxu0 %v6802
    %6834 = vmatpush1.bf16.msra.mxu0 %v6801
    %6835 = vmatprep.subr.bf16.mxu0 %v6804
    %6836 = vmatpush1.bf16.msra.mxu0 %v6803
    %6837 = vmatprep.subr.bf16.mxu0 %v6806
    %6838 = vmatpush1.bf16.msra.mxu0 %v6805
    %6839 = vmatprep.subr.bf16.mxu0 %v6808
    %6840 = vmatpush1.bf16.msra.mxu0 %v6807
    %6841 = vmatprep.subr.bf16.mxu0 %v6810
    %6842 = vmatpush1.bf16.msra.mxu0 %v6809
    %6843 = vmatprep.subr.bf16.mxu0 %v6812
    %6844 = vmatpush1.bf16.msra.mxu0 %v6811
    %6845 = vmatprep.subr.bf16.mxu0 %v6814
    %6846 = vmatpush1.bf16.msra.mxu0 %v6813
    %6847 = vmatprep.subr.bf16.mxu0 %v6816
    %6848 = vmatpush1.bf16.msra.mxu0 %v6815
    %6849 = vmatprep.subr.bf16.mxu0 0
    %6850 = vmatpush1.bf16.msra.mxu0 0
    %6851 = vmatprep.subr.bf16.mxu0 0
    %6852 = vmatpush1.bf16.msra.mxu0 0
    %6853 = vmatprep.subr.bf16.mxu0 0
    %6854 = vmatpush1.bf16.msra.mxu0 0
    %6855 = vmatprep.subr.bf16.mxu0 0
    %6856 = vmatpush1.bf16.msra.mxu0 0
    %6857 = vmatprep.subr.bf16.mxu0 0
    %6858 = vmatpush1.bf16.msra.mxu0 0
    %6859 = vmatprep.subr.bf16.mxu0 0
    %6860 = vmatpush1.bf16.msra.mxu0 0
    %6861 = vmatprep.subr.bf16.mxu0 0
    %6862 = vmatpush1.bf16.msra.mxu0 0
    %6863 = vmatprep.subr.bf16.mxu0 0
    %6864 = vmatpush1.bf16.msra.mxu0 0
    %6865 = vmatprep.mubr.bf16.mxu0 0
    %6866 = vmatmul.mubr.bf16.gmra.mrb[0].mxu0 %v6747
    %v6867 = vpop.f32.mrb[0].mxu0
    %v6868 = vadd.f32 0.0, %v6867
    %v6869 = vpop.f32.mrb[0].mxu0
    %v6870 = vadd.f32 0.0, %v6869
    %v6871 = vpop.f32.mrb[0].mxu0
    %v6872 = vadd.f32 0.0, %v6871
    %v6873 = vpop.f32.mrb[0].mxu0
    %v6874 = vadd.f32 0.0, %v6873
    %6875 = vmatprep.mubr.bf16.mxu0 0
    %6876 = vmatmul.mubr.bf16.gmra.mrb[0].mxu0 %v6750
    %v6877 = vpop.f32.mrb[0].mxu0
    %v6878 = vadd.f32 0.0, %v6877
    %v6879 = vpop.f32.mrb[0].mxu0
    %v6880 = vadd.f32 0.0, %v6879
    %v6881 = vpop.f32.mrb[0].mxu0
    %v6882 = vpop.f32.mrb[0].mxu0
    %6883 = vdwg.mxu0
    %v6900 = vunpack.c.l.b16 %v6703
    %v6901 = vunpack.c.h.b16 %v6703
    %v6902 = vunpack.c.l.b16 %v6704
    %v6903 = vunpack.c.h.b16 %v6704
    %v6904 = vunpack.c.l.b16 %v6705
    %v6905 = vunpack.c.h.b16 %v6705
    %v6906 = vunpack.c.l.b16 %v6706
    %v6907 = vunpack.c.h.b16 %v6706
    %v6908 = vunpack.c.l.b16 %v6707
    %v6909 = vunpack.c.h.b16 %v6707
    %v6910 = vunpack.c.l.b16 %v6708
    %v6911 = vunpack.c.h.b16 %v6708
    %v6912 = vunpack.c.l.b16 %v6709
    %v6913 = vunpack.c.h.b16 %v6709
    %v6914 = vunpack.c.l.b16 %v6710
    %v6915 = vunpack.c.h.b16 %v6710
    %v6916 = vunpack.c.l.b16 %v6711
    %v6917 = vunpack.c.h.b16 %v6711
    %v6918 = vunpack.c.l.b16 %v6712
    %v6919 = vunpack.c.h.b16 %v6712
    %v6920 = vunpack.c.l.b16 %v6713
    %v6921 = vunpack.c.h.b16 %v6713
    %v6922 = vunpack.c.l.b16 %v6714
    %v6923 = vunpack.c.h.b16 %v6714
    %v6924 = vunpack.c.l.b16 %v6715
    %v6925 = vunpack.c.h.b16 %v6715
    %v6926 = vunpack.c.l.b16 %v6716
    %v6927 = vunpack.c.h.b16 %v6716
    %v6928 = vunpack.c.l.b16 %v6717
    %v6929 = vunpack.c.h.b16 %v6717
    %v6930 = vunpack.c.l.b16 %v6718
    %v6931 = vunpack.c.h.b16 %v6718
    %v6932 = vpack.c.b16 %v6902, %v6900
    %v6933 = vpack.c.b16 %v6903, %v6901
    %v6934 = vpack.c.b16 %v6906, %v6904
    %v6935 = vpack.c.b16 %v6907, %v6905
    %v6936 = vpack.c.b16 %v6910, %v6908
    %v6937 = vpack.c.b16 %v6911, %v6909
    %v6938 = vpack.c.b16 %v6914, %v6912
    %v6939 = vpack.c.b16 %v6915, %v6913
    %v6940 = vpack.c.b16 %v6918, %v6916
    %v6941 = vpack.c.b16 %v6919, %v6917
    %v6942 = vpack.c.b16 %v6922, %v6920
    %v6943 = vpack.c.b16 %v6923, %v6921
    %v6944 = vpack.c.b16 %v6926, %v6924
    %v6945 = vpack.c.b16 %v6927, %v6925
    %v6946 = vpack.c.b16 %v6930, %v6928
    %v6947 = vpack.c.b16 %v6931, %v6929
    %6964 = vmatprep.subr.bf16.mxu0 %v6933
    %6965 = vmatpush1.bf16.msra.mxu0 %v6932
    %6966 = vmatprep.subr.bf16.mxu0 %v6935
    %6967 = vmatpush1.bf16.msra.mxu0 %v6934
    %6968 = vmatprep.subr.bf16.mxu0 %v6937
    %6969 = vmatpush1.bf16.msra.mxu0 %v6936
    %6970 = vmatprep.subr.bf16.mxu0 %v6939
    %6971 = vmatpush1.bf16.msra.mxu0 %v6938
    %6972 = vmatprep.subr.bf16.mxu0 %v6941
    %6973 = vmatpush1.bf16.msra.mxu0 %v6940
    %6974 = vmatprep.subr.bf16.mxu0 %v6943
    %6975 = vmatpush1.bf16.msra.mxu0 %v6942
    %6976 = vmatprep.subr.bf16.mxu0 %v6945
    %6977 = vmatpush1.bf16.msra.mxu0 %v6944
    %6978 = vmatprep.subr.bf16.mxu0 %v6947
    %6979 = vmatpush1.bf16.msra.mxu0 %v6946
    %6980 = vmatprep.subr.bf16.mxu0 0
    %6981 = vmatpush1.bf16.msra.mxu0 0
    %6982 = vmatprep.subr.bf16.mxu0 0
    %6983 = vmatpush1.bf16.msra.mxu0 0
    %6984 = vmatprep.subr.bf16.mxu0 0
    %6985 = vmatpush1.bf16.msra.mxu0 0
    %6986 = vmatprep.subr.bf16.mxu0 0
    %6987 = vmatpush1.bf16.msra.mxu0 0
    %6988 = vmatprep.subr.bf16.mxu0 0
    %6989 = vmatpush1.bf16.msra.mxu0 0
    %6990 = vmatprep.subr.bf16.mxu0 0
    %6991 = vmatpush1.bf16.msra.mxu0 0
    %6992 = vmatprep.subr.bf16.mxu0 0
    %6993 = vmatpush1.bf16.msra.mxu0 0
    %6994 = vmatprep.subr.bf16.mxu0 0
    %6995 = vmatpush1.bf16.msra.mxu0 0
    %6996 = vmatprep.mubr.bf16.mxu0 0
    %6997 = vmatmul.mubr.bf16.gmra.mrb[0].mxu0 %v6701
    %v6998 = vpop.f32.mrb[0].mxu0
    %v6999 = vadd.f32 %v6868, %v6998
    %v7000 = vpop.f32.mrb[0].mxu0
    %v7001 = vadd.f32 %v6870, %v7000
    %v7002 = vpop.f32.mrb[0].mxu0
    %v7003 = vadd.f32 %v6872, %v7002
    %v7004 = vpop.f32.mrb[0].mxu0
    %v7005 = vadd.f32 %v6874, %v7004
    %7006 = vmatprep.mubr.bf16.mxu0 0
    %7007 = vmatmul.mubr.bf16.gmra.mrb[0].mxu0 %v6702
    %v7008 = vpop.f32.mrb[0].mxu0
    %v7009 = vadd.f32 %v6878, %v7008
    %v7010 = vpop.f32.mrb[0].mxu0
    %v7011 = vadd.f32 %v6880, %v7010
    %v7012 = vpop.f32.mrb[0].mxu0
    %v7013 = vpop.f32.mrb[0].mxu0
    %7014 = vdwg.mxu0
    %s7015 = scalar_lea.vmem [#allocation13], 256
    %v7016 = vld [vmem:[%s7015] sm:$0xff]
    %v7017 = vld [vmem:[%s7015 + $0x8] sm:$0xff]
    %v7018 = vld [vmem:[%s7015 + $0x10] sm:$0xff]
    %v7019 = vld [vmem:[%s7015 + $0x18] sm:$0xff]
    %v7020 = vld [vmem:[%s7015 + $0x20] sm:$0xff]
    %v7021 = vld [vmem:[%s7015 + $0x28] sm:$0xff]
    %v7022 = vld [vmem:[%s7015 + $0x30] sm:$0xff]
    %v7023 = vld [vmem:[%s7015 + $0x38] sm:$0xff]
    %v7024 = vld [vmem:[%s7015 + $0x40] sm:$0xff]
    %v7025 = vld [vmem:[%s7015 + $0x48] sm:$0xff]
    %v7026 = vld [vmem:[%s7015 + $0x50] sm:$0xff]
    %v7027 = vld [vmem:[%s7015 + $0x58] sm:$0xff]
    %v7028 = vld [vmem:[%s7015 + $0x60] sm:$0xff]
    %v7029 = vld [vmem:[%s7015 + $0x68] sm:$0xff]
    %v7030 = vld [vmem:[%s7015 + $0x70] sm:$0xff]
    %v7031 = vld [vmem:[%s7015 + $0x78] sm:$0xff]
    %v7034 = vrot.slane %v6701, 1
    %v7035 = vrot.slane %v6702, 1
    %v7036 = vsel %vm5453, %v7034, %v7035
    %v7055 = vunpack.c.l.b16 %v7016
    %v7056 = vunpack.c.h.b16 %v7016
    %v7057 = vunpack.c.l.b16 %v7017
    %v7058 = vunpack.c.h.b16 %v7017
    %v7059 = vunpack.c.l.b16 %v7018
    %v7060 = vunpack.c.h.b16 %v7018
    %v7061 = vunpack.c.l.b16 %v7019
    %v7062 = vunpack.c.h.b16 %v7019
    %v7063 = vunpack.c.l.b16 %v7020
    %v7064 = vunpack.c.h.b16 %v7020
    %v7065 = vunpack.c.l.b16 %v7021
    %v7066 = vunpack.c.h.b16 %v7021
    %v7067 = vunpack.c.l.b16 %v7022
    %v7068 = vunpack.c.h.b16 %v7022
    %v7069 = vunpack.c.l.b16 %v7023
    %v7070 = vunpack.c.h.b16 %v7023
    %v7071 = vunpack.c.l.b16 %v7024
    %v7072 = vunpack.c.h.b16 %v7024
    %v7073 = vunpack.c.l.b16 %v7025
    %v7074 = vunpack.c.h.b16 %v7025
    %v7075 = vunpack.c.l.b16 %v7026
    %v7076 = vunpack.c.h.b16 %v7026
    %v7077 = vunpack.c.l.b16 %v7027
    %v7078 = vunpack.c.h.b16 %v7027
    %v7079 = vunpack.c.l.b16 %v7028
    %v7080 = vunpack.c.h.b16 %v7028
    %v7081 = vunpack.c.l.b16 %v7029
    %v7082 = vunpack.c.h.b16 %v7029
    %v7083 = vunpack.c.l.b16 %v7030
    %v7084 = vunpack.c.h.b16 %v7030
    %v7085 = vunpack.c.l.b16 %v7031
    %v7086 = vunpack.c.h.b16 %v7031
    %v7087 = vpack.c.b16 %v7057, %v7055
    %v7088 = vpack.c.b16 %v7058, %v7056
    %v7089 = vpack.c.b16 %v7061, %v7059
    %v7090 = vpack.c.b16 %v7062, %v7060
    %v7091 = vpack.c.b16 %v7065, %v7063
    %v7092 = vpack.c.b16 %v7066, %v7064
    %v7093 = vpack.c.b16 %v7069, %v7067
    %v7094 = vpack.c.b16 %v7070, %v7068
    %v7095 = vpack.c.b16 %v7073, %v7071
    %v7096 = vpack.c.b16 %v7074, %v7072
    %v7097 = vpack.c.b16 %v7077, %v7075
    %v7098 = vpack.c.b16 %v7078, %v7076
    %v7099 = vpack.c.b16 %v7081, %v7079
    %v7100 = vpack.c.b16 %v7082, %v7080
    %v7101 = vpack.c.b16 %v7085, %v7083
    %v7102 = vpack.c.b16 %v7086, %v7084
    %7119 = vmatprep.subr.bf16.mxu0 %v7088
    %7120 = vmatpush1.bf16.msra.mxu0 %v7087
    %7121 = vmatprep.subr.bf16.mxu0 %v7090
    %7122 = vmatpush1.bf16.msra.mxu0 %v7089
    %7123 = vmatprep.subr.bf16.mxu0 %v7092
    %7124 = vmatpush1.bf16.msra.mxu0 %v7091
    %7125 = vmatprep.subr.bf16.mxu0 %v7094
    %7126 = vmatpush1.bf16.msra.mxu0 %v7093
    %7127 = vmatprep.subr.bf16.mxu0 %v7096
    %7128 = vmatpush1.bf16.msra.mxu0 %v7095
    %7129 = vmatprep.subr.bf16.mxu0 %v7098
    %7130 = vmatpush1.bf16.msra.mxu0 %v7097
    %7131 = vmatprep.subr.bf16.mxu0 %v7100
    %7132 = vmatpush1.bf16.msra.mxu0 %v7099
    %7133 = vmatprep.subr.bf16.mxu0 %v7102
    %7134 = vmatpush1.bf16.msra.mxu0 %v7101
    %7135 = vmatprep.subr.bf16.mxu0 0
    %7136 = vmatpush1.bf16.msra.mxu0 0
    %7137 = vmatprep.subr.bf16.mxu0 0
    %7138 = vmatpush1.bf16.msra.mxu0 0
    %7139 = vmatprep.subr.bf16.mxu0 0
    %7140 = vmatpush1.bf16.msra.mxu0 0
    %7141 = vmatprep.subr.bf16.mxu0 0
    %7142 = vmatpush1.bf16.msra.mxu0 0
    %7143 = vmatprep.subr.bf16.mxu0 0
    %7144 = vmatpush1.bf16.msra.mxu0 0
    %7145 = vmatprep.subr.bf16.mxu0 0
    %7146 = vmatpush1.bf16.msra.mxu0 0
    %7147 = vmatprep.subr.bf16.mxu0 0
    %7148 = vmatpush1.bf16.msra.mxu0 0
    %7149 = vmatprep.subr.bf16.mxu0 0
    %7150 = vmatpush1.bf16.msra.mxu0 0
    %7151 = vmatprep.mubr.bf16.mxu0 0
    %7152 = vmatmul.mubr.bf16.gmra.mrb[0].mxu0 %v7036
    %v7153 = vpop.f32.mrb[0].mxu0
    %v7154 = vadd.f32 0.0, %v7153
    %v7155 = vpop.f32.mrb[0].mxu0
    %v7156 = vadd.f32 0.0, %v7155
    %v7157 = vpop.f32.mrb[0].mxu0
    %v7158 = vadd.f32 0.0, %v7157
    %v7159 = vpop.f32.mrb[0].mxu0
    %v7160 = vadd.f32 0.0, %v7159
    %7161 = vmatprep.mubr.bf16.mxu0 0
    %7162 = vmatmul.mubr.bf16.gmra.mrb[0].mxu0 %v7035
    %v7163 = vpop.f32.mrb[0].mxu0
    %v7164 = vadd.f32 0.0, %v7163
    %v7165 = vpop.f32.mrb[0].mxu0
    %v7166 = vadd.f32 0.0, %v7165
    %v7167 = vpop.f32.mrb[0].mxu0
    %v7168 = vpop.f32.mrb[0].mxu0
    %7169 = vdwg.mxu0
    %v7170 = vadd.f32 %v6999, %v7154
    %v7171 = vadd.f32 %v7001, %v7156
    %v7172 = vadd.f32 %v7003, %v7158
    %v7173 = vadd.f32 %v7005, %v7160
    %v7174 = vadd.f32 %v7009, %v7164
    %v7175 = vadd.f32 %v7011, %v7166
    %v7176 = vld [vmem:[#allocation14] sm:$0x3]
    %v7178 = vlaneseq
    %v7179 = vshrl.u32 %v7178, 7
    %v7180 = vsub.s32 0, %v7179
    %v7181 = vrot.slane %v7176, %v7180
    %v7182 = vlaneseq
    %v7183 = vshrl.u32 %v7182, 7
    %v7184 = vsub.s32 1, %v7183
    %v7185 = vrot.slane %v7176, %v7184
    %v7188 = vadd.f32 %v7170, %v7181
    %v7189 = vadd.f32 %v7171, %v7185
    %v7190 = vadd.f32 %v7172, %v7181
    %v7191 = vadd.f32 %v7173, %v7185
    %v7192 = vadd.f32 %v7174, %v7181
    %v7193 = vadd.f32 %v7175, %v7185
    %v7194 = vmax.f32 %v7188, 0.0
    %v7195 = vmax.f32 %v7189, 0.0
    %v7196 = vmax.f32 %v7190, 0.0
    %v7197 = vmax.f32 %v7191, 0.0
    %v7198 = vmax.f32 %v7192, 0.0
    %v7199 = vmax.f32 %v7193, 0.0
    %v7200 = vpack.c.bf16 %v7196, %v7194
    %v7201 = vpack.c.bf16 %v7197, %v7195
    %v7202 = vpack.c.bf16 %v7198, %v7198
    %v7203 = vpack.c.bf16 %v7199, %v7199
    %v7204 = vunpack.c.l.bf16 %v7200
    %v7205 = vunpack.c.l.bf16 %v7201
    %v7206 = vunpack.c.h.bf16 %v7200
    %v7207 = vunpack.c.h.bf16 %v7201
    %v7208 = vunpack.c.l.bf16 %v7202
    %v7209 = vunpack.c.l.bf16 %v7203
    %v7210 = vld [vmem:[#allocation16] sm:$0xff]
    %v7211 = vld [vmem:[#allocation16 + $0x8] sm:$0xff]
    %v7212 = vld [vmem:[#allocation16 + $0x10] sm:$0xff]
    %v7213 = vld [vmem:[#allocation16 + $0x18] sm:$0xff]
    %v7214 = vld [vmem:[#allocation16 + $0x20] sm:$0xf]
    %v7215 = vld [vmem:[#allocation16 + $0x28] sm:$0xf]
    %v7216 = vmul.f32 %v7204, %v7210
    %v7217 = vmul.f32 %v7205, %v7211
    %v7218 = vmul.f32 %v7206, %v7212
    %v7219 = vmul.f32 %v7207, %v7213
    %v7220 = vmul.f32 %v7208, %v7214
    %v7221 = vmul.f32 %v7209, %v7215
    %v7222 = vld [vmem:[#allocation17] sm:$0x3]
    %vm7223 = vcmask 162816
    %v7225 = vsel %vm7223, %v7222, 0
    %vm7227 = vcmask 1043456
    %v7229 = vsel %vm7227, %v7220, 0
    %v7232 = vsel %vm7227, %v7221, 0
    %7234 = vmatprep.subr.mxu0 %v7217
    %7235 = vmatpush1.msra.mxu0 %v7216
    %7236 = vmatprep.subr.mxu0 %v7219
    %7237 = vmatpush1.msra.mxu0 %v7218
    %7238 = vmatprep.subr.mxu0 %v7232
    %7239 = vmatpush1.msra.mxu0 %v7229
    %7240 = vmatprep.subr.mxu0 0.0
    %7241 = vmatpush1.msra.mxu0 0.0
    %7242 = vmatprep.subr.mxu0 0.0
    %7243 = vmatpush1.msra.mxu0 0.0
    %7244 = vmatprep.subr.mxu0 0.0
    %7245 = vmatpush1.msra.mxu0 0.0
    %7246 = vmatprep.subr.mxu0 0.0
    %7247 = vmatpush1.msra.mxu0 0.0
    %7248 = vmatprep.subr.mxu0 0.0
    %7249 = vmatpush1.msra.mxu0 0.0
    %7250 = vmatprep.subr.mxu0 0.0
    %7251 = vmatpush1.msra.mxu0 0.0
    %7252 = vmatprep.subr.mxu0 0.0
    %7253 = vmatpush1.msra.mxu0 0.0
    %7254 = vmatprep.subr.mxu0 0.0
    %7255 = vmatpush1.msra.mxu0 0.0
    %7256 = vmatprep.subr.mxu0 0.0
    %7257 = vmatpush1.msra.mxu0 0.0
    %7258 = vmatprep.subr.mxu0 0.0
    %7259 = vmatpush1.msra.mxu0 0.0
    %7260 = vmatprep.subr.mxu0 0.0
    %7261 = vmatpush1.msra.mxu0 0.0
    %7262 = vmatprep.subr.mxu0 0.0
    %7263 = vmatpush1.msra.mxu0 0.0
    %7264 = vmatprep.subr.mxu0 0.0
    %7265 = vmatpush1.msra.mxu0 0.0
    %7266 = vmatprep.subr.mxu0 0.0
    %7267 = vmatpush1.msra.mxu0 0.0
    %7268 = vmatprep.subr.mxu0 0.0
    %7269 = vmatpush1.msra.mxu0 0.0
    %7270 = vmatprep.subr.mxu0 0.0
    %7271 = vmatpush1.msra.mxu0 0.0
    %7272 = vmatprep.subr.mxu0 0.0
    %7273 = vmatpush1.msra.mxu0 0.0
    %7274 = vmatprep.subr.mxu0 0.0
    %7275 = vmatpush1.msra.mxu0 0.0
    %7276 = vmatprep.subr.mxu0 0.0
    %7277 = vmatpush1.msra.mxu0 0.0
    %7278 = vmatprep.subr.mxu0 0.0
    %7279 = vmatpush1.msra.mxu0 0.0
    %7280 = vmatprep.subr.mxu0 0.0
    %7281 = vmatpush1.msra.mxu0 0.0
    %7282 = vmatprep.subr.mxu0 0.0
    %7283 = vmatpush1.msra.mxu0 0.0
    %7284 = vmatprep.subr.mxu0 0.0
    %7285 = vmatpush1.msra.mxu0 0.0
    %7286 = vmatprep.subr.mxu0 0.0
    %7287 = vmatpush1.msra.mxu0 0.0
    %7288 = vmatprep.subr.mxu0 0.0
    %7289 = vmatpush1.msra.mxu0 0.0
    %7290 = vmatprep.subr.mxu0 0.0
    %7291 = vmatpush1.msra.mxu0 0.0
    %7292 = vmatprep.subr.mxu0 0.0
    %7293 = vmatpush1.msra.mxu0 0.0
    %7294 = vmatprep.subr.mxu0 0.0
    %7295 = vmatpush1.msra.mxu0 0.0
    %7296 = vmatprep.subr.mxu0 0.0
    %7297 = vmatpush1.msra.mxu0 0.0
    %7298 = vmatprep.mubr.f32.mxu0 0.0
    %7299 = vmatmul.mubr.f32.gmra.mrb[0].mxu0 %v7225
    %v7300 = vpop.f32.mrb[0].mxu0
    %v7301 = vadd.f32 0.0, %v7300
    %v7302 = vpop.f32.mrb[0].mxu0
    %v7303 = vadd.f32 0.0, %v7302
    %7304 = vdwg.mxu0
    %vm7305 = vcmask 1041408
    %v7306 = vsel %vm7305, %v7301, 0.0
    %v7307 = vsel %vm7305, %v7303, 0.0
    %v7308 = vadd.f32 %v7306, %v7307
    %7309 = vadd.xlane.f32.xlu0 %v7308
    %v7310 = vpop.xlane.xlu0 %7309
    %v7311 = vld [vmem:[#allocation2] sm:$0x1]
    %v7313 = vlaneseq
    %v7314 = vshrl.u32 %v7313, 7
    %v7315 = vsub.s32 0, %v7314
    %v7316 = vrot.slane %v7311, %v7315
    %v7318 = vadd.f32 %v7310, %v7316
    %vm7319 = vcmask 1024
    %7320 = vst.msk [vmem:[%s12] sm:$0x3] %vm7319, %v7318
    // Predicated region
    $region90: #{tcn_forward.1} parent=1 // pred_check
      _
    $region91: #{tcn_forward.1} parent=1 // pred_check_branch
      %7322 = sbr.rel (0) target = $region93
    $region92: #{tcn_forward.1} parent=1 // pred_region
      _
    $region93: #{tcn_forward.1} parent=1 // pred_fallthru
      _
    // Predicated region
    $region94: #{tcn_forward.1} parent=1 // pred_check
      _
    $region95: #{tcn_forward.1} parent=1 // pred_check_branch
      %7324 = sbr.rel (0) target = $region97
    $region96: #{tcn_forward.1} parent=1 // pred_region
      _
    $region97: #{tcn_forward.1} parent=1 // pred_fallthru
      _
    %7325 = vsyncpa [#allocation4], 1
    %7326 = vsyncpa [#allocation6], 1
    %7327 = vsyncpa [#allocation9], 1
    %7328 = vsyncpa [#allocation12], 1
    %7329 = vsyncpa [#allocation15], 1
    %7330 = vsyncpa [#allocation18], 1

</llo_original>
